<compile_context>
chip_gen: v7x
topology: tpu7x:2x2x1
jax: 0.10.0
libtpu: 0.0.40
codegen_flags: <defaults>
</compile_context>

<pallas_src>
import functools

import jax
import jax.numpy as jnp
from jax import lax
from jax.experimental import pallas as pl
from jax.experimental.pallas import tpu as pltpu

BN_EPS = 1e-5
LANE = 128                       # lane-dense channel padding


def _round_up(x, m):
    return (x + m - 1) // m * m


@functools.lru_cache(maxsize=None)
def _vmem_limit_bytes():
    # Generation-dependent scoped-VMEM budget: ~75% of physical VMEM, capped at 100 MiB
    # (~96 MiB on v5e/v6e's 128 MiB, ~48 MiB on v7x's 64 MiB per TensorCore).
    cap = 64 * 1024 * 1024
    try:
        cap = int(pltpu.get_tpu_info().vmem_capacity_bytes)
    except Exception:            # query unavailable -> conservative, known-good default
        pass
    return int(min(cap * 3 // 4, 100 * 1024 * 1024))


def _compiler_params():
    return pltpu.CompilerParams(dimension_semantics=("parallel",),
                                vmem_limit_bytes=_vmem_limit_bytes())


def _const_spec(shape):
    nd = len(shape)
    return pl.BlockSpec(shape, lambda i, _n=nd: (0,) * _n)


def _pick_block_rows(m, requested):
    """Pick a row tile so that row padding / tail masking is usually a no-op."""
    requested = max(16, requested)
    if m <= requested:
        return max(8, _round_up(m, 8))             # single tile
    for cand in (requested, requested // 2):
        if m % cand == 0:
            return cand
    return requested                               # ragged tail handled in-kernel


# --------------------------------------------------------------------------------------
# Pallas kernels
# --------------------------------------------------------------------------------------
def _mm_silu_stats_kernel(x_ref, w_ref, b_ref, s_ref, stats_ref, *,
                          rows_valid, block_rows):
    """1x1-conv matmul (any preceding BN already folded into W/b) -> bias -> SiLU.

    Writes the SiLU output tile (bf16) plus per-tile per-channel (sum, sum_sq) partial
    statistics so this layer's BatchNorm can be resolved after the grid.
    """
    y = jnp.dot(x_ref[...], w_ref[...], preferred_element_type=jnp.float32) + b_ref[...]
    s = y * jax.nn.sigmoid(y)                                   # SiLU in f32
    s_ref[...] = s.astype(s_ref.dtype)

    def _stats(sm):
        return jnp.concatenate(
            [jnp.sum(sm, axis=0, keepdims=True),
             jnp.sum(sm * s, axis=0, keepdims=True)], axis=0).reshape(1, 2, -1)

    if rows_valid % block_rows == 0:                            # static: all tiles full
        stats_ref[...] = _stats(s)
    else:                                                       # mask only the tail tile
        i = pl.program_id(0)
        last = pl.num_programs(0) - 1
        tail_valid = rows_valid % block_rows                    # static

        @pl.when(i != last)
        def _():
            stats_ref[...] = _stats(s)

        @pl.when(i == last)
        def _():
            row = lax.broadcasted_iota(jnp.int32, (block_rows, 1), 0)
            stats_ref[...] = _stats(jnp.where(row < tail_valid, s, 0.0))


def _conv3x3_silu_stats_kernel(s_prev_ref, scale_ref, shift_ref, w_ref, b_ref,
                               s_ref, stats_ref, pad_ref, *, h, w):
    """Fused: BN of the previous layer -> 3x3 stride-1 conv -> bias -> SiLU -> stats.

    Grid iterates over the batch, one image per step.  The halo ring is built
    in-register and written with one aligned full-ref store (no per-step scratch clear,
    no misaligned partial store, no cross-step scratch state).  The 9 taps are merged
    into 3 MXU matmuls with K = 3*C.
    """
    c = s_prev_ref.shape[-1]
    dt = pad_ref.dtype
    # BN1 cannot be folded into the conv2 weights: conv2 zero-pads AFTER BN1, so the
    # padded border pixels must stay exactly 0.
    xn = (s_prev_ref[0].astype(jnp.float32) * scale_ref[...] + shift_ref[...]).astype(dt)
    zrow = jnp.zeros((1, w + 2, c), dt)
    zcol = jnp.zeros((h, 1, c), dt)
    pad_ref[...] = jnp.concatenate(
        [zrow, jnp.concatenate([zcol, xn, zcol], axis=1), zrow], axis=0)

    acc = jnp.zeros((h * w, c), jnp.float32)
    for di in range(3):                                         # static, unrolled
        a = pad_ref[pl.ds(di, h), :, :]                         # (h, w+2, c) aligned load
        op = jnp.concatenate(                                   # dj -> lane offsets 0,c,2c
            [a[:, 0:w, :], a[:, 1:w + 1, :], a[:, 2:w + 2, :]], axis=-1)
        acc = acc + jnp.dot(op.reshape(h * w, 3 * c), w_ref[di],
                            preferred_element_type=jnp.float32)
    y = acc + b_ref[...]
    s = y * jax.nn.sigmoid(y)
    s_ref[...] = s.reshape(1, h, w, c).astype(s_ref.dtype)
    stats_ref[...] = jnp.concatenate(
        [jnp.sum(s, axis=0, keepdims=True),
         jnp.sum(s * s, axis=0, keepdims=True)], axis=0).reshape(1, 2, c)


def _bn_add_relu_kernel(s_ref, scale_ref, shift_ref, r_ref, r_scale_ref, r_shift_ref,
                        o_ref, *, res_affine):
    """Fused: BN of the last bottleneck layer + (BN'ed) identity branch + add + ReLU."""
    main = s_ref[...].astype(jnp.float32) * scale_ref[...] + shift_ref[...]
    res = r_ref[...].astype(jnp.float32)
    if res_affine:                                              # static flag
        res = res * r_scale_ref[...] + r_shift_ref[...]
    o_ref[...] = jnp.maximum(main + res, 0.0).astype(o_ref.dtype)


# --------------------------------------------------------------------------------------
# pallas_call wrappers
# --------------------------------------------------------------------------------------
def _mm_silu_stats(x2d, w_p, b_p, rows_valid, block_rows):
    mp, k = x2d.shape
    cp = w_p.shape[1]
    grid_m = mp // block_rows
    kern = functools.partial(_mm_silu_stats_kernel,
                             rows_valid=rows_valid, block_rows=block_rows)
    return pl.pallas_call(
        kern,
        grid=(grid_m,),
        in_specs=[
            pl.BlockSpec((block_rows, k), lambda i: (i, 0)),
            _const_spec((k, cp)),
            _const_spec((1, cp)),
        ],
        out_specs=(
            pl.BlockSpec((block_rows, cp), lambda i: (i, 0)),
            pl.BlockSpec((1, 2, cp), lambda i: (i, 0, 0)),
        ),
        out_shape=(
            jax.ShapeDtypeStruct((mp, cp), jnp.bfloat16),
            jax.ShapeDtypeStruct((grid_m, 2, cp), jnp.float32),
        ),
        compiler_params=_compiler_params(),
    )(x2d, w_p, b_p)


def _conv3x3_stride1(s_prev_img, in_scale, in_shift, w_taps, b_p):
    n, h, w, c = s_prev_img.shape
    kern = functools.partial(_conv3x3_silu_stats_kernel, h=h, w=w)
    # TODO(synk): for very large feature maps on v7x, add a row-band grid axis with a
    # 1-row halo so the per-step working set stays within the smaller 64 MiB VMEM.
    return pl.pallas_call(
        kern,
        grid=(n,),
        in_specs=[
            pl.BlockSpec((1, h, w, c), lambda i: (i, 0, 0, 0)),
            _const_spec((1, c)),
            _const_spec((1, c)),
            _const_spec((3, 3 * c, c)),
            _const_spec((1, c)),
        ],
        out_specs=(
            pl.BlockSpec((1, h, w, c), lambda i: (i, 0, 0, 0)),
            pl.BlockSpec((1, 2, c), lambda i: (i, 0, 0)),
        ),
        out_shape=(
            jax.ShapeDtypeStruct((n, h, w, c), jnp.bfloat16),
            jax.ShapeDtypeStruct((n, 2, c), jnp.float32),
        ),
        scratch_shapes=[pltpu.VMEM((h + 2, w + 2, c), jnp.bfloat16)],
        compiler_params=_compiler_params(),
    )(s_prev_img, in_scale, in_shift, w_taps, b_p)


def _bn_add_relu(s_main, scale, shift, res, r_scale, r_shift, block_rows,
                 out_dtype, res_affine):
    mp, cp = s_main.shape
    grid_m = mp // block_rows
    kern = functools.partial(_bn_add_relu_kernel, res_affine=res_affine)
    return pl.pallas_call(
        kern,
        grid=(grid_m,),
        in_specs=[
            pl.BlockSpec((block_rows, cp), lambda i: (i, 0)),
            _const_spec((1, cp)),
            _const_spec((1, cp)),
            pl.BlockSpec((block_rows, cp), lambda i: (i, 0)),
            _const_spec((1, cp)),
            _const_spec((1, cp)),
        ],
        out_specs=pl.BlockSpec((block_rows, cp), lambda i: (i, 0)),
        out_shape=jax.ShapeDtypeStruct((mp, cp), out_dtype),
        compiler_params=_compiler_params(),
    )(s_main, scale, shift, res, r_scale, r_shift)


# --------------------------------------------------------------------------------------
# Glue: parameter padding, affine folding, BN resolution, pooling, im2col fallback
# --------------------------------------------------------------------------------------
def _prep_conv_params(p, cin_pad, cout_pad):
    w = p["w"]                                                   # (kh, kw, cin, cout)
    kh, kw, cin, cout = w.shape
    w_p = jnp.pad(w, ((0, 0), (0, 0), (0, cin_pad - cin),
                      (0, cout_pad - cout))).astype(jnp.float32)
    b_p = jnp.pad(p["b"], (0, cout_pad - cout)).reshape(1, cout_pad).astype(jnp.float32)
    # gamma padded with ZERO (not one) so padded channels stay exactly 0 downstream.
    g_p = jnp.pad(p["gamma"], (0, cout_pad - cout)).astype(jnp.float32)
    be_p = jnp.pad(p["beta"], (0, cout_pad - cout)).astype(jnp.float32)
    return w_p, b_p, g_p, be_p


def _fold_affine(w2d_f32, b_p, scale, shift):
    """(x*scale + shift) @ W + b  ==  x @ (scale[:,None]*W) + (shift @ W + b)."""
    w_f = (w2d_f32 * scale.reshape(-1, 1)).astype(jnp.bfloat16)
    b_f = b_p + shift.reshape(1, -1) @ w2d_f32
    return w_f, b_f


def _bn_scale_shift(partial_stats, m_valid, gamma_p, beta_p):
    """Reduce per-tile (sum, sum_sq) partials into BN scale/shift (tiny XLA op)."""
    tot = jnp.sum(partial_stats.astype(jnp.float32), axis=0)     # (2, Cp)
    mean = tot[0] / m_valid
    var = jnp.maximum(tot[1] / m_valid - mean * mean, 0.0)       # biased variance
    scale = gamma_p * lax.rsqrt(var + BN_EPS)
    shift = beta_p - mean * scale
    return scale.reshape(1, -1), shift.reshape(1, -1)


def _identity_affine(k):
    return jnp.ones((1, k), jnp.float32), jnp.zeros((1, k), jnp.float32)


def _pad_rows(x2d, mp):
    m = x2d.shape[0]
    return x2d if m == mp else jnp.pad(x2d, ((0, mp - m), (0, 0)))


def _im2col_3x3(x_nhwc, stride):
    n, h, w, c = x_nhwc.shape
    xp = jnp.pad(x_nhwc, ((0, 0), (1, 1), (1, 1), (0, 0)))
    ho = (h - 1) // stride + 1
    wo = (w - 1) // stride + 1
    cols = []
    for i in range(3):
        for j in range(3):
            cols.append(xp[:, i:i + stride * (ho - 1) + 1:stride,
                           j:j + stride * (wo - 1) + 1:stride, :])
    patches = jnp.concatenate(cols, axis=-1)
    return patches.reshape(n * ho * wo, 9 * c), (ho, wo)


def _avgpool2_ceil(x_nhwc):
    n, h, w, c = x_nhwc.shape
    # TODO(synk): partial-window divisors of AvgPool2d(2, ceil_mode=True) for odd H/W
    # are not handled; with even spatial dims (as here) the result is exact.
    assert h % 2 == 0 and w % 2 == 0
    return x_nhwc.reshape(n, h // 2, 2, w // 2, 2, c).mean(axis=(2, 4))


# --------------------------------------------------------------------------------------
# ResBlock: parameter init + forward
# --------------------------------------------------------------------------------------
def _init_conv_layer(key, cin, cout, ks):
    kw_key, kb_key = jax.random.split(key)
    return {
        "w": jax.random.normal(kw_key, (ks, ks, cin, cout), jnp.float32) * 0.1,
        "b": jax.random.normal(kb_key, (cout,), jnp.float32) * 0.1,
        "gamma": jnp.ones((cout,), jnp.float32),
        "beta": jnp.zeros((cout,), jnp.float32),
    }


def init_resblock(key, ni, nf):
    k1, k2, k3, k4 = jax.random.split(key, 4)
    params = {
        "conv1": _init_conv_layer(k1, ni, nf // 4, 1),
        "conv2": _init_conv_layer(k2, nf // 4, nf // 4, 3),
        "conv3": _init_conv_layer(k3, nf // 4, nf, 1),
    }
    if ni != nf:
        params["idconv"] = _init_conv_layer(k4, ni, nf, 1)
    return params


def resblock_forward_nhwc(params, x, ni, nf, stride=1, block_rows=1024,
                          out_dtype=jnp.float32):
    assert block_rows % 16 == 0
    n, h, w, _ = x.shape
    c1 = nf // 4
    c1p = _round_up(c1, LANE)
    nfp = _round_up(nf, LANE)
    nip = _round_up(ni, LANE)

    # Channel-pad the input once so conv1/idconv input blocks are lane-dense bf16
    # (padded channels are exactly 0 and stay 0 end-to-end).
    x_p = jnp.pad(x, ((0, 0), (0, 0), (0, 0), (0, nip - ni))).astype(jnp.bfloat16)

    # ---- ConvLayer 1: 1x1, ni -> nf//4 (no preceding BN -> nothing to apply/fold) ----
    m0 = n * h * w
    br0 = _pick_block_rows(m0, block_rows)
    m0p = _round_up(m0, br0)
    x_flat = _pad_rows(x_p.reshape(m0, nip), m0p)
    w1, b1, g1, be1 = _prep_conv_params(params["conv1"], nip, c1p)
    s1, st1 = _mm_silu_stats(x_flat, w1.reshape(nip, c1p).astype(jnp.bfloat16), b1,
                             m0, br0)
    sc1, sh1 = _bn_scale_shift(st1, m0, g1, be1)

    # ---- ConvLayer 2: 3x3, nf//4 -> nf//4, stride (BN1 applied in-kernel) --------------
    w2, b2, g2, be2 = _prep_conv_params(params["conv2"], c1p, c1p)
    s1_img = s1[:m0].reshape(n, h, w, c1p)
    if stride == 1:
        ho, wo = h, w
        m2 = n * ho * wo
        s2_img, st2 = _conv3x3_stride1(
            s1_img, sc1, sh1, w2.reshape(3, 3 * c1p, c1p).astype(jnp.bfloat16), b2)
        s2_flat = s2_img.reshape(m2, c1p)
    else:
        # TODO(synk): in-kernel strided tap accumulation (phase-split windows) for
        # stride != 1; this fallback applies BN1 in XLA and feeds an im2col patch
        # matrix (~9x HBM inflation for this layer) to the generic matmul kernel.
        h1 = (s1_img.astype(jnp.float32) * sc1 + sh1).astype(jnp.bfloat16)
        patches, (ho, wo) = _im2col_3x3(h1, stride)
        m2 = n * ho * wo
        br2i = _pick_block_rows(m2, block_rows)
        s2p, st2 = _mm_silu_stats(_pad_rows(patches, _round_up(m2, br2i)),
                                  w2.reshape(9 * c1p, c1p).astype(jnp.bfloat16),
                                  b2, m2, br2i)
        s2_flat = s2p[:m2]
    sc2, sh2 = _bn_scale_shift(st2, m2, g2, be2)

    # ---- ConvLayer 3: 1x1, nf//4 -> nf (BN2 folded into W3/b3 host-side) ---------------
    br2 = _pick_block_rows(m2, block_rows)
    m2p = _round_up(m2, br2)
    w3, b3, g3, be3 = _prep_conv_params(params["conv3"], c1p, nfp)
    w3f, b3f = _fold_affine(w3.reshape(c1p, nfp), b3, sc2, sh2)
    s3, st3 = _mm_silu_stats(_pad_rows(s2_flat, m2p), w3f, b3f, m2, br2)
    sc3, sh3 = _bn_scale_shift(st3, m2, g3, be3)

    # ---- identity branch (bf16 residual to halve the final pass's HBM reads) -----------
    xid = x_p if stride == 1 else _avgpool2_ceil(x_p)
    xid_flat = _pad_rows(xid.reshape(m2, nip), m2p)
    if ni != nf:
        wi, bi, gi, bei = _prep_conv_params(params["idconv"], nip, nfp)
        res, sti = _mm_silu_stats(xid_flat, wi.reshape(nip, nfp).astype(jnp.bfloat16),
                                  bi, m2, br2)
        r_sc, r_sh = _bn_scale_shift(sti, m2, gi, bei)
        res_affine = True
    else:
        res = xid_flat                                   # nip == nfp; padded chans are 0
        r_sc, r_sh = _identity_affine(nfp)
        res_affine = False

    # ---- BN3 + BN_id (or identity) + residual add + ReLU, one fused pass ----------------
    out = _bn_add_relu(s3, sc3, sh3, res, r_sc, r_sh, br2, out_dtype, res_affine)
    return out[:m2, :nf].reshape(n, ho, wo, nf)


def resblock_forward(params, x_nchw, ni, nf, stride=1, block_rows=1024,
                     out_dtype=jnp.float32):
    # TODO(synk): callers that already hold NHWC activations should call
    # resblock_forward_nhwc directly and skip these two full-tensor transposes.
    x = jnp.transpose(x_nchw, (0, 2, 3, 1))                      # NCHW -> NHWC
    y = resblock_forward_nhwc(params, x, ni, nf, stride, block_rows, out_dtype)
    return jnp.transpose(y, (0, 3, 1, 2))                        # NHWC -> NCHW


# --------------------------------------------------------------------------------------
# Pure-JAX reference (lax.conv, f32) for a sanity check
# --------------------------------------------------------------------------------------
def _ref_conv_layer(x_nhwc, p, stride):
    w = p["w"]
    kh = w.shape[0]
    pad = (kh - 1) // 2
    y = lax.conv_general_dilated(
        x_nhwc, w, window_strides=(stride, stride),
        padding=[(pad, pad), (pad, pad)],
        dimension_numbers=("NHWC", "HWIO", "NHWC"),
    ) + p["b"]
    s = y * jax.nn.sigmoid(y)
    mean = jnp.mean(s, axis=(0, 1, 2), keepdims=True)
    var = jnp.mean(jnp.square(s - mean), axis=(0, 1, 2), keepdims=True)
    return (s - mean) * lax.rsqrt(var + BN_EPS) * p["gamma"] + p["beta"]


def _ref_resblock(params, x_nchw, ni, nf, stride=1):
    x = jnp.transpose(x_nchw, (0, 2, 3, 1))
    hh = _ref_conv_layer(x, params["conv1"], 1)
    hh = _ref_conv_layer(hh, params["conv2"], stride)
    hh = _ref_conv_layer(hh, params["conv3"], 1)
    idx = x if stride == 1 else _avgpool2_ceil(x)
    if ni != nf:
        idx = _ref_conv_layer(idx, params["idconv"], 1)
    return jnp.transpose(jnp.maximum(hh + idx, 0.0), (0, 3, 1, 2))


# --------------------------------------------------------------------------------------
if __name__ == "__main__":
    key = jax.random.PRNGKey(0)
    kp1, kp2, kx1, kx2 = jax.random.split(key, 4)

    # Case A: ni != nf (idconv branch), stride 1 (in-kernel 3-matmul tap accumulation).
    N, NI, NF, H, W, STRIDE = 2, 4, 8, 16, 16, 1
    x = jax.random.normal(kx1, (N, NI, H, W), jnp.float32)
    params = init_resblock(kp1, NI, NF)
    fwd = jax.jit(lambda p, xx: resblock_forward(p, xx, NI, NF, STRIDE))
    out = jax.block_until_ready(fwd(params, x))
    ref = _ref_resblock(params, x, NI, NF, STRIDE)
    assert out.shape == (N, NF, H, W)
    assert bool(jnp.all(jnp.isfinite(out)))
    err = float(jnp.max(jnp.abs(out - ref)))
    assert jnp.allclose(out, ref, atol=5e-2, rtol=5e-2), err

    # Case B: ni == nf (identity residual), stride 2 (avg-pool + im2col fallback path).
    N2, NI2, NF2, STRIDE2 = 2, 8, 8, 2
    x2 = jax.random.normal(kx2, (N2, NI2, H, W), jnp.float32)
    params2 = init_resblock(kp2, NI2, NF2)
    fwd2 = jax.jit(lambda p, xx: resblock_forward(p, xx, NI2, NF2, STRIDE2))
    out2 = jax.block_until_ready(fwd2(params2, x2))
    ref2 = _ref_resblock(params2, x2, NI2, NF2, STRIDE2)
    assert out2.shape == (N2, NF2, H // 2, W // 2)
    assert bool(jnp.all(jnp.isfinite(out2)))
    err2 = float(jnp.max(jnp.abs(out2 - ref2)))
    assert jnp.allclose(out2, ref2, atol=5e-2, rtol=5e-2), err2

    print("KERNEL_OK")
</pallas_src>

<mosaic_0001>
module attributes {stable_mosaic.version = 11 : i64} {
  func.func @_mm_silu_stats_kernel(%arg0: i32, %arg1: memref<512x128xbf16, #tpu.memory_space<vmem>>, %arg2: memref<128x128xbf16, #tpu.memory_space<vmem>>, %arg3: memref<1x128xf32, #tpu.memory_space<vmem>>, %arg4: memref<512x128xbf16, #tpu.memory_space<vmem>>, %arg5: memref<1x2x128xf32, #tpu.memory_space<vmem>>) attributes {dimension_semantics = [#tpu.dimension_semantics<parallel>], iteration_bounds = array<i64: 1>, scalar_prefetch = 0 : i64, scratch_operands = 0 : i64, tpu.core_type = #tpu.core_type<tc>, window_params = [{transform_indices = @transform_0, window_bounds = array<i64: 512, 128>}, {pipeline_mode = #tpu.pipeline_mode<synchronous>, transform_indices = @transform_1, window_bounds = array<i64: 128, 128>}, {pipeline_mode = #tpu.pipeline_mode<synchronous>, transform_indices = @transform_2, window_bounds = array<i64: 1, 128>}, {transform_indices = @transform_3, window_bounds = array<i64: 512, 128>}, {transform_indices = @transform_4, window_bounds = array<i64: 1, 2, 128>}]} {
    %c0 = arith.constant 0 : index
    %c0_0 = arith.constant 0 : index
    %0 = vector.load %arg1[%c0, %c0_0] : memref<512x128xbf16, #tpu.memory_space<vmem>>, vector<512x128xbf16>
    %c0_1 = arith.constant 0 : index
    %c0_2 = arith.constant 0 : index
    %1 = vector.load %arg2[%c0_1, %c0_2] : memref<128x128xbf16, #tpu.memory_space<vmem>>, vector<128x128xbf16>
    %cst = arith.constant dense<0.000000e+00> : vector<512x128xf32>
    %2 = tpu.matmul %0, %1, %cst {dimension_numbers = #tpu.dot_dimension_numbers<[1], [0], [0], [1], [0, 0, 1, 1], [], []>} : vector<512x128xbf16>, vector<128x128xbf16>, vector<512x128xf32> -> vector<512x128xf32>
    %c0_3 = arith.constant 0 : index
    %c0_4 = arith.constant 0 : index
    %3 = vector.load %arg3[%c0_3, %c0_4] : memref<1x128xf32, #tpu.memory_space<vmem>>, vector<1x128xf32>
    %4 = vector.broadcast %3 : vector<1x128xf32> to vector<512x128xf32>
    %5 = arith.addf %2, %4 : vector<512x128xf32>
    %6 = arith.negf %5 : vector<512x128xf32>
    %7 = math.exp %6 : vector<512x128xf32>
    %cst_5 = arith.constant 1.000000e+00 : f32
    %8 = vector.broadcast %cst_5 : f32 to vector<512x128xf32>
    %9 = arith.addf %8, %7 : vector<512x128xf32>
    %10 = arith.divf %8, %9 : vector<512x128xf32>
    %11 = arith.mulf %5, %10 : vector<512x128xf32>
    %12 = arith.truncf %11 : vector<512x128xf32> to vector<512x128xbf16>
    %c0_6 = arith.constant 0 : index
    %c0_7 = arith.constant 0 : index
    %13 = vector.load %arg4[%c0_6, %c0_7] : memref<512x128xbf16, #tpu.memory_space<vmem>>, vector<512x128xbf16>
    tpu.vector_store %arg4[%c0_6, %c0_7], %12 {strides = array<i32>} : memref<512x128xbf16, #tpu.memory_space<vmem>>, vector<512x128xbf16>,
    %cst_8 = arith.constant dense<0.000000e+00> : vector<128xf32>
    %14 = vector.multi_reduction <add>, %11, %cst_8 [0] : vector<512x128xf32> to vector<128xf32>
    %15 = vector.shape_cast %14 : vector<128xf32> to vector<1x128xf32>
    %16 = arith.mulf %11, %11 : vector<512x128xf32>
    %cst_9 = arith.constant dense<0.000000e+00> : vector<128xf32>
    %17 = vector.multi_reduction <add>, %16, %cst_9 [0] : vector<512x128xf32> to vector<128xf32>
    %18 = vector.shape_cast %17 : vector<128xf32> to vector<1x128xf32>
    %19 = tpu.concatenate %15, %18 in 0 : vector<1x128xf32>, vector<1x128xf32> -> vector<2x128xf32>
    %20 = vector.shape_cast %19 : vector<2x128xf32> to vector<1x2x128xf32>
    %c0_10 = arith.constant 0 : index
    %c0_11 = arith.constant 0 : index
    %c0_12 = arith.constant 0 : index
    %21 = vector.load %arg5[%c0_10, %c0_11, %c0_12] : memref<1x2x128xf32, #tpu.memory_space<vmem>>, vector<1x2x128xf32>
    tpu.vector_store %arg5[%c0_10, %c0_11, %c0_12], %20 {strides = array<i32>} : memref<1x2x128xf32, #tpu.memory_space<vmem>>, vector<1x2x128xf32>,
    return
  }
  func.func @transform_0(%arg0: i32) -> (i32, i32) {
    %c0_i32 = arith.constant 0 : i32
    %c0_i32_0 = arith.constant 0 : i32
    return %arg0, %c0_i32 : i32, i32
  }
  func.func @transform_1(%arg0: i32) -> (i32, i32) {
    %c0_i32 = arith.constant 0 : i32
    %c0_i32_0 = arith.constant 0 : i32
    %c0_i32_1 = arith.constant 0 : i32
    return %c0_i32, %c0_i32_0 : i32, i32
  }
  func.func @transform_2(%arg0: i32) -> (i32, i32) {
    %c0_i32 = arith.constant 0 : i32
    %c0_i32_0 = arith.constant 0 : i32
    %c0_i32_1 = arith.constant 0 : i32
    return %c0_i32, %c0_i32_0 : i32, i32
  }
  func.func @transform_3(%arg0: i32) -> (i32, i32) {
    %c0_i32 = arith.constant 0 : i32
    %c0_i32_0 = arith.constant 0 : i32
    return %arg0, %c0_i32 : i32, i32
  }
  func.func @transform_4(%arg0: i32) -> (i32, i32, i32) {
    %c0_i32 = arith.constant 0 : i32
    %c0_i32_0 = arith.constant 0 : i32
    %c0_i32_1 = arith.constant 0 : i32
    return %arg0, %c0_i32, %c0_i32_0 : i32, i32, i32
  }
}

module attributes {stable_mosaic.version = 11 : i64} {
  func.func @_conv3x3_silu_stats_kernel(%arg0: i32, %arg1: memref<1x16x16x128xbf16, #tpu.memory_space<vmem>>, %arg2: memref<1x128xf32, #tpu.memory_space<vmem>>, %arg3: memref<1x128xf32, #tpu.memory_space<vmem>>, %arg4: memref<3x384x128xbf16, #tpu.memory_space<vmem>>, %arg5: memref<1x128xf32, #tpu.memory_space<vmem>>, %arg6: memref<1x16x16x128xbf16, #tpu.memory_space<vmem>>, %arg7: memref<1x2x128xf32, #tpu.memory_space<vmem>>, %arg8: memref<18x18x128xbf16, #tpu.memory_space<vmem>>) attributes {dimension_semantics = [#tpu.dimension_semantics<parallel>], iteration_bounds = array<i64: 2>, scalar_prefetch = 0 : i64, scratch_operands = 1 : i64, tpu.core_type = #tpu.core_type<tc>, window_params = [{transform_indices = @transform_0, window_bounds = array<i64: 1, 16, 16, 128>}, {pipeline_mode = #tpu.pipeline_mode<synchronous>, transform_indices = @transform_1, window_bounds = array<i64: 1, 128>}, {pipeline_mode = #tpu.pipeline_mode<synchronous>, transform_indices = @transform_2, window_bounds = array<i64: 1, 128>}, {pipeline_mode = #tpu.pipeline_mode<synchronous>, transform_indices = @transform_3, window_bounds = array<i64: 3, 384, 128>}, {pipeline_mode = #tpu.pipeline_mode<synchronous>, transform_indices = @transform_4, window_bounds = array<i64: 1, 128>}, {transform_indices = @transform_5, window_bounds = array<i64: 1, 16, 16, 128>}, {transform_indices = @transform_6, window_bounds = array<i64: 1, 2, 128>}]} {
    %c0 = arith.constant 0 : index
    %c0_0 = arith.constant 0 : index
    %c0_1 = arith.constant 0 : index
    %c0_2 = arith.constant 0 : index
    %0 = vector.load %arg1[%c0, %c0_0, %c0_1, %c0_2] : memref<1x16x16x128xbf16, #tpu.memory_space<vmem>>, vector<1x16x16x128xbf16>
    %1 = vector.shape_cast %0 : vector<1x16x16x128xbf16> to vector<16x16x128xbf16>
    %2 = arith.extf %1 : vector<16x16x128xbf16> to vector<16x16x128xf32>
    %c0_3 = arith.constant 0 : index
    %c0_4 = arith.constant 0 : index
    %3 = vector.load %arg2[%c0_3, %c0_4] : memref<1x128xf32, #tpu.memory_space<vmem>>, vector<1x128xf32>
    %4 = vector.shape_cast %3 : vector<1x128xf32> to vector<1x1x128xf32>
    %5 = vector.broadcast %4 : vector<1x1x128xf32> to vector<16x16x128xf32>
    %6 = arith.mulf %2, %5 : vector<16x16x128xf32>
    %c0_5 = arith.constant 0 : index
    %c0_6 = arith.constant 0 : index
    %7 = vector.load %arg3[%c0_5, %c0_6] : memref<1x128xf32, #tpu.memory_space<vmem>>, vector<1x128xf32>
    %8 = vector.shape_cast %7 : vector<1x128xf32> to vector<1x1x128xf32>
    %9 = vector.broadcast %8 : vector<1x1x128xf32> to vector<16x16x128xf32>
    %10 = arith.addf %6, %9 : vector<16x16x128xf32>
    %11 = arith.truncf %10 : vector<16x16x128xf32> to vector<16x16x128xbf16>
    %cst = arith.constant 0.000000e+00 : bf16
    %12 = vector.broadcast %cst : bf16 to vector<1x18x128xbf16>
    %cst_7 = arith.constant 0.000000e+00 : bf16
    %13 = vector.broadcast %cst_7 : bf16 to vector<16x1x128xbf16>
    %14 = tpu.concatenate %13, %11, %13 in 1 : vector<16x1x128xbf16>, vector<16x16x128xbf16>, vector<16x1x128xbf16> -> vector<16x18x128xbf16>
    %15 = tpu.concatenate %12, %14, %12 in 0 : vector<1x18x128xbf16>, vector<16x18x128xbf16>, vector<1x18x128xbf16> -> vector<18x18x128xbf16>
    %c0_8 = arith.constant 0 : index
    %c0_9 = arith.constant 0 : index
    %c0_10 = arith.constant 0 : index
    %16 = vector.load %arg8[%c0_8, %c0_9, %c0_10] : memref<18x18x128xbf16, #tpu.memory_space<vmem>>, vector<18x18x128xbf16>
    tpu.vector_store %arg8[%c0_8, %c0_9, %c0_10], %15 {strides = array<i32>} : memref<18x18x128xbf16, #tpu.memory_space<vmem>>, vector<18x18x128xbf16>,
    %cst_11 = arith.constant 0.000000e+00 : f32
    %17 = vector.broadcast %cst_11 : f32 to vector<256x128xf32>
    %c0_12 = arith.constant 0 : index
    %c0_13 = arith.constant 0 : index
    %c0_14 = arith.constant 0 : index
    %18 = vector.load %arg8[%c0_12, %c0_13, %c0_14] : memref<18x18x128xbf16, #tpu.memory_space<vmem>>, vector<16x18x128xbf16>
    %19 = vector.extract_strided_slice %18 {offsets = [0, 0, 0], sizes = [16, 16, 128], strides = [1, 1, 1]} : vector<16x18x128xbf16> to vector<16x16x128xbf16>
    %20 = vector.extract_strided_slice %18 {offsets = [0, 1, 0], sizes = [16, 16, 128], strides = [1, 1, 1]} : vector<16x18x128xbf16> to vector<16x16x128xbf16>
    %21 = vector.extract_strided_slice %18 {offsets = [0, 2, 0], sizes = [16, 16, 128], strides = [1, 1, 1]} : vector<16x18x128xbf16> to vector<16x16x128xbf16>
    %22 = tpu.concatenate %19, %20, %21 in 2 : vector<16x16x128xbf16>, vector<16x16x128xbf16>, vector<16x16x128xbf16> -> vector<16x16x384xbf16>
    %23 = vector.shape_cast %22 : vector<16x16x384xbf16> to vector<256x384xbf16>
    %c0_15 = arith.constant 0 : index
    %c0_16 = arith.constant 0 : index
    %c0_17 = arith.constant 0 : index
    %24 = vector.load %arg4[%c0_15, %c0_16, %c0_17] : memref<3x384x128xbf16, #tpu.memory_space<vmem>>, vector<1x384x128xbf16>
    %25 = vector.shape_cast %24 : vector<1x384x128xbf16> to vector<384x128xbf16>
    %cst_18 = arith.constant dense<0.000000e+00> : vector<256x128xf32>
    %26 = tpu.matmul %23, %25, %cst_18 {dimension_numbers = #tpu.dot_dimension_numbers<[1], [0], [0], [1], [0, 0, 1, 1], [], []>} : vector<256x384xbf16>, vector<384x128xbf16>, vector<256x128xf32> -> vector<256x128xf32>
    %27 = arith.addf %17, %26 : vector<256x128xf32>
    %c1 = arith.constant 1 : index
    %c0_19 = arith.constant 0 : index
    %c0_20 = arith.constant 0 : index
    %28 = vector.load %arg8[%c1, %c0_19, %c0_20] : memref<18x18x128xbf16, #tpu.memory_space<vmem>>, vector<16x18x128xbf16>
    %29 = vector.extract_strided_slice %28 {offsets = [0, 0, 0], sizes = [16, 16, 128], strides = [1, 1, 1]} : vector<16x18x128xbf16> to vector<16x16x128xbf16>
    %30 = vector.extract_strided_slice %28 {offsets = [0, 1, 0], sizes = [16, 16, 128], strides = [1, 1, 1]} : vector<16x18x128xbf16> to vector<16x16x128xbf16>
    %31 = vector.extract_strided_slice %28 {offsets = [0, 2, 0], sizes = [16, 16, 128], strides = [1, 1, 1]} : vector<16x18x128xbf16> to vector<16x16x128xbf16>
    %32 = tpu.concatenate %29, %30, %31 in 2 : vector<16x16x128xbf16>, vector<16x16x128xbf16>, vector<16x16x128xbf16> -> vector<16x16x384xbf16>
    %33 = vector.shape_cast %32 : vector<16x16x384xbf16> to vector<256x384xbf16>
    %c1_21 = arith.constant 1 : index
    %c0_22 = arith.constant 0 : index
    %c0_23 = arith.constant 0 : index
    %34 = vector.load %arg4[%c1_21, %c0_22, %c0_23] : memref<3x384x128xbf16, #tpu.memory_space<vmem>>, vector<1x384x128xbf16>
    %35 = vector.shape_cast %34 : vector<1x384x128xbf16> to vector<384x128xbf16>
    %cst_24 = arith.constant dense<0.000000e+00> : vector<256x128xf32>
    %36 = tpu.matmul %33, %35, %cst_24 {dimension_numbers = #tpu.dot_dimension_numbers<[1], [0], [0], [1], [0, 0, 1, 1], [], []>} : vector<256x384xbf16>, vector<384x128xbf16>, vector<256x128xf32> -> vector<256x128xf32>
    %37 = arith.addf %27, %36 : vector<256x128xf32>
    %c2 = arith.constant 2 : index
    %c0_25 = arith.constant 0 : index
    %c0_26 = arith.constant 0 : index
    %38 = vector.load %arg8[%c2, %c0_25, %c0_26] : memref<18x18x128xbf16, #tpu.memory_space<vmem>>, vector<16x18x128xbf16>
    %39 = vector.extract_strided_slice %38 {offsets = [0, 0, 0], sizes = [16, 16, 128], strides = [1, 1, 1]} : vector<16x18x128xbf16> to vector<16x16x128xbf16>
    %40 = vector.extract_strided_slice %38 {offsets = [0, 1, 0], sizes = [16, 16, 128], strides = [1, 1, 1]} : vector<16x18x128xbf16> to vector<16x16x128xbf16>
    %41 = vector.extract_strided_slice %38 {offsets = [0, 2, 0], sizes = [16, 16, 128], strides = [1, 1, 1]} : vector<16x18x128xbf16> to vector<16x16x128xbf16>
    %42 = tpu.concatenate %39, %40, %41 in 2 : vector<16x16x128xbf16>, vector<16x16x128xbf16>, vector<16x16x128xbf16> -> vector<16x16x384xbf16>
    %43 = vector.shape_cast %42 : vector<16x16x384xbf16> to vector<256x384xbf16>
    %c2_27 = arith.constant 2 : index
    %c0_28 = arith.constant 0 : index
    %c0_29 = arith.constant 0 : index
    %44 = vector.load %arg4[%c2_27, %c0_28, %c0_29] : memref<3x384x128xbf16, #tpu.memory_space<vmem>>, vector<1x384x128xbf16>
    %45 = vector.shape_cast %44 : vector<1x384x128xbf16> to vector<384x128xbf16>
    %cst_30 = arith.constant dense<0.000000e+00> : vector<256x128xf32>
    %46 = tpu.matmul %43, %45, %cst_30 {dimension_numbers = #tpu.dot_dimension_numbers<[1], [0], [0], [1], [0, 0, 1, 1], [], []>} : vector<256x384xbf16>, vector<384x128xbf16>, vector<256x128xf32> -> vector<256x128xf32>
    %47 = arith.addf %37, %46 : vector<256x128xf32>
    %c0_31 = arith.constant 0 : index
    %c0_32 = arith.constant 0 : index
    %48 = vector.load %arg5[%c0_31, %c0_32] : memref<1x128xf32, #tpu.memory_space<vmem>>, vector<1x128xf32>
    %49 = vector.broadcast %48 : vector<1x128xf32> to vector<256x128xf32>
    %50 = arith.addf %47, %49 : vector<256x128xf32>
    %51 = arith.negf %50 : vector<256x128xf32>
    %52 = math.exp %51 : vector<256x128xf32>
    %cst_33 = arith.constant 1.000000e+00 : f32
    %53 = vector.broadcast %cst_33 : f32 to vector<256x128xf32>
    %54 = arith.addf %53, %52 : vector<256x128xf32>
    %55 = arith.divf %53, %54 : vector<256x128xf32>
    %56 = arith.mulf %50, %55 : vector<256x128xf32>
    %57 = vector.shape_cast %56 : vector<256x128xf32> to vector<1x16x16x128xf32>
    %58 = arith.truncf %57 : vector<1x16x16x128xf32> to vector<1x16x16x128xbf16>
    %c0_34 = arith.constant 0 : index
    %c0_35 = arith.constant 0 : index
    %c0_36 = arith.constant 0 : index
    %c0_37 = arith.constant 0 : index
    %59 = vector.load %arg6[%c0_34, %c0_35, %c0_36, %c0_37] : memref<1x16x16x128xbf16, #tpu.memory_space<vmem>>, vector<1x16x16x128xbf16>
    tpu.vector_store %arg6[%c0_34, %c0_35, %c0_36, %c0_37], %58 {strides = array<i32>} : memref<1x16x16x128xbf16, #tpu.memory_space<vmem>>, vector<1x16x16x128xbf16>,
    %cst_38 = arith.constant dense<0.000000e+00> : vector<128xf32>
    %60 = vector.multi_reduction <add>, %56, %cst_38 [0] : vector<256x128xf32> to vector<128xf32>
    %61 = vector.shape_cast %60 : vector<128xf32> to vector<1x128xf32>
    %62 = arith.mulf %56, %56 : vector<256x128xf32>
    %cst_39 = arith.constant dense<0.000000e+00> : vector<128xf32>
    %63 = vector.multi_reduction <add>, %62, %cst_39 [0] : vector<256x128xf32> to vector<128xf32>
    %64 = vector.shape_cast %63 : vector<128xf32> to vector<1x128xf32>
    %65 = tpu.concatenate %61, %64 in 0 : vector<1x128xf32>, vector<1x128xf32> -> vector<2x128xf32>
    %66 = vector.shape_cast %65 : vector<2x128xf32> to vector<1x2x128xf32>
    %c0_40 = arith.constant 0 : index
    %c0_41 = arith.constant 0 : index
    %c0_42 = arith.constant 0 : index
    %67 = vector.load %arg7[%c0_40, %c0_41, %c0_42] : memref<1x2x128xf32, #tpu.memory_space<vmem>>, vector<1x2x128xf32>
    tpu.vector_store %arg7[%c0_40, %c0_41, %c0_42], %66 {strides = array<i32>} : memref<1x2x128xf32, #tpu.memory_space<vmem>>, vector<1x2x128xf32>,
    return
  }
  func.func @transform_0(%arg0: i32) -> (i32, i32, i32, i32) {
    %c0_i32 = arith.constant 0 : i32
    %c0_i32_0 = arith.constant 0 : i32
    %c0_i32_1 = arith.constant 0 : i32
    %c0_i32_2 = arith.constant 0 : i32
    return %arg0, %c0_i32, %c0_i32_0, %c0_i32_1 : i32, i32, i32, i32
  }
  func.func @transform_1(%arg0: i32) -> (i32, i32) {
    %c0_i32 = arith.constant 0 : i32
    %c0_i32_0 = arith.constant 0 : i32
    %c0_i32_1 = arith.constant 0 : i32
    return %c0_i32, %c0_i32_0 : i32, i32
  }
  func.func @transform_2(%arg0: i32) -> (i32, i32) {
    %c0_i32 = arith.constant 0 : i32
    %c0_i32_0 = arith.constant 0 : i32
    %c0_i32_1 = arith.constant 0 : i32
    return %c0_i32, %c0_i32_0 : i32, i32
  }
  func.func @transform_3(%arg0: i32) -> (i32, i32, i32) {
    %c0_i32 = arith.constant 0 : i32
    %c0_i32_0 = arith.constant 0 : i32
    %c0_i32_1 = arith.constant 0 : i32
    %c0_i32_2 = arith.constant 0 : i32
    return %c0_i32, %c0_i32_0, %c0_i32_1 : i32, i32, i32
  }
  func.func @transform_4(%arg0: i32) -> (i32, i32) {
    %c0_i32 = arith.constant 0 : i32
    %c0_i32_0 = arith.constant 0 : i32
    %c0_i32_1 = arith.constant 0 : i32
    return %c0_i32, %c0_i32_0 : i32, i32
  }
  func.func @transform_5(%arg0: i32) -> (i32, i32, i32, i32) {
    %c0_i32 = arith.constant 0 : i32
    %c0_i32_0 = arith.constant 0 : i32
    %c0_i32_1 = arith.constant 0 : i32
    %c0_i32_2 = arith.constant 0 : i32
    return %arg0, %c0_i32, %c0_i32_0, %c0_i32_1 : i32, i32, i32, i32
  }
  func.func @transform_6(%arg0: i32) -> (i32, i32, i32) {
    %c0_i32 = arith.constant 0 : i32
    %c0_i32_0 = arith.constant 0 : i32
    %c0_i32_1 = arith.constant 0 : i32
    return %arg0, %c0_i32, %c0_i32_0 : i32, i32, i32
  }
}

module attributes {stable_mosaic.version = 11 : i64} {
  func.func @_bn_add_relu_kernel(%arg0: i32, %arg1: memref<512x128xbf16, #tpu.memory_space<vmem>>, %arg2: memref<1x128xf32, #tpu.memory_space<vmem>>, %arg3: memref<1x128xf32, #tpu.memory_space<vmem>>, %arg4: memref<512x128xbf16, #tpu.memory_space<vmem>>, %arg5: memref<1x128xf32, #tpu.memory_space<vmem>>, %arg6: memref<1x128xf32, #tpu.memory_space<vmem>>, %arg7: memref<512x128xf32, #tpu.memory_space<vmem>>) attributes {dimension_semantics = [#tpu.dimension_semantics<parallel>], iteration_bounds = array<i64: 1>, scalar_prefetch = 0 : i64, scratch_operands = 0 : i64, tpu.core_type = #tpu.core_type<tc>, window_params = [{transform_indices = @transform_0, window_bounds = array<i64: 512, 128>}, {pipeline_mode = #tpu.pipeline_mode<synchronous>, transform_indices = @transform_1, window_bounds = array<i64: 1, 128>}, {pipeline_mode = #tpu.pipeline_mode<synchronous>, transform_indices = @transform_2, window_bounds = array<i64: 1, 128>}, {transform_indices = @transform_3, window_bounds = array<i64: 512, 128>}, {pipeline_mode = #tpu.pipeline_mode<synchronous>, transform_indices = @transform_4, window_bounds = array<i64: 1, 128>}, {pipeline_mode = #tpu.pipeline_mode<synchronous>, transform_indices = @transform_5, window_bounds = array<i64: 1, 128>}, {transform_indices = @transform_6, window_bounds = array<i64: 512, 128>}]} {
    %c0 = arith.constant 0 : index
    %c0_0 = arith.constant 0 : index
    %0 = vector.load %arg1[%c0, %c0_0] : memref<512x128xbf16, #tpu.memory_space<vmem>>, vector<512x128xbf16>
    %1 = arith.extf %0 : vector<512x128xbf16> to vector<512x128xf32>
    %c0_1 = arith.constant 0 : index
    %c0_2 = arith.constant 0 : index
    %2 = vector.load %arg2[%c0_1, %c0_2] : memref<1x128xf32, #tpu.memory_space<vmem>>, vector<1x128xf32>
    %3 = vector.broadcast %2 : vector<1x128xf32> to vector<512x128xf32>
    %4 = arith.mulf %1, %3 : vector<512x128xf32>
    %c0_3 = arith.constant 0 : index
    %c0_4 = arith.constant 0 : index
    %5 = vector.load %arg3[%c0_3, %c0_4] : memref<1x128xf32, #tpu.memory_space<vmem>>, vector<1x128xf32>
    %6 = vector.broadcast %5 : vector<1x128xf32> to vector<512x128xf32>
    %7 = arith.addf %4, %6 : vector<512x128xf32>
    %c0_5 = arith.constant 0 : index
    %c0_6 = arith.constant 0 : index
    %8 = vector.load %arg4[%c0_5, %c0_6] : memref<512x128xbf16, #tpu.memory_space<vmem>>, vector<512x128xbf16>
    %9 = arith.extf %8 : vector<512x128xbf16> to vector<512x128xf32>
    %c0_7 = arith.constant 0 : index
    %c0_8 = arith.constant 0 : index
    %10 = vector.load %arg5[%c0_7, %c0_8] : memref<1x128xf32, #tpu.memory_space<vmem>>, vector<1x128xf32>
    %11 = vector.broadcast %10 : vector<1x128xf32> to vector<512x128xf32>
    %12 = arith.mulf %9, %11 : vector<512x128xf32>
    %c0_9 = arith.constant 0 : index
    %c0_10 = arith.constant 0 : index
    %13 = vector.load %arg6[%c0_9, %c0_10] : memref<1x128xf32, #tpu.memory_space<vmem>>, vector<1x128xf32>
    %14 = vector.broadcast %13 : vector<1x128xf32> to vector<512x128xf32>
    %15 = arith.addf %12, %14 : vector<512x128xf32>
    %16 = arith.addf %7, %15 : vector<512x128xf32>
    %cst = arith.constant 0.000000e+00 : f32
    %17 = vector.broadcast %cst : f32 to vector<512x128xf32>
    %18 = arith.maximumf %16, %17 : vector<512x128xf32>
    %c0_11 = arith.constant 0 : index
    %c0_12 = arith.constant 0 : index
    %19 = vector.load %arg7[%c0_11, %c0_12] : memref<512x128xf32, #tpu.memory_space<vmem>>, vector<512x128xf32>
    tpu.vector_store %arg7[%c0_11, %c0_12], %18 {strides = array<i32>} : memref<512x128xf32, #tpu.memory_space<vmem>>, vector<512x128xf32>,
    return
  }
  func.func @transform_0(%arg0: i32) -> (i32, i32) {
    %c0_i32 = arith.constant 0 : i32
    %c0_i32_0 = arith.constant 0 : i32
    return %arg0, %c0_i32 : i32, i32
  }
  func.func @transform_1(%arg0: i32) -> (i32, i32) {
    %c0_i32 = arith.constant 0 : i32
    %c0_i32_0 = arith.constant 0 : i32
    %c0_i32_1 = arith.constant 0 : i32
    return %c0_i32, %c0_i32_0 : i32, i32
  }
  func.func @transform_2(%arg0: i32) -> (i32, i32) {
    %c0_i32 = arith.constant 0 : i32
    %c0_i32_0 = arith.constant 0 : i32
    %c0_i32_1 = arith.constant 0 : i32
    return %c0_i32, %c0_i32_0 : i32, i32
  }
  func.func @transform_3(%arg0: i32) -> (i32, i32) {
    %c0_i32 = arith.constant 0 : i32
    %c0_i32_0 = arith.constant 0 : i32
    return %arg0, %c0_i32 : i32, i32
  }
  func.func @transform_4(%arg0: i32) -> (i32, i32) {
    %c0_i32 = arith.constant 0 : i32
    %c0_i32_0 = arith.constant 0 : i32
    %c0_i32_1 = arith.constant 0 : i32
    return %c0_i32, %c0_i32_0 : i32, i32
  }
  func.func @transform_5(%arg0: i32) -> (i32, i32) {
    %c0_i32 = arith.constant 0 : i32
    %c0_i32_0 = arith.constant 0 : i32
    %c0_i32_1 = arith.constant 0 : i32
    return %c0_i32, %c0_i32_0 : i32, i32
  }
  func.func @transform_6(%arg0: i32) -> (i32, i32) {
    %c0_i32 = arith.constant 0 : i32
    %c0_i32_0 = arith.constant 0 : i32
    return %arg0, %c0_i32 : i32, i32
  }
}

</mosaic_0001>

<llo_original>
// kernel: _lambda_.9
$region0: #{_lambda_.9}
  #allocation0 [shape = 'u32[]', space=smem, size = 0x4, offset = 0x4, fixed_abs, tag = 'smem constant byte address 0x4 - core index']
  #allocation1 [shape = 'u32[144,128]{1,0:T(1,128)}', space=vmem, size = 0x12000, scoped, tag = 'internal scratch']
  %s0 = inlined_call_operand.vmem [shape: bf16[512,128], index: 0, kind: input, shape index: {}]
  %s1 = inlined_call_operand.vmem [shape: f32[1,128], index: 1, kind: input, shape index: {}]
  %s2 = inlined_call_operand.vmem [shape: f32[1,128], index: 2, kind: input, shape index: {}]
  %s3 = inlined_call_operand.vmem [shape: bf16[512,128], index: 3, kind: input, shape index: {}]
  %s4 = inlined_call_operand.vmem [shape: f32[1,128], index: 4, kind: input, shape index: {}]
  %s5 = inlined_call_operand.vmem [shape: f32[1,128], index: 5, kind: input, shape index: {}]
  %s6 = inlined_call_operand.vmem [shape: f32[512,128], index: 6, kind: output, shape index: {}]
  %s7 = sld [smem:[#allocation0]]
  $region34: #{_lambda_.9} parent=0
    _
  %s9 = ssub.s32 1, %s7
  %s10 = scalar_select 0, %s9, %s7
  // Predicated region
  $region2: #{_lambda_.9} parent=0 // pred_check
    _
  $region3: #{_lambda_.9} parent=0 // pred_check_branch
    %12 = sbr.rel (0) target = $region5
  $region4: #{_lambda_.9} parent=0 // pred_region
    _
  $region5: #{_lambda_.9} parent=0 // pred_fallthru
    _
  // Predicated region
  $region6: #{_lambda_.9} parent=0 // pred_check
    _
  $region7: #{_lambda_.9} parent=0 // pred_check_branch
    %14 = sbr.rel (0) target = $region9
  $region8: #{_lambda_.9} parent=0 // pred_region
    _
  $region9: #{_lambda_.9} parent=0 // pred_fallthru
    _
  // Predicated region
  $region10: #{_lambda_.9} parent=0 // pred_check
    _
  $region11: #{_lambda_.9} parent=0 // pred_check_branch
    %16 = sbr.rel (0) target = $region13
  $region12: #{_lambda_.9} parent=0 // pred_region
    _
  $region13: #{_lambda_.9} parent=0 // pred_fallthru
    _
  // Predicated region
  $region14: #{_lambda_.9} parent=0 // pred_check
    _
  $region15: #{_lambda_.9} parent=0 // pred_check_branch
    %18 = sbr.rel (0) target = $region17
  $region16: #{_lambda_.9} parent=0 // pred_region
    _
  $region17: #{_lambda_.9} parent=0 // pred_fallthru
    _
  // Predicated region
  $region18: #{_lambda_.9} parent=0 // pred_check
    _
  $region19: #{_lambda_.9} parent=0 // pred_check_branch
    %20 = sbr.rel (0) target = $region21
  $region20: #{_lambda_.9} parent=0 // pred_region
    _
  $region21: #{_lambda_.9} parent=0 // pred_fallthru
    _
  // Predicated region
  $region22: #{_lambda_.9} parent=0 // pred_check
    _
  $region23: #{_lambda_.9} parent=0 // pred_check_branch
    %22 = sbr.rel (0) target = $region25
  $region24: #{_lambda_.9} parent=0 // pred_region
    _
  $region25: #{_lambda_.9} parent=0 // pred_fallthru
    _
  %v23 = vld [vmem:[%s0] sm:$0xf]
  %v24 = vld [vmem:[%s0 + $0x4] sm:$0xf]
  %v25 = vld [vmem:[%s0 + $0x8] sm:$0xf]
  %v26 = vld [vmem:[%s0 + $0xc] sm:$0xf]
  %v27 = vld [vmem:[%s0 + $0x10] sm:$0xf]
  %v28 = vld [vmem:[%s0 + $0x14] sm:$0xf]
  %v29 = vld [vmem:[%s0 + $0x18] sm:$0xf]
  %v30 = vld [vmem:[%s0 + $0x1c] sm:$0xf]
  %v31 = vld [vmem:[%s0 + $0x20] sm:$0xf]
  %v32 = vld [vmem:[%s0 + $0x24] sm:$0xf]
  %v33 = vld [vmem:[%s0 + $0x28] sm:$0xf]
  %v34 = vld [vmem:[%s0 + $0x2c] sm:$0xf]
  %v35 = vld [vmem:[%s0 + $0x30] sm:$0xf]
  %v36 = vld [vmem:[%s0 + $0x34] sm:$0xf]
  %v37 = vld [vmem:[%s0 + $0x38] sm:$0xf]
  %v38 = vld [vmem:[%s0 + $0x3c] sm:$0xf]
  %v39 = vld [vmem:[%s0 + $0x40] sm:$0xf]
  %v40 = vld [vmem:[%s0 + $0x44] sm:$0xf]
  %v41 = vld [vmem:[%s0 + $0x48] sm:$0xf]
  %v42 = vld [vmem:[%s0 + $0x4c] sm:$0xf]
  %v43 = vld [vmem:[%s0 + $0x50] sm:$0xf]
  %v44 = vld [vmem:[%s0 + $0x54] sm:$0xf]
  %v45 = vld [vmem:[%s0 + $0x58] sm:$0xf]
  %v46 = vld [vmem:[%s0 + $0x5c] sm:$0xf]
  %v47 = vld [vmem:[%s0 + $0x60] sm:$0xf]
  %v48 = vld [vmem:[%s0 + $0x64] sm:$0xf]
  %v49 = vld [vmem:[%s0 + $0x68] sm:$0xf]
  %v50 = vld [vmem:[%s0 + $0x6c] sm:$0xf]
  %v51 = vld [vmem:[%s0 + $0x70] sm:$0xf]
  %v52 = vld [vmem:[%s0 + $0x74] sm:$0xf]
  %v53 = vld [vmem:[%s0 + $0x78] sm:$0xf]
  %v54 = vld [vmem:[%s0 + $0x7c] sm:$0xf]
  %v55 = vld [vmem:[%s0 + $0x80] sm:$0xf]
  %v56 = vld [vmem:[%s0 + $0x84] sm:$0xf]
  %v57 = vld [vmem:[%s0 + $0x88] sm:$0xf]
  %v58 = vld [vmem:[%s0 + $0x8c] sm:$0xf]
  %v59 = vld [vmem:[%s0 + $0x90] sm:$0xf]
  %v60 = vld [vmem:[%s0 + $0x94] sm:$0xf]
  %v61 = vld [vmem:[%s0 + $0x98] sm:$0xf]
  %v62 = vld [vmem:[%s0 + $0x9c] sm:$0xf]
  %v63 = vld [vmem:[%s0 + $0xa0] sm:$0xf]
  %v64 = vld [vmem:[%s0 + $0xa4] sm:$0xf]
  %v65 = vld [vmem:[%s0 + $0xa8] sm:$0xf]
  %v66 = vld [vmem:[%s0 + $0xac] sm:$0xf]
  %v67 = vld [vmem:[%s0 + $0xb0] sm:$0xf]
  %v68 = vld [vmem:[%s0 + $0xb4] sm:$0xf]
  %v69 = vld [vmem:[%s0 + $0xb8] sm:$0xf]
  %v70 = vld [vmem:[%s0 + $0xbc] sm:$0xf]
  %v71 = vld [vmem:[%s0 + $0xc0] sm:$0xf]
  %v72 = vld [vmem:[%s0 + $0xc4] sm:$0xf]
  %v73 = vld [vmem:[%s0 + $0xc8] sm:$0xf]
  %v74 = vld [vmem:[%s0 + $0xcc] sm:$0xf]
  %v75 = vld [vmem:[%s0 + $0xd0] sm:$0xf]
  %v76 = vld [vmem:[%s0 + $0xd4] sm:$0xf]
  %v77 = vld [vmem:[%s0 + $0xd8] sm:$0xf]
  %v78 = vld [vmem:[%s0 + $0xdc] sm:$0xf]
  %v79 = vld [vmem:[%s0 + $0xe0] sm:$0xf]
  %v80 = vld [vmem:[%s0 + $0xe4] sm:$0xf]
  %v81 = vld [vmem:[%s0 + $0xe8] sm:$0xf]
  %v82 = vld [vmem:[%s0 + $0xec] sm:$0xf]
  %v83 = vld [vmem:[%s0 + $0xf0] sm:$0xf]
  %v84 = vld [vmem:[%s0 + $0xf4] sm:$0xf]
  %v85 = vld [vmem:[%s0 + $0xf8] sm:$0xf]
  %v86 = vld [vmem:[%s0 + $0xfc] sm:$0xf]
  %v87 = vunpack.c.l.bf16 %v23
  %v88 = vunpack.c.l.bf16 %v24
  %v89 = vunpack.c.l.bf16 %v25
  %v90 = vunpack.c.l.bf16 %v26
  %v91 = vunpack.c.l.bf16 %v27
  %v92 = vunpack.c.l.bf16 %v28
  %v93 = vunpack.c.l.bf16 %v29
  %v94 = vunpack.c.l.bf16 %v30
  %v95 = vunpack.c.l.bf16 %v31
  %v96 = vunpack.c.l.bf16 %v32
  %v97 = vunpack.c.l.bf16 %v33
  %v98 = vunpack.c.l.bf16 %v34
  %v99 = vunpack.c.l.bf16 %v35
  %v100 = vunpack.c.l.bf16 %v36
  %v101 = vunpack.c.l.bf16 %v37
  %v102 = vunpack.c.l.bf16 %v38
  %v103 = vunpack.c.l.bf16 %v39
  %v104 = vunpack.c.l.bf16 %v40
  %v105 = vunpack.c.l.bf16 %v41
  %v106 = vunpack.c.l.bf16 %v42
  %v107 = vunpack.c.l.bf16 %v43
  %v108 = vunpack.c.l.bf16 %v44
  %v109 = vunpack.c.l.bf16 %v45
  %v110 = vunpack.c.l.bf16 %v46
  %v111 = vunpack.c.l.bf16 %v47
  %v112 = vunpack.c.l.bf16 %v48
  %v113 = vunpack.c.l.bf16 %v49
  %v114 = vunpack.c.l.bf16 %v50
  %v115 = vunpack.c.l.bf16 %v51
  %v116 = vunpack.c.l.bf16 %v52
  %v117 = vunpack.c.l.bf16 %v53
  %v118 = vunpack.c.l.bf16 %v54
  %v119 = vunpack.c.l.bf16 %v55
  %v120 = vunpack.c.l.bf16 %v56
  %v121 = vunpack.c.l.bf16 %v57
  %v122 = vunpack.c.l.bf16 %v58
  %v123 = vunpack.c.l.bf16 %v59
  %v124 = vunpack.c.l.bf16 %v60
  %v125 = vunpack.c.l.bf16 %v61
  %v126 = vunpack.c.l.bf16 %v62
  %v127 = vunpack.c.l.bf16 %v63
  %v128 = vunpack.c.l.bf16 %v64
  %v129 = vunpack.c.l.bf16 %v65
  %v130 = vunpack.c.l.bf16 %v66
  %v131 = vunpack.c.l.bf16 %v67
  %v132 = vunpack.c.l.bf16 %v68
  %v133 = vunpack.c.l.bf16 %v69
  %v134 = vunpack.c.l.bf16 %v70
  %v135 = vunpack.c.l.bf16 %v71
  %v136 = vunpack.c.l.bf16 %v72
  %v137 = vunpack.c.l.bf16 %v73
  %v138 = vunpack.c.l.bf16 %v74
  %v139 = vunpack.c.l.bf16 %v75
  %v140 = vunpack.c.l.bf16 %v76
  %v141 = vunpack.c.l.bf16 %v77
  %v142 = vunpack.c.l.bf16 %v78
  %v143 = vunpack.c.l.bf16 %v79
  %v144 = vunpack.c.l.bf16 %v80
  %v145 = vunpack.c.l.bf16 %v81
  %v146 = vunpack.c.l.bf16 %v82
  %v147 = vunpack.c.l.bf16 %v83
  %v148 = vunpack.c.l.bf16 %v84
  %v149 = vunpack.c.l.bf16 %v85
  %v150 = vunpack.c.l.bf16 %v86
  %v151 = vld [vmem:[%s1] sm:$0x1]
  %v153 = vlaneseq
  %v154 = vshrl.u32 %v153, 7
  %v155 = vsub.s32 0, %v154
  %v156 = vrot.slane %v151, %v155
  %v158 = vmul.f32 %v87, %v156
  %v159 = vmul.f32 %v88, %v156
  %v160 = vmul.f32 %v89, %v156
  %v161 = vmul.f32 %v90, %v156
  %v162 = vmul.f32 %v91, %v156
  %v163 = vmul.f32 %v92, %v156
  %v164 = vmul.f32 %v93, %v156
  %v165 = vmul.f32 %v94, %v156
  %v166 = vmul.f32 %v95, %v156
  %v167 = vmul.f32 %v96, %v156
  %v168 = vmul.f32 %v97, %v156
  %v169 = vmul.f32 %v98, %v156
  %v170 = vmul.f32 %v99, %v156
  %v171 = vmul.f32 %v100, %v156
  %v172 = vmul.f32 %v101, %v156
  %v173 = vmul.f32 %v102, %v156
  %v174 = vmul.f32 %v103, %v156
  %v175 = vmul.f32 %v104, %v156
  %v176 = vmul.f32 %v105, %v156
  %v177 = vmul.f32 %v106, %v156
  %v178 = vmul.f32 %v107, %v156
  %v179 = vmul.f32 %v108, %v156
  %v180 = vmul.f32 %v109, %v156
  %v181 = vmul.f32 %v110, %v156
  %v182 = vmul.f32 %v111, %v156
  %v183 = vmul.f32 %v112, %v156
  %v184 = vmul.f32 %v113, %v156
  %v185 = vmul.f32 %v114, %v156
  %v186 = vmul.f32 %v115, %v156
  %v187 = vmul.f32 %v116, %v156
  %v188 = vmul.f32 %v117, %v156
  %v189 = vmul.f32 %v118, %v156
  %v190 = vmul.f32 %v119, %v156
  %v191 = vmul.f32 %v120, %v156
  %v192 = vmul.f32 %v121, %v156
  %v193 = vmul.f32 %v122, %v156
  %v194 = vmul.f32 %v123, %v156
  %v195 = vmul.f32 %v124, %v156
  %v196 = vmul.f32 %v125, %v156
  %v197 = vmul.f32 %v126, %v156
  %v198 = vmul.f32 %v127, %v156
  %v199 = vmul.f32 %v128, %v156
  %v200 = vmul.f32 %v129, %v156
  %v201 = vmul.f32 %v130, %v156
  %v202 = vmul.f32 %v131, %v156
  %v203 = vmul.f32 %v132, %v156
  %v204 = vmul.f32 %v133, %v156
  %v205 = vmul.f32 %v134, %v156
  %v206 = vmul.f32 %v135, %v156
  %v207 = vmul.f32 %v136, %v156
  %v208 = vmul.f32 %v137, %v156
  %v209 = vmul.f32 %v138, %v156
  %v210 = vmul.f32 %v139, %v156
  %v211 = vmul.f32 %v140, %v156
  %v212 = vmul.f32 %v141, %v156
  %v213 = vmul.f32 %v142, %v156
  %v214 = vmul.f32 %v143, %v156
  %v215 = vmul.f32 %v144, %v156
  %v216 = vmul.f32 %v145, %v156
  %v217 = vmul.f32 %v146, %v156
  %v218 = vmul.f32 %v147, %v156
  %v219 = vmul.f32 %v148, %v156
  %v220 = vmul.f32 %v149, %v156
  %v221 = vmul.f32 %v150, %v156
  %v222 = vld [vmem:[%s2] sm:$0x1]
  %v224 = vlaneseq
  %v225 = vshrl.u32 %v224, 7
  %v226 = vsub.s32 0, %v225
  %v227 = vrot.slane %v222, %v226
  %v229 = vadd.f32 %v158, %v227
  %v230 = vadd.f32 %v159, %v227
  %v231 = vadd.f32 %v160, %v227
  %v232 = vadd.f32 %v161, %v227
  %v233 = vadd.f32 %v162, %v227
  %v234 = vadd.f32 %v163, %v227
  %v235 = vadd.f32 %v164, %v227
  %v236 = vadd.f32 %v165, %v227
  %v237 = vadd.f32 %v166, %v227
  %v238 = vadd.f32 %v167, %v227
  %v239 = vadd.f32 %v168, %v227
  %v240 = vadd.f32 %v169, %v227
  %v241 = vadd.f32 %v170, %v227
  %v242 = vadd.f32 %v171, %v227
  %v243 = vadd.f32 %v172, %v227
  %v244 = vadd.f32 %v173, %v227
  %v245 = vadd.f32 %v174, %v227
  %v246 = vadd.f32 %v175, %v227
  %v247 = vadd.f32 %v176, %v227
  %v248 = vadd.f32 %v177, %v227
  %v249 = vadd.f32 %v178, %v227
  %v250 = vadd.f32 %v179, %v227
  %v251 = vadd.f32 %v180, %v227
  %v252 = vadd.f32 %v181, %v227
  %v253 = vadd.f32 %v182, %v227
  %v254 = vadd.f32 %v183, %v227
  %v255 = vadd.f32 %v184, %v227
  %v256 = vadd.f32 %v185, %v227
  %v257 = vadd.f32 %v186, %v227
  %v258 = vadd.f32 %v187, %v227
  %v259 = vadd.f32 %v188, %v227
  %v260 = vadd.f32 %v189, %v227
  %v261 = vadd.f32 %v190, %v227
  %v262 = vadd.f32 %v191, %v227
  %v263 = vadd.f32 %v192, %v227
  %v264 = vadd.f32 %v193, %v227
  %v265 = vadd.f32 %v194, %v227
  %v266 = vadd.f32 %v195, %v227
  %v267 = vadd.f32 %v196, %v227
  %v268 = vadd.f32 %v197, %v227
  %v269 = vadd.f32 %v198, %v227
  %v270 = vadd.f32 %v199, %v227
  %v271 = vadd.f32 %v200, %v227
  %v272 = vadd.f32 %v201, %v227
  %v273 = vadd.f32 %v202, %v227
  %v274 = vadd.f32 %v203, %v227
  %v275 = vadd.f32 %v204, %v227
  %v276 = vadd.f32 %v205, %v227
  %v277 = vadd.f32 %v206, %v227
  %v278 = vadd.f32 %v207, %v227
  %v279 = vadd.f32 %v208, %v227
  %v280 = vadd.f32 %v209, %v227
  %v281 = vadd.f32 %v210, %v227
  %v282 = vadd.f32 %v211, %v227
  %v283 = vadd.f32 %v212, %v227
  %v284 = vadd.f32 %v213, %v227
  %v285 = vadd.f32 %v214, %v227
  %v286 = vadd.f32 %v215, %v227
  %v287 = vadd.f32 %v216, %v227
  %v288 = vadd.f32 %v217, %v227
  %v289 = vadd.f32 %v218, %v227
  %v290 = vadd.f32 %v219, %v227
  %v291 = vadd.f32 %v220, %v227
  %v292 = vadd.f32 %v221, %v227
  %v293 = vld [vmem:[%s3] sm:$0xf]
  %v294 = vld [vmem:[%s3 + $0x4] sm:$0xf]
  %v295 = vld [vmem:[%s3 + $0x8] sm:$0xf]
  %v296 = vld [vmem:[%s3 + $0xc] sm:$0xf]
  %v297 = vld [vmem:[%s3 + $0x10] sm:$0xf]
  %v298 = vld [vmem:[%s3 + $0x14] sm:$0xf]
  %v299 = vld [vmem:[%s3 + $0x18] sm:$0xf]
  %v300 = vld [vmem:[%s3 + $0x1c] sm:$0xf]
  %v301 = vld [vmem:[%s3 + $0x20] sm:$0xf]
  %v302 = vld [vmem:[%s3 + $0x24] sm:$0xf]
  %v303 = vld [vmem:[%s3 + $0x28] sm:$0xf]
  %v304 = vld [vmem:[%s3 + $0x2c] sm:$0xf]
  %v305 = vld [vmem:[%s3 + $0x30] sm:$0xf]
  %v306 = vld [vmem:[%s3 + $0x34] sm:$0xf]
  %v307 = vld [vmem:[%s3 + $0x38] sm:$0xf]
  %v308 = vld [vmem:[%s3 + $0x3c] sm:$0xf]
  %v309 = vld [vmem:[%s3 + $0x40] sm:$0xf]
  %v310 = vld [vmem:[%s3 + $0x44] sm:$0xf]
  %v311 = vld [vmem:[%s3 + $0x48] sm:$0xf]
  %v312 = vld [vmem:[%s3 + $0x4c] sm:$0xf]
  %v313 = vld [vmem:[%s3 + $0x50] sm:$0xf]
  %v314 = vld [vmem:[%s3 + $0x54] sm:$0xf]
  %v315 = vld [vmem:[%s3 + $0x58] sm:$0xf]
  %v316 = vld [vmem:[%s3 + $0x5c] sm:$0xf]
  %v317 = vld [vmem:[%s3 + $0x60] sm:$0xf]
  %v318 = vld [vmem:[%s3 + $0x64] sm:$0xf]
  %v319 = vld [vmem:[%s3 + $0x68] sm:$0xf]
  %v320 = vld [vmem:[%s3 + $0x6c] sm:$0xf]
  %v321 = vld [vmem:[%s3 + $0x70] sm:$0xf]
  %v322 = vld [vmem:[%s3 + $0x74] sm:$0xf]
  %v323 = vld [vmem:[%s3 + $0x78] sm:$0xf]
  %v324 = vld [vmem:[%s3 + $0x7c] sm:$0xf]
  %v325 = vld [vmem:[%s3 + $0x80] sm:$0xf]
  %v326 = vld [vmem:[%s3 + $0x84] sm:$0xf]
  %v327 = vld [vmem:[%s3 + $0x88] sm:$0xf]
  %v328 = vld [vmem:[%s3 + $0x8c] sm:$0xf]
  %v329 = vld [vmem:[%s3 + $0x90] sm:$0xf]
  %v330 = vld [vmem:[%s3 + $0x94] sm:$0xf]
  %v331 = vld [vmem:[%s3 + $0x98] sm:$0xf]
  %v332 = vld [vmem:[%s3 + $0x9c] sm:$0xf]
  %v333 = vld [vmem:[%s3 + $0xa0] sm:$0xf]
  %v334 = vld [vmem:[%s3 + $0xa4] sm:$0xf]
  %v335 = vld [vmem:[%s3 + $0xa8] sm:$0xf]
  %v336 = vld [vmem:[%s3 + $0xac] sm:$0xf]
  %v337 = vld [vmem:[%s3 + $0xb0] sm:$0xf]
  %v338 = vld [vmem:[%s3 + $0xb4] sm:$0xf]
  %v339 = vld [vmem:[%s3 + $0xb8] sm:$0xf]
  %v340 = vld [vmem:[%s3 + $0xbc] sm:$0xf]
  %v341 = vld [vmem:[%s3 + $0xc0] sm:$0xf]
  %v342 = vld [vmem:[%s3 + $0xc4] sm:$0xf]
  %v343 = vld [vmem:[%s3 + $0xc8] sm:$0xf]
  %v344 = vld [vmem:[%s3 + $0xcc] sm:$0xf]
  %v345 = vld [vmem:[%s3 + $0xd0] sm:$0xf]
  %v346 = vld [vmem:[%s3 + $0xd4] sm:$0xf]
  %v347 = vld [vmem:[%s3 + $0xd8] sm:$0xf]
  %v348 = vld [vmem:[%s3 + $0xdc] sm:$0xf]
  %v349 = vld [vmem:[%s3 + $0xe0] sm:$0xf]
  %v350 = vld [vmem:[%s3 + $0xe4] sm:$0xf]
  %v351 = vld [vmem:[%s3 + $0xe8] sm:$0xf]
  %v352 = vld [vmem:[%s3 + $0xec] sm:$0xf]
  %v353 = vld [vmem:[%s3 + $0xf0] sm:$0xf]
  %v354 = vld [vmem:[%s3 + $0xf4] sm:$0xf]
  %v355 = vld [vmem:[%s3 + $0xf8] sm:$0xf]
  %v356 = vld [vmem:[%s3 + $0xfc] sm:$0xf]
  %v357 = vunpack.c.l.bf16 %v293
  %v358 = vunpack.c.l.bf16 %v294
  %v359 = vunpack.c.l.bf16 %v295
  %v360 = vunpack.c.l.bf16 %v296
  %v361 = vunpack.c.l.bf16 %v297
  %v362 = vunpack.c.l.bf16 %v298
  %v363 = vunpack.c.l.bf16 %v299
  %v364 = vunpack.c.l.bf16 %v300
  %v365 = vunpack.c.l.bf16 %v301
  %v366 = vunpack.c.l.bf16 %v302
  %v367 = vunpack.c.l.bf16 %v303
  %v368 = vunpack.c.l.bf16 %v304
  %v369 = vunpack.c.l.bf16 %v305
  %v370 = vunpack.c.l.bf16 %v306
  %v371 = vunpack.c.l.bf16 %v307
  %v372 = vunpack.c.l.bf16 %v308
  %v373 = vunpack.c.l.bf16 %v309
  %v374 = vunpack.c.l.bf16 %v310
  %v375 = vunpack.c.l.bf16 %v311
  %v376 = vunpack.c.l.bf16 %v312
  %v377 = vunpack.c.l.bf16 %v313
  %v378 = vunpack.c.l.bf16 %v314
  %v379 = vunpack.c.l.bf16 %v315
  %v380 = vunpack.c.l.bf16 %v316
  %v381 = vunpack.c.l.bf16 %v317
  %v382 = vunpack.c.l.bf16 %v318
  %v383 = vunpack.c.l.bf16 %v319
  %v384 = vunpack.c.l.bf16 %v320
  %v385 = vunpack.c.l.bf16 %v321
  %v386 = vunpack.c.l.bf16 %v322
  %v387 = vunpack.c.l.bf16 %v323
  %v388 = vunpack.c.l.bf16 %v324
  %v389 = vunpack.c.l.bf16 %v325
  %v390 = vunpack.c.l.bf16 %v326
  %v391 = vunpack.c.l.bf16 %v327
  %v392 = vunpack.c.l.bf16 %v328
  %v393 = vunpack.c.l.bf16 %v329
  %v394 = vunpack.c.l.bf16 %v330
  %v395 = vunpack.c.l.bf16 %v331
  %v396 = vunpack.c.l.bf16 %v332
  %v397 = vunpack.c.l.bf16 %v333
  %v398 = vunpack.c.l.bf16 %v334
  %v399 = vunpack.c.l.bf16 %v335
  %v400 = vunpack.c.l.bf16 %v336
  %v401 = vunpack.c.l.bf16 %v337
  %v402 = vunpack.c.l.bf16 %v338
  %v403 = vunpack.c.l.bf16 %v339
  %v404 = vunpack.c.l.bf16 %v340
  %v405 = vunpack.c.l.bf16 %v341
  %v406 = vunpack.c.l.bf16 %v342
  %v407 = vunpack.c.l.bf16 %v343
  %v408 = vunpack.c.l.bf16 %v344
  %v409 = vunpack.c.l.bf16 %v345
  %v410 = vunpack.c.l.bf16 %v346
  %v411 = vunpack.c.l.bf16 %v347
  %v412 = vunpack.c.l.bf16 %v348
  %v413 = vunpack.c.l.bf16 %v349
  %v414 = vunpack.c.l.bf16 %v350
  %v415 = vunpack.c.l.bf16 %v351
  %v416 = vunpack.c.l.bf16 %v352
  %v417 = vunpack.c.l.bf16 %v353
  %v418 = vunpack.c.l.bf16 %v354
  %v419 = vunpack.c.l.bf16 %v355
  %v420 = vunpack.c.l.bf16 %v356
  %v421 = vld [vmem:[%s4] sm:$0x1]
  %v423 = vlaneseq
  %v424 = vshrl.u32 %v423, 7
  %v425 = vsub.s32 0, %v424
  %v426 = vrot.slane %v421, %v425
  %v428 = vmul.f32 %v357, %v426
  %v429 = vmul.f32 %v358, %v426
  %v430 = vmul.f32 %v359, %v426
  %v431 = vmul.f32 %v360, %v426
  %v432 = vmul.f32 %v361, %v426
  %v433 = vmul.f32 %v362, %v426
  %v434 = vmul.f32 %v363, %v426
  %v435 = vmul.f32 %v364, %v426
  %v436 = vmul.f32 %v365, %v426
  %v437 = vmul.f32 %v366, %v426
  %v438 = vmul.f32 %v367, %v426
  %v439 = vmul.f32 %v368, %v426
  %v440 = vmul.f32 %v369, %v426
  %v441 = vmul.f32 %v370, %v426
  %v442 = vmul.f32 %v371, %v426
  %v443 = vmul.f32 %v372, %v426
  %v444 = vmul.f32 %v373, %v426
  %v445 = vmul.f32 %v374, %v426
  %v446 = vmul.f32 %v375, %v426
  %v447 = vmul.f32 %v376, %v426
  %v448 = vmul.f32 %v377, %v426
  %v449 = vmul.f32 %v378, %v426
  %v450 = vmul.f32 %v379, %v426
  %v451 = vmul.f32 %v380, %v426
  %v452 = vmul.f32 %v381, %v426
  %v453 = vmul.f32 %v382, %v426
  %v454 = vmul.f32 %v383, %v426
  %v455 = vmul.f32 %v384, %v426
  %v456 = vmul.f32 %v385, %v426
  %v457 = vmul.f32 %v386, %v426
  %v458 = vmul.f32 %v387, %v426
  %v459 = vmul.f32 %v388, %v426
  %v460 = vmul.f32 %v389, %v426
  %v461 = vmul.f32 %v390, %v426
  %v462 = vmul.f32 %v391, %v426
  %v463 = vmul.f32 %v392, %v426
  %v464 = vmul.f32 %v393, %v426
  %v465 = vmul.f32 %v394, %v426
  %v466 = vmul.f32 %v395, %v426
  %v467 = vmul.f32 %v396, %v426
  %v468 = vmul.f32 %v397, %v426
  %v469 = vmul.f32 %v398, %v426
  %v470 = vmul.f32 %v399, %v426
  %v471 = vmul.f32 %v400, %v426
  %v472 = vmul.f32 %v401, %v426
  %v473 = vmul.f32 %v402, %v426
  %v474 = vmul.f32 %v403, %v426
  %v475 = vmul.f32 %v404, %v426
  %v476 = vmul.f32 %v405, %v426
  %v477 = vmul.f32 %v406, %v426
  %v478 = vmul.f32 %v407, %v426
  %v479 = vmul.f32 %v408, %v426
  %v480 = vmul.f32 %v409, %v426
  %v481 = vmul.f32 %v410, %v426
  %v482 = vmul.f32 %v411, %v426
  %v483 = vmul.f32 %v412, %v426
  %v484 = vmul.f32 %v413, %v426
  %v485 = vmul.f32 %v414, %v426
  %v486 = vmul.f32 %v415, %v426
  %v487 = vmul.f32 %v416, %v426
  %v488 = vmul.f32 %v417, %v426
  %v489 = vmul.f32 %v418, %v426
  %v490 = vmul.f32 %v419, %v426
  %v491 = vmul.f32 %v420, %v426
  %v492 = vld [vmem:[%s5] sm:$0x1]
  %v494 = vlaneseq
  %v495 = vshrl.u32 %v494, 7
  %v496 = vsub.s32 0, %v495
  %v497 = vrot.slane %v492, %v496
  %v499 = vadd.f32 %v428, %v497
  %v500 = vadd.f32 %v429, %v497
  %v501 = vadd.f32 %v430, %v497
  %v502 = vadd.f32 %v431, %v497
  %v503 = vadd.f32 %v432, %v497
  %v504 = vadd.f32 %v433, %v497
  %v505 = vadd.f32 %v434, %v497
  %v506 = vadd.f32 %v435, %v497
  %v507 = vadd.f32 %v436, %v497
  %v508 = vadd.f32 %v437, %v497
  %v509 = vadd.f32 %v438, %v497
  %v510 = vadd.f32 %v439, %v497
  %v511 = vadd.f32 %v440, %v497
  %v512 = vadd.f32 %v441, %v497
  %v513 = vadd.f32 %v442, %v497
  %v514 = vadd.f32 %v443, %v497
  %v515 = vadd.f32 %v444, %v497
  %v516 = vadd.f32 %v445, %v497
  %v517 = vadd.f32 %v446, %v497
  %v518 = vadd.f32 %v447, %v497
  %v519 = vadd.f32 %v448, %v497
  %v520 = vadd.f32 %v449, %v497
  %v521 = vadd.f32 %v450, %v497
  %v522 = vadd.f32 %v451, %v497
  %v523 = vadd.f32 %v452, %v497
  %v524 = vadd.f32 %v453, %v497
  %v525 = vadd.f32 %v454, %v497
  %v526 = vadd.f32 %v455, %v497
  %v527 = vadd.f32 %v456, %v497
  %v528 = vadd.f32 %v457, %v497
  %v529 = vadd.f32 %v458, %v497
  %v530 = vadd.f32 %v459, %v497
  %v531 = vadd.f32 %v460, %v497
  %v532 = vadd.f32 %v461, %v497
  %v533 = vadd.f32 %v462, %v497
  %v534 = vadd.f32 %v463, %v497
  %v535 = vadd.f32 %v464, %v497
  %v536 = vadd.f32 %v465, %v497
  %v537 = vadd.f32 %v466, %v497
  %v538 = vadd.f32 %v467, %v497
  %v539 = vadd.f32 %v468, %v497
  %v540 = vadd.f32 %v469, %v497
  %v541 = vadd.f32 %v470, %v497
  %v542 = vadd.f32 %v471, %v497
  %v543 = vadd.f32 %v472, %v497
  %v544 = vadd.f32 %v473, %v497
  %v545 = vadd.f32 %v474, %v497
  %v546 = vadd.f32 %v475, %v497
  %v547 = vadd.f32 %v476, %v497
  %v548 = vadd.f32 %v477, %v497
  %v549 = vadd.f32 %v478, %v497
  %v550 = vadd.f32 %v479, %v497
  %v551 = vadd.f32 %v480, %v497
  %v552 = vadd.f32 %v481, %v497
  %v553 = vadd.f32 %v482, %v497
  %v554 = vadd.f32 %v483, %v497
  %v555 = vadd.f32 %v484, %v497
  %v556 = vadd.f32 %v485, %v497
  %v557 = vadd.f32 %v486, %v497
  %v558 = vadd.f32 %v487, %v497
  %v559 = vadd.f32 %v488, %v497
  %v560 = vadd.f32 %v489, %v497
  %v561 = vadd.f32 %v490, %v497
  %v562 = vadd.f32 %v491, %v497
  %v563 = vadd.f32 %v229, %v499
  %v564 = vadd.f32 %v230, %v500
  %v565 = vadd.f32 %v231, %v501
  %v566 = vadd.f32 %v232, %v502
  %v567 = vadd.f32 %v233, %v503
  %v568 = vadd.f32 %v234, %v504
  %v569 = vadd.f32 %v235, %v505
  %v570 = vadd.f32 %v236, %v506
  %v571 = vadd.f32 %v237, %v507
  %v572 = vadd.f32 %v238, %v508
  %v573 = vadd.f32 %v239, %v509
  %v574 = vadd.f32 %v240, %v510
  %v575 = vadd.f32 %v241, %v511
  %v576 = vadd.f32 %v242, %v512
  %v577 = vadd.f32 %v243, %v513
  %v578 = vadd.f32 %v244, %v514
  %v579 = vadd.f32 %v245, %v515
  %v580 = vadd.f32 %v246, %v516
  %v581 = vadd.f32 %v247, %v517
  %v582 = vadd.f32 %v248, %v518
  %v583 = vadd.f32 %v249, %v519
  %v584 = vadd.f32 %v250, %v520
  %v585 = vadd.f32 %v251, %v521
  %v586 = vadd.f32 %v252, %v522
  %v587 = vadd.f32 %v253, %v523
  %v588 = vadd.f32 %v254, %v524
  %v589 = vadd.f32 %v255, %v525
  %v590 = vadd.f32 %v256, %v526
  %v591 = vadd.f32 %v257, %v527
  %v592 = vadd.f32 %v258, %v528
  %v593 = vadd.f32 %v259, %v529
  %v594 = vadd.f32 %v260, %v530
  %v595 = vadd.f32 %v261, %v531
  %v596 = vadd.f32 %v262, %v532
  %v597 = vadd.f32 %v263, %v533
  %v598 = vadd.f32 %v264, %v534
  %v599 = vadd.f32 %v265, %v535
  %v600 = vadd.f32 %v266, %v536
  %v601 = vadd.f32 %v267, %v537
  %v602 = vadd.f32 %v268, %v538
  %v603 = vadd.f32 %v269, %v539
  %v604 = vadd.f32 %v270, %v540
  %v605 = vadd.f32 %v271, %v541
  %v606 = vadd.f32 %v272, %v542
  %v607 = vadd.f32 %v273, %v543
  %v608 = vadd.f32 %v274, %v544
  %v609 = vadd.f32 %v275, %v545
  %v610 = vadd.f32 %v276, %v546
  %v611 = vadd.f32 %v277, %v547
  %v612 = vadd.f32 %v278, %v548
  %v613 = vadd.f32 %v279, %v549
  %v614 = vadd.f32 %v280, %v550
  %v615 = vadd.f32 %v281, %v551
  %v616 = vadd.f32 %v282, %v552
  %v617 = vadd.f32 %v283, %v553
  %v618 = vadd.f32 %v284, %v554
  %v619 = vadd.f32 %v285, %v555
  %v620 = vadd.f32 %v286, %v556
  %v621 = vadd.f32 %v287, %v557
  %v622 = vadd.f32 %v288, %v558
  %v623 = vadd.f32 %v289, %v559
  %v624 = vadd.f32 %v290, %v560
  %v625 = vadd.f32 %v291, %v561
  %v626 = vadd.f32 %v292, %v562
  %v627 = vmax.f32 %v563, 0.0
  %v628 = vmax.f32 %v564, 0.0
  %v629 = vmax.f32 %v565, 0.0
  %v630 = vmax.f32 %v566, 0.0
  %v631 = vmax.f32 %v567, 0.0
  %v632 = vmax.f32 %v568, 0.0
  %v633 = vmax.f32 %v569, 0.0
  %v634 = vmax.f32 %v570, 0.0
  %v635 = vmax.f32 %v571, 0.0
  %v636 = vmax.f32 %v572, 0.0
  %v637 = vmax.f32 %v573, 0.0
  %v638 = vmax.f32 %v574, 0.0
  %v639 = vmax.f32 %v575, 0.0
  %v640 = vmax.f32 %v576, 0.0
  %v641 = vmax.f32 %v577, 0.0
  %v642 = vmax.f32 %v578, 0.0
  %v643 = vmax.f32 %v579, 0.0
  %v644 = vmax.f32 %v580, 0.0
  %v645 = vmax.f32 %v581, 0.0
  %v646 = vmax.f32 %v582, 0.0
  %v647 = vmax.f32 %v583, 0.0
  %v648 = vmax.f32 %v584, 0.0
  %v649 = vmax.f32 %v585, 0.0
  %v650 = vmax.f32 %v586, 0.0
  %v651 = vmax.f32 %v587, 0.0
  %v652 = vmax.f32 %v588, 0.0
  %v653 = vmax.f32 %v589, 0.0
  %v654 = vmax.f32 %v590, 0.0
  %v655 = vmax.f32 %v591, 0.0
  %v656 = vmax.f32 %v592, 0.0
  %v657 = vmax.f32 %v593, 0.0
  %v658 = vmax.f32 %v594, 0.0
  %v659 = vmax.f32 %v595, 0.0
  %v660 = vmax.f32 %v596, 0.0
  %v661 = vmax.f32 %v597, 0.0
  %v662 = vmax.f32 %v598, 0.0
  %v663 = vmax.f32 %v599, 0.0
  %v664 = vmax.f32 %v600, 0.0
  %v665 = vmax.f32 %v601, 0.0
  %v666 = vmax.f32 %v602, 0.0
  %v667 = vmax.f32 %v603, 0.0
  %v668 = vmax.f32 %v604, 0.0
  %v669 = vmax.f32 %v605, 0.0
  %v670 = vmax.f32 %v606, 0.0
  %v671 = vmax.f32 %v607, 0.0
  %v672 = vmax.f32 %v608, 0.0
  %v673 = vmax.f32 %v609, 0.0
  %v674 = vmax.f32 %v610, 0.0
  %v675 = vmax.f32 %v611, 0.0
  %v676 = vmax.f32 %v612, 0.0
  %v677 = vmax.f32 %v613, 0.0
  %v678 = vmax.f32 %v614, 0.0
  %v679 = vmax.f32 %v615, 0.0
  %v680 = vmax.f32 %v616, 0.0
  %v681 = vmax.f32 %v617, 0.0
  %v682 = vmax.f32 %v618, 0.0
  %v683 = vmax.f32 %v619, 0.0
  %v684 = vmax.f32 %v620, 0.0
  %v685 = vmax.f32 %v621, 0.0
  %v686 = vmax.f32 %v622, 0.0
  %v687 = vmax.f32 %v623, 0.0
  %v688 = vmax.f32 %v624, 0.0
  %v689 = vmax.f32 %v625, 0.0
  %v690 = vmax.f32 %v626, 0.0
  %691 = vst [vmem:[%s6] sm:$0xff] %v627
  %692 = vst [vmem:[%s6 + $0x8] sm:$0xff] %v628
  %693 = vst [vmem:[%s6 + $0x10] sm:$0xff] %v629
  %694 = vst [vmem:[%s6 + $0x18] sm:$0xff] %v630
  %695 = vst [vmem:[%s6 + $0x20] sm:$0xff] %v631
  %696 = vst [vmem:[%s6 + $0x28] sm:$0xff] %v632
  %697 = vst [vmem:[%s6 + $0x30] sm:$0xff] %v633
  %698 = vst [vmem:[%s6 + $0x38] sm:$0xff] %v634
  %699 = vst [vmem:[%s6 + $0x40] sm:$0xff] %v635
  %700 = vst [vmem:[%s6 + $0x48] sm:$0xff] %v636
  %701 = vst [vmem:[%s6 + $0x50] sm:$0xff] %v637
  %702 = vst [vmem:[%s6 + $0x58] sm:$0xff] %v638
  %703 = vst [vmem:[%s6 + $0x60] sm:$0xff] %v639
  %704 = vst [vmem:[%s6 + $0x68] sm:$0xff] %v640
  %705 = vst [vmem:[%s6 + $0x70] sm:$0xff] %v641
  %706 = vst [vmem:[%s6 + $0x78] sm:$0xff] %v642
  %707 = vst [vmem:[%s6 + $0x80] sm:$0xff] %v643
  %708 = vst [vmem:[%s6 + $0x88] sm:$0xff] %v644
  %709 = vst [vmem:[%s6 + $0x90] sm:$0xff] %v645
  %710 = vst [vmem:[%s6 + $0x98] sm:$0xff] %v646
  %711 = vst [vmem:[%s6 + $0xa0] sm:$0xff] %v647
  %712 = vst [vmem:[%s6 + $0xa8] sm:$0xff] %v648
  %713 = vst [vmem:[%s6 + $0xb0] sm:$0xff] %v649
  %714 = vst [vmem:[%s6 + $0xb8] sm:$0xff] %v650
  %715 = vst [vmem:[%s6 + $0xc0] sm:$0xff] %v651
  %716 = vst [vmem:[%s6 + $0xc8] sm:$0xff] %v652
  %717 = vst [vmem:[%s6 + $0xd0] sm:$0xff] %v653
  %718 = vst [vmem:[%s6 + $0xd8] sm:$0xff] %v654
  %719 = vst [vmem:[%s6 + $0xe0] sm:$0xff] %v655
  %720 = vst [vmem:[%s6 + $0xe8] sm:$0xff] %v656
  %721 = vst [vmem:[%s6 + $0xf0] sm:$0xff] %v657
  %722 = vst [vmem:[%s6 + $0xf8] sm:$0xff] %v658
  %723 = vst [vmem:[%s6 + $0x100] sm:$0xff] %v659
  %724 = vst [vmem:[%s6 + $0x108] sm:$0xff] %v660
  %725 = vst [vmem:[%s6 + $0x110] sm:$0xff] %v661
  %726 = vst [vmem:[%s6 + $0x118] sm:$0xff] %v662
  %727 = vst [vmem:[%s6 + $0x120] sm:$0xff] %v663
  %728 = vst [vmem:[%s6 + $0x128] sm:$0xff] %v664
  %729 = vst [vmem:[%s6 + $0x130] sm:$0xff] %v665
  %730 = vst [vmem:[%s6 + $0x138] sm:$0xff] %v666
  %731 = vst [vmem:[%s6 + $0x140] sm:$0xff] %v667
  %732 = vst [vmem:[%s6 + $0x148] sm:$0xff] %v668
  %733 = vst [vmem:[%s6 + $0x150] sm:$0xff] %v669
  %734 = vst [vmem:[%s6 + $0x158] sm:$0xff] %v670
  %735 = vst [vmem:[%s6 + $0x160] sm:$0xff] %v671
  %736 = vst [vmem:[%s6 + $0x168] sm:$0xff] %v672
  %737 = vst [vmem:[%s6 + $0x170] sm:$0xff] %v673
  %738 = vst [vmem:[%s6 + $0x178] sm:$0xff] %v674
  %739 = vst [vmem:[%s6 + $0x180] sm:$0xff] %v675
  %740 = vst [vmem:[%s6 + $0x188] sm:$0xff] %v676
  %741 = vst [vmem:[%s6 + $0x190] sm:$0xff] %v677
  %742 = vst [vmem:[%s6 + $0x198] sm:$0xff] %v678
  %743 = vst [vmem:[%s6 + $0x1a0] sm:$0xff] %v679
  %744 = vst [vmem:[%s6 + $0x1a8] sm:$0xff] %v680
  %745 = vst [vmem:[%s6 + $0x1b0] sm:$0xff] %v681
  %746 = vst [vmem:[%s6 + $0x1b8] sm:$0xff] %v682
  %747 = vst [vmem:[%s6 + $0x1c0] sm:$0xff] %v683
  %748 = vst [vmem:[%s6 + $0x1c8] sm:$0xff] %v684
  %749 = vst [vmem:[%s6 + $0x1d0] sm:$0xff] %v685
  %750 = vst [vmem:[%s6 + $0x1d8] sm:$0xff] %v686
  %751 = vst [vmem:[%s6 + $0x1e0] sm:$0xff] %v687
  %752 = vst [vmem:[%s6 + $0x1e8] sm:$0xff] %v688
  %753 = vst [vmem:[%s6 + $0x1f0] sm:$0xff] %v689
  %754 = vst [vmem:[%s6 + $0x1f8] sm:$0xff] %v690
  // Predicated region
  $region26: #{_lambda_.9} parent=0 // pred_check
    _
  $region27: #{_lambda_.9} parent=0 // pred_check_branch
    %756 = sbr.rel (0) target = $region29
  $region28: #{_lambda_.9} parent=0 // pred_region
    _
  $region29: #{_lambda_.9} parent=0 // pred_fallthru
    _
  // Predicated region
  $region30: #{_lambda_.9} parent=0 // pred_check
    _
  $region31: #{_lambda_.9} parent=0 // pred_check_branch
    %758 = sbr.rel (0) target = $region33
  $region32: #{_lambda_.9} parent=0 // pred_region
    _
  $region33: #{_lambda_.9} parent=0 // pred_fallthru
    _

// kernel: _lambda_.5
$region0: #{_lambda_.5}
  #allocation0 [shape = 'u32[]', space=smem, size = 0x4, offset = 0x4, fixed_abs, tag = 'smem constant byte address 0x4 - core index']
  #allocation1 [shape = 'u32[144,128]{1,0:T(1,128)}', space=vmem, size = 0x12000, scoped, tag = 'internal scratch']
  %s0 = inlined_call_operand.vmem [shape: bf16[512,128], index: 0, kind: input, shape index: {}]
  %s1 = inlined_call_operand.vmem [shape: bf16[128,128], index: 1, kind: input, shape index: {}]
  %s2 = inlined_call_operand.vmem [shape: f32[1,128], index: 2, kind: input, shape index: {}]
  %s3 = inlined_call_operand.vmem [shape: bf16[512,128], index: 3, kind: output, shape index: {0}]
  %s4 = inlined_call_operand.vmem [shape: f32[1,2,128], index: 4, kind: output, shape index: {1}]
  %5 = xla_tuple %s3, %s4
  %s6 = sld [smem:[#allocation0]]
  $region30: #{_lambda_.5} parent=0
    _
  %s8 = ssub.s32 1, %s6
  %s9 = scalar_select 0, %s8, %s6
  // Predicated region
  $region2: #{_lambda_.5} parent=0 // pred_check
    _
  $region3: #{_lambda_.5} parent=0 // pred_check_branch
    %11 = sbr.rel (0) target = $region5
  $region4: #{_lambda_.5} parent=0 // pred_region
    _
  $region5: #{_lambda_.5} parent=0 // pred_fallthru
    _
  // Predicated region
  $region6: #{_lambda_.5} parent=0 // pred_check
    _
  $region7: #{_lambda_.5} parent=0 // pred_check_branch
    %13 = sbr.rel (0) target = $region9
  $region8: #{_lambda_.5} parent=0 // pred_region
    _
  $region9: #{_lambda_.5} parent=0 // pred_fallthru
    _
  // Predicated region
  $region10: #{_lambda_.5} parent=0 // pred_check
    _
  $region11: #{_lambda_.5} parent=0 // pred_check_branch
    %15 = sbr.rel (0) target = $region13
  $region12: #{_lambda_.5} parent=0 // pred_region
    _
  $region13: #{_lambda_.5} parent=0 // pred_fallthru
    _
  %v17 = vld [vmem:[%s0] sm:$0xf]
  %v18 = vld [vmem:[%s0 + $0x4] sm:$0xf]
  %v19 = vld [vmem:[%s0 + $0x8] sm:$0xf]
  %v20 = vld [vmem:[%s0 + $0xc] sm:$0xf]
  %v21 = vld [vmem:[%s0 + $0x10] sm:$0xf]
  %v22 = vld [vmem:[%s0 + $0x14] sm:$0xf]
  %v23 = vld [vmem:[%s0 + $0x18] sm:$0xf]
  %v24 = vld [vmem:[%s0 + $0x1c] sm:$0xf]
  %v25 = vld [vmem:[%s0 + $0x20] sm:$0xf]
  %v26 = vld [vmem:[%s0 + $0x24] sm:$0xf]
  %v27 = vld [vmem:[%s0 + $0x28] sm:$0xf]
  %v28 = vld [vmem:[%s0 + $0x2c] sm:$0xf]
  %v29 = vld [vmem:[%s0 + $0x30] sm:$0xf]
  %v30 = vld [vmem:[%s0 + $0x34] sm:$0xf]
  %v31 = vld [vmem:[%s0 + $0x38] sm:$0xf]
  %v32 = vld [vmem:[%s0 + $0x3c] sm:$0xf]
  %v33 = vld [vmem:[%s0 + $0x40] sm:$0xf]
  %v34 = vld [vmem:[%s0 + $0x44] sm:$0xf]
  %v35 = vld [vmem:[%s0 + $0x48] sm:$0xf]
  %v36 = vld [vmem:[%s0 + $0x4c] sm:$0xf]
  %v37 = vld [vmem:[%s0 + $0x50] sm:$0xf]
  %v38 = vld [vmem:[%s0 + $0x54] sm:$0xf]
  %v39 = vld [vmem:[%s0 + $0x58] sm:$0xf]
  %v40 = vld [vmem:[%s0 + $0x5c] sm:$0xf]
  %v41 = vld [vmem:[%s0 + $0x60] sm:$0xf]
  %v42 = vld [vmem:[%s0 + $0x64] sm:$0xf]
  %v43 = vld [vmem:[%s0 + $0x68] sm:$0xf]
  %v44 = vld [vmem:[%s0 + $0x6c] sm:$0xf]
  %v45 = vld [vmem:[%s0 + $0x70] sm:$0xf]
  %v46 = vld [vmem:[%s0 + $0x74] sm:$0xf]
  %v47 = vld [vmem:[%s0 + $0x78] sm:$0xf]
  %v48 = vld [vmem:[%s0 + $0x7c] sm:$0xf]
  %v49 = vld [vmem:[%s0 + $0x80] sm:$0xf]
  %v50 = vld [vmem:[%s0 + $0x84] sm:$0xf]
  %v51 = vld [vmem:[%s0 + $0x88] sm:$0xf]
  %v52 = vld [vmem:[%s0 + $0x8c] sm:$0xf]
  %v53 = vld [vmem:[%s0 + $0x90] sm:$0xf]
  %v54 = vld [vmem:[%s0 + $0x94] sm:$0xf]
  %v55 = vld [vmem:[%s0 + $0x98] sm:$0xf]
  %v56 = vld [vmem:[%s0 + $0x9c] sm:$0xf]
  %v57 = vld [vmem:[%s0 + $0xa0] sm:$0xf]
  %v58 = vld [vmem:[%s0 + $0xa4] sm:$0xf]
  %v59 = vld [vmem:[%s0 + $0xa8] sm:$0xf]
  %v60 = vld [vmem:[%s0 + $0xac] sm:$0xf]
  %v61 = vld [vmem:[%s0 + $0xb0] sm:$0xf]
  %v62 = vld [vmem:[%s0 + $0xb4] sm:$0xf]
  %v63 = vld [vmem:[%s0 + $0xb8] sm:$0xf]
  %v64 = vld [vmem:[%s0 + $0xbc] sm:$0xf]
  %v65 = vld [vmem:[%s0 + $0xc0] sm:$0xf]
  %v66 = vld [vmem:[%s0 + $0xc4] sm:$0xf]
  %v67 = vld [vmem:[%s0 + $0xc8] sm:$0xf]
  %v68 = vld [vmem:[%s0 + $0xcc] sm:$0xf]
  %v69 = vld [vmem:[%s0 + $0xd0] sm:$0xf]
  %v70 = vld [vmem:[%s0 + $0xd4] sm:$0xf]
  %v71 = vld [vmem:[%s0 + $0xd8] sm:$0xf]
  %v72 = vld [vmem:[%s0 + $0xdc] sm:$0xf]
  %v73 = vld [vmem:[%s0 + $0xe0] sm:$0xf]
  %v74 = vld [vmem:[%s0 + $0xe4] sm:$0xf]
  %v75 = vld [vmem:[%s0 + $0xe8] sm:$0xf]
  %v76 = vld [vmem:[%s0 + $0xec] sm:$0xf]
  %v77 = vld [vmem:[%s0 + $0xf0] sm:$0xf]
  %v78 = vld [vmem:[%s0 + $0xf4] sm:$0xf]
  %v79 = vld [vmem:[%s0 + $0xf8] sm:$0xf]
  %v80 = vld [vmem:[%s0 + $0xfc] sm:$0xf]
  %v81 = vld [vmem:[%s1] sm:$0xf]
  %v82 = vld [vmem:[%s1 + $0x4] sm:$0xf]
  %v83 = vld [vmem:[%s1 + $0x8] sm:$0xf]
  %v84 = vld [vmem:[%s1 + $0xc] sm:$0xf]
  %v85 = vld [vmem:[%s1 + $0x10] sm:$0xf]
  %v86 = vld [vmem:[%s1 + $0x14] sm:$0xf]
  %v87 = vld [vmem:[%s1 + $0x18] sm:$0xf]
  %v88 = vld [vmem:[%s1 + $0x1c] sm:$0xf]
  %v89 = vld [vmem:[%s1 + $0x20] sm:$0xf]
  %v90 = vld [vmem:[%s1 + $0x24] sm:$0xf]
  %v91 = vld [vmem:[%s1 + $0x28] sm:$0xf]
  %v92 = vld [vmem:[%s1 + $0x2c] sm:$0xf]
  %v93 = vld [vmem:[%s1 + $0x30] sm:$0xf]
  %v94 = vld [vmem:[%s1 + $0x34] sm:$0xf]
  %v95 = vld [vmem:[%s1 + $0x38] sm:$0xf]
  %v96 = vld [vmem:[%s1 + $0x3c] sm:$0xf]
  %v97 = vld [vmem:[%s2] sm:$0x1]
  %v99 = vlaneseq
  %v100 = vshrl.u32 %v99, 7
  %v101 = vsub.s32 0, %v100
  %v102 = vrot.slane %v97, %v101
  %v168 = vunpack.c.l.b16 %v17
  %v169 = vunpack.c.l.b16 %v18
  %v170 = vunpack.c.l.b16 %v19
  %v171 = vunpack.c.l.b16 %v20
  %v172 = vunpack.c.l.b16 %v21
  %v173 = vunpack.c.l.b16 %v22
  %v174 = vunpack.c.l.b16 %v23
  %v175 = vunpack.c.l.b16 %v24
  %v176 = vunpack.c.l.b16 %v25
  %v177 = vunpack.c.l.b16 %v26
  %v178 = vunpack.c.l.b16 %v27
  %v179 = vunpack.c.l.b16 %v28
  %v180 = vunpack.c.l.b16 %v29
  %v181 = vunpack.c.l.b16 %v30
  %v182 = vunpack.c.l.b16 %v31
  %v183 = vunpack.c.l.b16 %v32
  %v184 = vunpack.c.l.b16 %v33
  %v185 = vunpack.c.l.b16 %v34
  %v186 = vunpack.c.l.b16 %v35
  %v187 = vunpack.c.l.b16 %v36
  %v188 = vunpack.c.l.b16 %v37
  %v189 = vunpack.c.l.b16 %v38
  %v190 = vunpack.c.l.b16 %v39
  %v191 = vunpack.c.l.b16 %v40
  %v192 = vunpack.c.l.b16 %v41
  %v193 = vunpack.c.l.b16 %v42
  %v194 = vunpack.c.l.b16 %v43
  %v195 = vunpack.c.l.b16 %v44
  %v196 = vunpack.c.l.b16 %v45
  %v197 = vunpack.c.l.b16 %v46
  %v198 = vunpack.c.l.b16 %v47
  %v199 = vunpack.c.l.b16 %v48
  %v200 = vunpack.c.l.b16 %v49
  %v201 = vunpack.c.l.b16 %v50
  %v202 = vunpack.c.l.b16 %v51
  %v203 = vunpack.c.l.b16 %v52
  %v204 = vunpack.c.l.b16 %v53
  %v205 = vunpack.c.l.b16 %v54
  %v206 = vunpack.c.l.b16 %v55
  %v207 = vunpack.c.l.b16 %v56
  %v208 = vunpack.c.l.b16 %v57
  %v209 = vunpack.c.l.b16 %v58
  %v210 = vunpack.c.l.b16 %v59
  %v211 = vunpack.c.l.b16 %v60
  %v212 = vunpack.c.l.b16 %v61
  %v213 = vunpack.c.l.b16 %v62
  %v214 = vunpack.c.l.b16 %v63
  %v215 = vunpack.c.l.b16 %v64
  %v216 = vunpack.c.l.b16 %v65
  %v217 = vunpack.c.l.b16 %v66
  %v218 = vunpack.c.l.b16 %v67
  %v219 = vunpack.c.l.b16 %v68
  %v220 = vunpack.c.l.b16 %v69
  %v221 = vunpack.c.l.b16 %v70
  %v222 = vunpack.c.l.b16 %v71
  %v223 = vunpack.c.l.b16 %v72
  %v224 = vunpack.c.l.b16 %v73
  %v225 = vunpack.c.l.b16 %v74
  %v226 = vunpack.c.l.b16 %v75
  %v227 = vunpack.c.l.b16 %v76
  %v228 = vunpack.c.l.b16 %v77
  %v229 = vunpack.c.l.b16 %v78
  %v230 = vunpack.c.l.b16 %v79
  %v231 = vunpack.c.l.b16 %v80
  %v232 = vpack.c.b16 %v169, %v168
  %v233 = vpack.c.b16 %v171, %v170
  %v234 = vpack.c.b16 %v173, %v172
  %v235 = vpack.c.b16 %v175, %v174
  %v236 = vpack.c.b16 %v177, %v176
  %v237 = vpack.c.b16 %v179, %v178
  %v238 = vpack.c.b16 %v181, %v180
  %v239 = vpack.c.b16 %v183, %v182
  %v240 = vpack.c.b16 %v185, %v184
  %v241 = vpack.c.b16 %v187, %v186
  %v242 = vpack.c.b16 %v189, %v188
  %v243 = vpack.c.b16 %v191, %v190
  %v244 = vpack.c.b16 %v193, %v192
  %v245 = vpack.c.b16 %v195, %v194
  %v246 = vpack.c.b16 %v197, %v196
  %v247 = vpack.c.b16 %v199, %v198
  %v248 = vpack.c.b16 %v201, %v200
  %v249 = vpack.c.b16 %v203, %v202
  %v250 = vpack.c.b16 %v205, %v204
  %v251 = vpack.c.b16 %v207, %v206
  %v252 = vpack.c.b16 %v209, %v208
  %v253 = vpack.c.b16 %v211, %v210
  %v254 = vpack.c.b16 %v213, %v212
  %v255 = vpack.c.b16 %v215, %v214
  %v256 = vpack.c.b16 %v217, %v216
  %v257 = vpack.c.b16 %v219, %v218
  %v258 = vpack.c.b16 %v221, %v220
  %v259 = vpack.c.b16 %v223, %v222
  %v260 = vpack.c.b16 %v225, %v224
  %v261 = vpack.c.b16 %v227, %v226
  %v262 = vpack.c.b16 %v229, %v228
  %v263 = vpack.c.b16 %v231, %v230
  %v312 = vunpack.c.l.b16 %v81
  %v313 = vunpack.c.l.b16 %v82
  %v314 = vunpack.c.l.b16 %v83
  %v315 = vunpack.c.l.b16 %v84
  %v316 = vunpack.c.l.b16 %v85
  %v317 = vunpack.c.l.b16 %v86
  %v318 = vunpack.c.l.b16 %v87
  %v319 = vunpack.c.l.b16 %v88
  %v320 = vunpack.c.l.b16 %v89
  %v321 = vunpack.c.l.b16 %v90
  %v322 = vunpack.c.l.b16 %v91
  %v323 = vunpack.c.l.b16 %v92
  %v324 = vunpack.c.l.b16 %v93
  %v325 = vunpack.c.l.b16 %v94
  %v326 = vunpack.c.l.b16 %v95
  %v327 = vunpack.c.l.b16 %v96
  %v328 = vpack.c.b16 %v313, %v312
  %v329 = vpack.c.b16 %v315, %v314
  %v330 = vpack.c.b16 %v317, %v316
  %v331 = vpack.c.b16 %v319, %v318
  %v332 = vpack.c.b16 %v321, %v320
  %v333 = vpack.c.b16 %v323, %v322
  %v334 = vpack.c.b16 %v325, %v324
  %v335 = vpack.c.b16 %v327, %v326
  %344 = vmatprep.subr.bf16.mxu0 0
  %345 = vmatpush1.bf16.msra.mxu0 %v328
  %346 = vmatprep.subr.bf16.mxu0 0
  %347 = vmatpush1.bf16.msra.mxu0 %v329
  %348 = vmatprep.subr.bf16.mxu0 0
  %349 = vmatpush1.bf16.msra.mxu0 %v330
  %350 = vmatprep.subr.bf16.mxu0 0
  %351 = vmatpush1.bf16.msra.mxu0 %v331
  %352 = vmatprep.subr.bf16.mxu0 0
  %353 = vmatpush1.bf16.msra.mxu0 %v332
  %354 = vmatprep.subr.bf16.mxu0 0
  %355 = vmatpush1.bf16.msra.mxu0 %v333
  %356 = vmatprep.subr.bf16.mxu0 0
  %357 = vmatpush1.bf16.msra.mxu0 %v334
  %358 = vmatprep.subr.bf16.mxu0 0
  %359 = vmatpush1.bf16.msra.mxu0 %v335
  %360 = vmatprep.subr.bf16.mxu0 0
  %361 = vmatpush1.bf16.msra.mxu0 0
  %362 = vmatprep.subr.bf16.mxu0 0
  %363 = vmatpush1.bf16.msra.mxu0 0
  %364 = vmatprep.subr.bf16.mxu0 0
  %365 = vmatpush1.bf16.msra.mxu0 0
  %366 = vmatprep.subr.bf16.mxu0 0
  %367 = vmatpush1.bf16.msra.mxu0 0
  %368 = vmatprep.subr.bf16.mxu0 0
  %369 = vmatpush1.bf16.msra.mxu0 0
  %370 = vmatprep.subr.bf16.mxu0 0
  %371 = vmatpush1.bf16.msra.mxu0 0
  %372 = vmatprep.subr.bf16.mxu0 0
  %373 = vmatpush1.bf16.msra.mxu0 0
  %374 = vmatprep.subr.bf16.mxu0 0
  %375 = vmatpush1.bf16.msra.mxu0 0
  %376 = vmatprep.mubr.bf16.mxu0 0
  %377 = vmatmul.mubr.bf16.gmra.mrb[0].mxu0 %v232
  %v378 = vpop.f32.mrb[0].mxu0
  %v379 = vadd.f32 %v102, %v378
  %v380 = vpop.f32.mrb[0].mxu0
  %v381 = vpop.f32.mrb[0].mxu0
  %v382 = vadd.f32 %v102, %v381
  %v383 = vpop.f32.mrb[0].mxu0
  %384 = vmatprep.mubr.bf16.mxu0 0
  %385 = vmatmul.mubr.bf16.gmra.mrb[0].mxu0 %v233
  %v386 = vpop.f32.mrb[0].mxu0
  %v387 = vadd.f32 %v102, %v386
  %v388 = vpop.f32.mrb[0].mxu0
  %v389 = vpop.f32.mrb[0].mxu0
  %v390 = vadd.f32 %v102, %v389
  %v391 = vpop.f32.mrb[0].mxu0
  %392 = vmatprep.mubr.bf16.mxu0 0
  %393 = vmatmul.mubr.bf16.gmra.mrb[0].mxu0 %v234
  %v394 = vpop.f32.mrb[0].mxu0
  %v395 = vadd.f32 %v102, %v394
  %v396 = vpop.f32.mrb[0].mxu0
  %v397 = vpop.f32.mrb[0].mxu0
  %v398 = vadd.f32 %v102, %v397
  %v399 = vpop.f32.mrb[0].mxu0
  %400 = vmatprep.mubr.bf16.mxu0 0
  %401 = vmatmul.mubr.bf16.gmra.mrb[0].mxu0 %v235
  %v402 = vpop.f32.mrb[0].mxu0
  %v403 = vadd.f32 %v102, %v402
  %v404 = vpop.f32.mrb[0].mxu0
  %v405 = vpop.f32.mrb[0].mxu0
  %v406 = vadd.f32 %v102, %v405
  %v407 = vpop.f32.mrb[0].mxu0
  %408 = vmatprep.mubr.bf16.mxu0 0
  %409 = vmatmul.mubr.bf16.gmra.mrb[0].mxu0 %v236
  %v410 = vpop.f32.mrb[0].mxu0
  %v411 = vadd.f32 %v102, %v410
  %v412 = vpop.f32.mrb[0].mxu0
  %v413 = vpop.f32.mrb[0].mxu0
  %v414 = vadd.f32 %v102, %v413
  %v415 = vpop.f32.mrb[0].mxu0
  %416 = vmatprep.mubr.bf16.mxu0 0
  %417 = vmatmul.mubr.bf16.gmra.mrb[0].mxu0 %v237
  %v418 = vpop.f32.mrb[0].mxu0
  %v419 = vadd.f32 %v102, %v418
  %v420 = vpop.f32.mrb[0].mxu0
  %v421 = vpop.f32.mrb[0].mxu0
  %v422 = vadd.f32 %v102, %v421
  %v423 = vpop.f32.mrb[0].mxu0
  %424 = vmatprep.mubr.bf16.mxu0 0
  %425 = vmatmul.mubr.bf16.gmra.mrb[0].mxu0 %v238
  %v426 = vpop.f32.mrb[0].mxu0
  %v427 = vadd.f32 %v102, %v426
  %v428 = vpop.f32.mrb[0].mxu0
  %v429 = vpop.f32.mrb[0].mxu0
  %v430 = vadd.f32 %v102, %v429
  %v431 = vpop.f32.mrb[0].mxu0
  %432 = vmatprep.mubr.bf16.mxu0 0
  %433 = vmatmul.mubr.bf16.gmra.mrb[0].mxu0 %v239
  %v434 = vpop.f32.mrb[0].mxu0
  %v435 = vadd.f32 %v102, %v434
  %v436 = vpop.f32.mrb[0].mxu0
  %v437 = vpop.f32.mrb[0].mxu0
  %v438 = vadd.f32 %v102, %v437
  %v439 = vpop.f32.mrb[0].mxu0
  %440 = vmatprep.mubr.bf16.mxu0 0
  %441 = vmatmul.mubr.bf16.gmra.mrb[0].mxu0 %v240
  %v442 = vpop.f32.mrb[0].mxu0
  %v443 = vadd.f32 %v102, %v442
  %v444 = vpop.f32.mrb[0].mxu0
  %v445 = vpop.f32.mrb[0].mxu0
  %v446 = vadd.f32 %v102, %v445
  %v447 = vpop.f32.mrb[0].mxu0
  %448 = vmatprep.mubr.bf16.mxu0 0
  %449 = vmatmul.mubr.bf16.gmra.mrb[0].mxu0 %v241
  %v450 = vpop.f32.mrb[0].mxu0
  %v451 = vadd.f32 %v102, %v450
  %v452 = vpop.f32.mrb[0].mxu0
  %v453 = vpop.f32.mrb[0].mxu0
  %v454 = vadd.f32 %v102, %v453
  %v455 = vpop.f32.mrb[0].mxu0
  %456 = vmatprep.mubr.bf16.mxu0 0
  %457 = vmatmul.mubr.bf16.gmra.mrb[0].mxu0 %v242
  %v458 = vpop.f32.mrb[0].mxu0
  %v459 = vadd.f32 %v102, %v458
  %v460 = vpop.f32.mrb[0].mxu0
  %v461 = vpop.f32.mrb[0].mxu0
  %v462 = vadd.f32 %v102, %v461
  %v463 = vpop.f32.mrb[0].mxu0
  %464 = vmatprep.mubr.bf16.mxu0 0
  %465 = vmatmul.mubr.bf16.gmra.mrb[0].mxu0 %v243
  %v466 = vpop.f32.mrb[0].mxu0
  %v467 = vadd.f32 %v102, %v466
  %v468 = vpop.f32.mrb[0].mxu0
  %v469 = vpop.f32.mrb[0].mxu0
  %v470 = vadd.f32 %v102, %v469
  %v471 = vpop.f32.mrb[0].mxu0
  %472 = vmatprep.mubr.bf16.mxu0 0
  %473 = vmatmul.mubr.bf16.gmra.mrb[0].mxu0 %v244
  %v474 = vpop.f32.mrb[0].mxu0
  %v475 = vadd.f32 %v102, %v474
  %v476 = vpop.f32.mrb[0].mxu0
  %v477 = vpop.f32.mrb[0].mxu0
  %v478 = vadd.f32 %v102, %v477
  %v479 = vpop.f32.mrb[0].mxu0
  %480 = vmatprep.mubr.bf16.mxu0 0
  %481 = vmatmul.mubr.bf16.gmra.mrb[0].mxu0 %v245
  %v482 = vpop.f32.mrb[0].mxu0
  %v483 = vadd.f32 %v102, %v482
  %v484 = vpop.f32.mrb[0].mxu0
  %v485 = vpop.f32.mrb[0].mxu0
  %v486 = vadd.f32 %v102, %v485
  %v487 = vpop.f32.mrb[0].mxu0
  %488 = vmatprep.mubr.bf16.mxu0 0
  %489 = vmatmul.mubr.bf16.gmra.mrb[0].mxu0 %v246
  %v490 = vpop.f32.mrb[0].mxu0
  %v491 = vadd.f32 %v102, %v490
  %v492 = vpop.f32.mrb[0].mxu0
  %v493 = vpop.f32.mrb[0].mxu0
  %v494 = vadd.f32 %v102, %v493
  %v495 = vpop.f32.mrb[0].mxu0
  %496 = vmatprep.mubr.bf16.mxu0 0
  %497 = vmatmul.mubr.bf16.gmra.mrb[0].mxu0 %v247
  %v498 = vpop.f32.mrb[0].mxu0
  %v499 = vadd.f32 %v102, %v498
  %v500 = vpop.f32.mrb[0].mxu0
  %v501 = vpop.f32.mrb[0].mxu0
  %v502 = vadd.f32 %v102, %v501
  %v503 = vpop.f32.mrb[0].mxu0
  %504 = vmatprep.mubr.bf16.mxu0 0
  %505 = vmatmul.mubr.bf16.gmra.mrb[0].mxu0 %v248
  %v506 = vpop.f32.mrb[0].mxu0
  %v507 = vadd.f32 %v102, %v506
  %v508 = vpop.f32.mrb[0].mxu0
  %v509 = vpop.f32.mrb[0].mxu0
  %v510 = vadd.f32 %v102, %v509
  %v511 = vpop.f32.mrb[0].mxu0
  %512 = vmatprep.mubr.bf16.mxu0 0
  %513 = vmatmul.mubr.bf16.gmra.mrb[0].mxu0 %v249
  %v514 = vpop.f32.mrb[0].mxu0
  %v515 = vadd.f32 %v102, %v514
  %v516 = vpop.f32.mrb[0].mxu0
  %v517 = vpop.f32.mrb[0].mxu0
  %v518 = vadd.f32 %v102, %v517
  %v519 = vpop.f32.mrb[0].mxu0
  %520 = vmatprep.mubr.bf16.mxu0 0
  %521 = vmatmul.mubr.bf16.gmra.mrb[0].mxu0 %v250
  %v522 = vpop.f32.mrb[0].mxu0
  %v523 = vadd.f32 %v102, %v522
  %v524 = vpop.f32.mrb[0].mxu0
  %v525 = vpop.f32.mrb[0].mxu0
  %v526 = vadd.f32 %v102, %v525
  %v527 = vpop.f32.mrb[0].mxu0
  %528 = vmatprep.mubr.bf16.mxu0 0
  %529 = vmatmul.mubr.bf16.gmra.mrb[0].mxu0 %v251
  %v530 = vpop.f32.mrb[0].mxu0
  %v531 = vadd.f32 %v102, %v530
  %v532 = vpop.f32.mrb[0].mxu0
  %v533 = vpop.f32.mrb[0].mxu0
  %v534 = vadd.f32 %v102, %v533
  %v535 = vpop.f32.mrb[0].mxu0
  %536 = vmatprep.mubr.bf16.mxu0 0
  %537 = vmatmul.mubr.bf16.gmra.mrb[0].mxu0 %v252
  %v538 = vpop.f32.mrb[0].mxu0
  %v539 = vadd.f32 %v102, %v538
  %v540 = vpop.f32.mrb[0].mxu0
  %v541 = vpop.f32.mrb[0].mxu0
  %v542 = vadd.f32 %v102, %v541
  %v543 = vpop.f32.mrb[0].mxu0
  %544 = vmatprep.mubr.bf16.mxu0 0
  %545 = vmatmul.mubr.bf16.gmra.mrb[0].mxu0 %v253
  %v546 = vpop.f32.mrb[0].mxu0
  %v547 = vadd.f32 %v102, %v546
  %v548 = vpop.f32.mrb[0].mxu0
  %v549 = vpop.f32.mrb[0].mxu0
  %v550 = vadd.f32 %v102, %v549
  %v551 = vpop.f32.mrb[0].mxu0
  %552 = vmatprep.mubr.bf16.mxu0 0
  %553 = vmatmul.mubr.bf16.gmra.mrb[0].mxu0 %v254
  %v554 = vpop.f32.mrb[0].mxu0
  %v555 = vadd.f32 %v102, %v554
  %v556 = vpop.f32.mrb[0].mxu0
  %v557 = vpop.f32.mrb[0].mxu0
  %v558 = vadd.f32 %v102, %v557
  %v559 = vpop.f32.mrb[0].mxu0
  %560 = vmatprep.mubr.bf16.mxu0 0
  %561 = vmatmul.mubr.bf16.gmra.mrb[0].mxu0 %v255
  %v562 = vpop.f32.mrb[0].mxu0
  %v563 = vadd.f32 %v102, %v562
  %v564 = vpop.f32.mrb[0].mxu0
  %v565 = vpop.f32.mrb[0].mxu0
  %v566 = vadd.f32 %v102, %v565
  %v567 = vpop.f32.mrb[0].mxu0
  %568 = vmatprep.mubr.bf16.mxu0 0
  %569 = vmatmul.mubr.bf16.gmra.mrb[0].mxu0 %v256
  %v570 = vpop.f32.mrb[0].mxu0
  %v571 = vadd.f32 %v102, %v570
  %v572 = vpop.f32.mrb[0].mxu0
  %v573 = vpop.f32.mrb[0].mxu0
  %v574 = vadd.f32 %v102, %v573
  %v575 = vpop.f32.mrb[0].mxu0
  %576 = vmatprep.mubr.bf16.mxu0 0
  %577 = vmatmul.mubr.bf16.gmra.mrb[0].mxu0 %v257
  %v578 = vpop.f32.mrb[0].mxu0
  %v579 = vadd.f32 %v102, %v578
  %v580 = vpop.f32.mrb[0].mxu0
  %v581 = vpop.f32.mrb[0].mxu0
  %v582 = vadd.f32 %v102, %v581
  %v583 = vpop.f32.mrb[0].mxu0
  %584 = vmatprep.mubr.bf16.mxu0 0
  %585 = vmatmul.mubr.bf16.gmra.mrb[0].mxu0 %v258
  %v586 = vpop.f32.mrb[0].mxu0
  %v587 = vadd.f32 %v102, %v586
  %v588 = vpop.f32.mrb[0].mxu0
  %v589 = vpop.f32.mrb[0].mxu0
  %v590 = vadd.f32 %v102, %v589
  %v591 = vpop.f32.mrb[0].mxu0
  %592 = vmatprep.mubr.bf16.mxu0 0
  %593 = vmatmul.mubr.bf16.gmra.mrb[0].mxu0 %v259
  %v594 = vpop.f32.mrb[0].mxu0
  %v595 = vadd.f32 %v102, %v594
  %v596 = vpop.f32.mrb[0].mxu0
  %v597 = vpop.f32.mrb[0].mxu0
  %v598 = vadd.f32 %v102, %v597
  %v599 = vpop.f32.mrb[0].mxu0
  %600 = vmatprep.mubr.bf16.mxu0 0
  %601 = vmatmul.mubr.bf16.gmra.mrb[0].mxu0 %v260
  %v602 = vpop.f32.mrb[0].mxu0
  %v603 = vadd.f32 %v102, %v602
  %v604 = vpop.f32.mrb[0].mxu0
  %v605 = vpop.f32.mrb[0].mxu0
  %v606 = vadd.f32 %v102, %v605
  %v607 = vpop.f32.mrb[0].mxu0
  %608 = vmatprep.mubr.bf16.mxu0 0
  %609 = vmatmul.mubr.bf16.gmra.mrb[0].mxu0 %v261
  %v610 = vpop.f32.mrb[0].mxu0
  %v611 = vadd.f32 %v102, %v610
  %v612 = vpop.f32.mrb[0].mxu0
  %v613 = vpop.f32.mrb[0].mxu0
  %v614 = vadd.f32 %v102, %v613
  %v615 = vpop.f32.mrb[0].mxu0
  %616 = vmatprep.mubr.bf16.mxu0 0
  %617 = vmatmul.mubr.bf16.gmra.mrb[0].mxu0 %v262
  %v618 = vpop.f32.mrb[0].mxu0
  %v619 = vadd.f32 %v102, %v618
  %v620 = vpop.f32.mrb[0].mxu0
  %v621 = vpop.f32.mrb[0].mxu0
  %v622 = vadd.f32 %v102, %v621
  %v623 = vpop.f32.mrb[0].mxu0
  %624 = vmatprep.mubr.bf16.mxu0 0
  %625 = vmatmul.mubr.bf16.gmra.mrb[0].mxu0 %v263
  %v626 = vpop.f32.mrb[0].mxu0
  %v627 = vadd.f32 %v102, %v626
  %v628 = vpop.f32.mrb[0].mxu0
  %v629 = vpop.f32.mrb[0].mxu0
  %v630 = vadd.f32 %v102, %v629
  %v631 = vpop.f32.mrb[0].mxu0
  %632 = vdwg.mxu0
  %v633 = vxor.u32 %v379, 2147483648
  %v634 = vxor.u32 %v382, 2147483648
  %v635 = vxor.u32 %v387, 2147483648
  %v636 = vxor.u32 %v390, 2147483648
  %v637 = vxor.u32 %v395, 2147483648
  %v638 = vxor.u32 %v398, 2147483648
  %v639 = vxor.u32 %v403, 2147483648
  %v640 = vxor.u32 %v406, 2147483648
  %v641 = vxor.u32 %v411, 2147483648
  %v642 = vxor.u32 %v414, 2147483648
  %v643 = vxor.u32 %v419, 2147483648
  %v644 = vxor.u32 %v422, 2147483648
  %v645 = vxor.u32 %v427, 2147483648
  %v646 = vxor.u32 %v430, 2147483648
  %v647 = vxor.u32 %v435, 2147483648
  %v648 = vxor.u32 %v438, 2147483648
  %v649 = vxor.u32 %v443, 2147483648
  %v650 = vxor.u32 %v446, 2147483648
  %v651 = vxor.u32 %v451, 2147483648
  %v652 = vxor.u32 %v454, 2147483648
  %v653 = vxor.u32 %v459, 2147483648
  %v654 = vxor.u32 %v462, 2147483648
  %v655 = vxor.u32 %v467, 2147483648
  %v656 = vxor.u32 %v470, 2147483648
  %v657 = vxor.u32 %v475, 2147483648
  %v658 = vxor.u32 %v478, 2147483648
  %v659 = vxor.u32 %v483, 2147483648
  %v660 = vxor.u32 %v486, 2147483648
  %v661 = vxor.u32 %v491, 2147483648
  %v662 = vxor.u32 %v494, 2147483648
  %v663 = vxor.u32 %v499, 2147483648
  %v664 = vxor.u32 %v502, 2147483648
  %v665 = vxor.u32 %v507, 2147483648
  %v666 = vxor.u32 %v510, 2147483648
  %v667 = vxor.u32 %v515, 2147483648
  %v668 = vxor.u32 %v518, 2147483648
  %v669 = vxor.u32 %v523, 2147483648
  %v670 = vxor.u32 %v526, 2147483648
  %v671 = vxor.u32 %v531, 2147483648
  %v672 = vxor.u32 %v534, 2147483648
  %v673 = vxor.u32 %v539, 2147483648
  %v674 = vxor.u32 %v542, 2147483648
  %v675 = vxor.u32 %v547, 2147483648
  %v676 = vxor.u32 %v550, 2147483648
  %v677 = vxor.u32 %v555, 2147483648
  %v678 = vxor.u32 %v558, 2147483648
  %v679 = vxor.u32 %v563, 2147483648
  %v680 = vxor.u32 %v566, 2147483648
  %v681 = vxor.u32 %v571, 2147483648
  %v682 = vxor.u32 %v574, 2147483648
  %v683 = vxor.u32 %v579, 2147483648
  %v684 = vxor.u32 %v582, 2147483648
  %v685 = vxor.u32 %v587, 2147483648
  %v686 = vxor.u32 %v590, 2147483648
  %v687 = vxor.u32 %v595, 2147483648
  %v688 = vxor.u32 %v598, 2147483648
  %v689 = vxor.u32 %v603, 2147483648
  %v690 = vxor.u32 %v606, 2147483648
  %v691 = vxor.u32 %v611, 2147483648
  %v692 = vxor.u32 %v614, 2147483648
  %v693 = vxor.u32 %v619, 2147483648
  %v694 = vxor.u32 %v622, 2147483648
  %v695 = vxor.u32 %v627, 2147483648
  %v696 = vxor.u32 %v630, 2147483648
  %v697 = vmul.f32 %v633, 1.442695
  %v698 = vpow.pop %v697
  %v699 = vmul.f32 %v634, 1.442695
  %v700 = vpow.pop %v699
  %v701 = vmul.f32 %v635, 1.442695
  %v702 = vpow.pop %v701
  %v703 = vmul.f32 %v636, 1.442695
  %v704 = vpow.pop %v703
  %v705 = vmul.f32 %v637, 1.442695
  %v706 = vpow.pop %v705
  %v707 = vmul.f32 %v638, 1.442695
  %v708 = vpow.pop %v707
  %v709 = vmul.f32 %v639, 1.442695
  %v710 = vpow.pop %v709
  %v711 = vmul.f32 %v640, 1.442695
  %v712 = vpow.pop %v711
  %v713 = vmul.f32 %v641, 1.442695
  %v714 = vpow.pop %v713
  %v715 = vmul.f32 %v642, 1.442695
  %v716 = vpow.pop %v715
  %v717 = vmul.f32 %v643, 1.442695
  %v718 = vpow.pop %v717
  %v719 = vmul.f32 %v644, 1.442695
  %v720 = vpow.pop %v719
  %v721 = vmul.f32 %v645, 1.442695
  %v722 = vpow.pop %v721
  %v723 = vmul.f32 %v646, 1.442695
  %v724 = vpow.pop %v723
  %v725 = vmul.f32 %v647, 1.442695
  %v726 = vpow.pop %v725
  %v727 = vmul.f32 %v648, 1.442695
  %v728 = vpow.pop %v727
  %v729 = vmul.f32 %v649, 1.442695
  %v730 = vpow.pop %v729
  %v731 = vmul.f32 %v650, 1.442695
  %v732 = vpow.pop %v731
  %v733 = vmul.f32 %v651, 1.442695
  %v734 = vpow.pop %v733
  %v735 = vmul.f32 %v652, 1.442695
  %v736 = vpow.pop %v735
  %v737 = vmul.f32 %v653, 1.442695
  %v738 = vpow.pop %v737
  %v739 = vmul.f32 %v654, 1.442695
  %v740 = vpow.pop %v739
  %v741 = vmul.f32 %v655, 1.442695
  %v742 = vpow.pop %v741
  %v743 = vmul.f32 %v656, 1.442695
  %v744 = vpow.pop %v743
  %v745 = vmul.f32 %v657, 1.442695
  %v746 = vpow.pop %v745
  %v747 = vmul.f32 %v658, 1.442695
  %v748 = vpow.pop %v747
  %v749 = vmul.f32 %v659, 1.442695
  %v750 = vpow.pop %v749
  %v751 = vmul.f32 %v660, 1.442695
  %v752 = vpow.pop %v751
  %v753 = vmul.f32 %v661, 1.442695
  %v754 = vpow.pop %v753
  %v755 = vmul.f32 %v662, 1.442695
  %v756 = vpow.pop %v755
  %v757 = vmul.f32 %v663, 1.442695
  %v758 = vpow.pop %v757
  %v759 = vmul.f32 %v664, 1.442695
  %v760 = vpow.pop %v759
  %v761 = vmul.f32 %v665, 1.442695
  %v762 = vpow.pop %v761
  %v763 = vmul.f32 %v666, 1.442695
  %v764 = vpow.pop %v763
  %v765 = vmul.f32 %v667, 1.442695
  %v766 = vpow.pop %v765
  %v767 = vmul.f32 %v668, 1.442695
  %v768 = vpow.pop %v767
  %v769 = vmul.f32 %v669, 1.442695
  %v770 = vpow.pop %v769
  %v771 = vmul.f32 %v670, 1.442695
  %v772 = vpow.pop %v771
  %v773 = vmul.f32 %v671, 1.442695
  %v774 = vpow.pop %v773
  %v775 = vmul.f32 %v672, 1.442695
  %v776 = vpow.pop %v775
  %v777 = vmul.f32 %v673, 1.442695
  %v778 = vpow.pop %v777
  %v779 = vmul.f32 %v674, 1.442695
  %v780 = vpow.pop %v779
  %v781 = vmul.f32 %v675, 1.442695
  %v782 = vpow.pop %v781
  %v783 = vmul.f32 %v676, 1.442695
  %v784 = vpow.pop %v783
  %v785 = vmul.f32 %v677, 1.442695
  %v786 = vpow.pop %v785
  %v787 = vmul.f32 %v678, 1.442695
  %v788 = vpow.pop %v787
  %v789 = vmul.f32 %v679, 1.442695
  %v790 = vpow.pop %v789
  %v791 = vmul.f32 %v680, 1.442695
  %v792 = vpow.pop %v791
  %v793 = vmul.f32 %v681, 1.442695
  %v794 = vpow.pop %v793
  %v795 = vmul.f32 %v682, 1.442695
  %v796 = vpow.pop %v795
  %v797 = vmul.f32 %v683, 1.442695
  %v798 = vpow.pop %v797
  %v799 = vmul.f32 %v684, 1.442695
  %v800 = vpow.pop %v799
  %v801 = vmul.f32 %v685, 1.442695
  %v802 = vpow.pop %v801
  %v803 = vmul.f32 %v686, 1.442695
  %v804 = vpow.pop %v803
  %v805 = vmul.f32 %v687, 1.442695
  %v806 = vpow.pop %v805
  %v807 = vmul.f32 %v688, 1.442695
  %v808 = vpow.pop %v807
  %v809 = vmul.f32 %v689, 1.442695
  %v810 = vpow.pop %v809
  %v811 = vmul.f32 %v690, 1.442695
  %v812 = vpow.pop %v811
  %v813 = vmul.f32 %v691, 1.442695
  %v814 = vpow.pop %v813
  %v815 = vmul.f32 %v692, 1.442695
  %v816 = vpow.pop %v815
  %v817 = vmul.f32 %v693, 1.442695
  %v818 = vpow.pop %v817
  %v819 = vmul.f32 %v694, 1.442695
  %v820 = vpow.pop %v819
  %v821 = vmul.f32 %v695, 1.442695
  %v822 = vpow.pop %v821
  %v823 = vmul.f32 %v696, 1.442695
  %v824 = vpow.pop %v823
  %v825 = vadd.f32 %v698, 1.0
  %v826 = vadd.f32 %v700, 1.0
  %v827 = vadd.f32 %v702, 1.0
  %v828 = vadd.f32 %v704, 1.0
  %v829 = vadd.f32 %v706, 1.0
  %v830 = vadd.f32 %v708, 1.0
  %v831 = vadd.f32 %v710, 1.0
  %v832 = vadd.f32 %v712, 1.0
  %v833 = vadd.f32 %v714, 1.0
  %v834 = vadd.f32 %v716, 1.0
  %v835 = vadd.f32 %v718, 1.0
  %v836 = vadd.f32 %v720, 1.0
  %v837 = vadd.f32 %v722, 1.0
  %v838 = vadd.f32 %v724, 1.0
  %v839 = vadd.f32 %v726, 1.0
  %v840 = vadd.f32 %v728, 1.0
  %v841 = vadd.f32 %v730, 1.0
  %v842 = vadd.f32 %v732, 1.0
  %v843 = vadd.f32 %v734, 1.0
  %v844 = vadd.f32 %v736, 1.0
  %v845 = vadd.f32 %v738, 1.0
  %v846 = vadd.f32 %v740, 1.0
  %v847 = vadd.f32 %v742, 1.0
  %v848 = vadd.f32 %v744, 1.0
  %v849 = vadd.f32 %v746, 1.0
  %v850 = vadd.f32 %v748, 1.0
  %v851 = vadd.f32 %v750, 1.0
  %v852 = vadd.f32 %v752, 1.0
  %v853 = vadd.f32 %v754, 1.0
  %v854 = vadd.f32 %v756, 1.0
  %v855 = vadd.f32 %v758, 1.0
  %v856 = vadd.f32 %v760, 1.0
  %v857 = vadd.f32 %v762, 1.0
  %v858 = vadd.f32 %v764, 1.0
  %v859 = vadd.f32 %v766, 1.0
  %v860 = vadd.f32 %v768, 1.0
  %v861 = vadd.f32 %v770, 1.0
  %v862 = vadd.f32 %v772, 1.0
  %v863 = vadd.f32 %v774, 1.0
  %v864 = vadd.f32 %v776, 1.0
  %v865 = vadd.f32 %v778, 1.0
  %v866 = vadd.f32 %v780, 1.0
  %v867 = vadd.f32 %v782, 1.0
  %v868 = vadd.f32 %v784, 1.0
  %v869 = vadd.f32 %v786, 1.0
  %v870 = vadd.f32 %v788, 1.0
  %v871 = vadd.f32 %v790, 1.0
  %v872 = vadd.f32 %v792, 1.0
  %v873 = vadd.f32 %v794, 1.0
  %v874 = vadd.f32 %v796, 1.0
  %v875 = vadd.f32 %v798, 1.0
  %v876 = vadd.f32 %v800, 1.0
  %v877 = vadd.f32 %v802, 1.0
  %v878 = vadd.f32 %v804, 1.0
  %v879 = vadd.f32 %v806, 1.0
  %v880 = vadd.f32 %v808, 1.0
  %v881 = vadd.f32 %v810, 1.0
  %v882 = vadd.f32 %v812, 1.0
  %v883 = vadd.f32 %v814, 1.0
  %v884 = vadd.f32 %v816, 1.0
  %v885 = vadd.f32 %v818, 1.0
  %v886 = vadd.f32 %v820, 1.0
  %v887 = vadd.f32 %v822, 1.0
  %v888 = vadd.f32 %v824, 1.0
  %v889 = vrcp.pop %v825
  %v890 = vmul.f32 1.0, %v889
  %v891 = vrcp.pop %v826
  %v892 = vmul.f32 1.0, %v891
  %v893 = vrcp.pop %v827
  %v894 = vmul.f32 1.0, %v893
  %v895 = vrcp.pop %v828
  %v896 = vmul.f32 1.0, %v895
  %v897 = vrcp.pop %v829
  %v898 = vmul.f32 1.0, %v897
  %v899 = vrcp.pop %v830
  %v900 = vmul.f32 1.0, %v899
  %v901 = vrcp.pop %v831
  %v902 = vmul.f32 1.0, %v901
  %v903 = vrcp.pop %v832
  %v904 = vmul.f32 1.0, %v903
  %v905 = vrcp.pop %v833
  %v906 = vmul.f32 1.0, %v905
  %v907 = vrcp.pop %v834
  %v908 = vmul.f32 1.0, %v907
  %v909 = vrcp.pop %v835
  %v910 = vmul.f32 1.0, %v909
  %v911 = vrcp.pop %v836
  %v912 = vmul.f32 1.0, %v911
  %v913 = vrcp.pop %v837
  %v914 = vmul.f32 1.0, %v913
  %v915 = vrcp.pop %v838
  %v916 = vmul.f32 1.0, %v915
  %v917 = vrcp.pop %v839
  %v918 = vmul.f32 1.0, %v917
  %v919 = vrcp.pop %v840
  %v920 = vmul.f32 1.0, %v919
  %v921 = vrcp.pop %v841
  %v922 = vmul.f32 1.0, %v921
  %v923 = vrcp.pop %v842
  %v924 = vmul.f32 1.0, %v923
  %v925 = vrcp.pop %v843
  %v926 = vmul.f32 1.0, %v925
  %v927 = vrcp.pop %v844
  %v928 = vmul.f32 1.0, %v927
  %v929 = vrcp.pop %v845
  %v930 = vmul.f32 1.0, %v929
  %v931 = vrcp.pop %v846
  %v932 = vmul.f32 1.0, %v931
  %v933 = vrcp.pop %v847
  %v934 = vmul.f32 1.0, %v933
  %v935 = vrcp.pop %v848
  %v936 = vmul.f32 1.0, %v935
  %v937 = vrcp.pop %v849
  %v938 = vmul.f32 1.0, %v937
  %v939 = vrcp.pop %v850
  %v940 = vmul.f32 1.0, %v939
  %v941 = vrcp.pop %v851
  %v942 = vmul.f32 1.0, %v941
  %v943 = vrcp.pop %v852
  %v944 = vmul.f32 1.0, %v943
  %v945 = vrcp.pop %v853
  %v946 = vmul.f32 1.0, %v945
  %v947 = vrcp.pop %v854
  %v948 = vmul.f32 1.0, %v947
  %v949 = vrcp.pop %v855
  %v950 = vmul.f32 1.0, %v949
  %v951 = vrcp.pop %v856
  %v952 = vmul.f32 1.0, %v951
  %v953 = vrcp.pop %v857
  %v954 = vmul.f32 1.0, %v953
  %v955 = vrcp.pop %v858
  %v956 = vmul.f32 1.0, %v955
  %v957 = vrcp.pop %v859
  %v958 = vmul.f32 1.0, %v957
  %v959 = vrcp.pop %v860
  %v960 = vmul.f32 1.0, %v959
  %v961 = vrcp.pop %v861
  %v962 = vmul.f32 1.0, %v961
  %v963 = vrcp.pop %v862
  %v964 = vmul.f32 1.0, %v963
  %v965 = vrcp.pop %v863
  %v966 = vmul.f32 1.0, %v965
  %v967 = vrcp.pop %v864
  %v968 = vmul.f32 1.0, %v967
  %v969 = vrcp.pop %v865
  %v970 = vmul.f32 1.0, %v969
  %v971 = vrcp.pop %v866
  %v972 = vmul.f32 1.0, %v971
  %v973 = vrcp.pop %v867
  %v974 = vmul.f32 1.0, %v973
  %v975 = vrcp.pop %v868
  %v976 = vmul.f32 1.0, %v975
  %v977 = vrcp.pop %v869
  %v978 = vmul.f32 1.0, %v977
  %v979 = vrcp.pop %v870
  %v980 = vmul.f32 1.0, %v979
  %v981 = vrcp.pop %v871
  %v982 = vmul.f32 1.0, %v981
  %v983 = vrcp.pop %v872
  %v984 = vmul.f32 1.0, %v983
  %v985 = vrcp.pop %v873
  %v986 = vmul.f32 1.0, %v985
  %v987 = vrcp.pop %v874
  %v988 = vmul.f32 1.0, %v987
  %v989 = vrcp.pop %v875
  %v990 = vmul.f32 1.0, %v989
  %v991 = vrcp.pop %v876
  %v992 = vmul.f32 1.0, %v991
  %v993 = vrcp.pop %v877
  %v994 = vmul.f32 1.0, %v993
  %v995 = vrcp.pop %v878
  %v996 = vmul.f32 1.0, %v995
  %v997 = vrcp.pop %v879
  %v998 = vmul.f32 1.0, %v997
  %v999 = vrcp.pop %v880
  %v1000 = vmul.f32 1.0, %v999
  %v1001 = vrcp.pop %v881
  %v1002 = vmul.f32 1.0, %v1001
  %v1003 = vrcp.pop %v882
  %v1004 = vmul.f32 1.0, %v1003
  %v1005 = vrcp.pop %v883
  %v1006 = vmul.f32 1.0, %v1005
  %v1007 = vrcp.pop %v884
  %v1008 = vmul.f32 1.0, %v1007
  %v1009 = vrcp.pop %v885
  %v1010 = vmul.f32 1.0, %v1009
  %v1011 = vrcp.pop %v886
  %v1012 = vmul.f32 1.0, %v1011
  %v1013 = vrcp.pop %v887
  %v1014 = vmul.f32 1.0, %v1013
  %v1015 = vrcp.pop %v888
  %v1016 = vmul.f32 1.0, %v1015
  %v1017 = vmul.f32 %v379, %v890
  %v1018 = vmul.f32 %v382, %v892
  %v1019 = vmul.f32 %v387, %v894
  %v1020 = vmul.f32 %v390, %v896
  %v1021 = vmul.f32 %v395, %v898
  %v1022 = vmul.f32 %v398, %v900
  %v1023 = vmul.f32 %v403, %v902
  %v1024 = vmul.f32 %v406, %v904
  %v1025 = vmul.f32 %v411, %v906
  %v1026 = vmul.f32 %v414, %v908
  %v1027 = vmul.f32 %v419, %v910
  %v1028 = vmul.f32 %v422, %v912
  %v1029 = vmul.f32 %v427, %v914
  %v1030 = vmul.f32 %v430, %v916
  %v1031 = vmul.f32 %v435, %v918
  %v1032 = vmul.f32 %v438, %v920
  %v1033 = vmul.f32 %v443, %v922
  %v1034 = vmul.f32 %v446, %v924
  %v1035 = vmul.f32 %v451, %v926
  %v1036 = vmul.f32 %v454, %v928
  %v1037 = vmul.f32 %v459, %v930
  %v1038 = vmul.f32 %v462, %v932
  %v1039 = vmul.f32 %v467, %v934
  %v1040 = vmul.f32 %v470, %v936
  %v1041 = vmul.f32 %v475, %v938
  %v1042 = vmul.f32 %v478, %v940
  %v1043 = vmul.f32 %v483, %v942
  %v1044 = vmul.f32 %v486, %v944
  %v1045 = vmul.f32 %v491, %v946
  %v1046 = vmul.f32 %v494, %v948
  %v1047 = vmul.f32 %v499, %v950
  %v1048 = vmul.f32 %v502, %v952
  %v1049 = vmul.f32 %v507, %v954
  %v1050 = vmul.f32 %v510, %v956
  %v1051 = vmul.f32 %v515, %v958
  %v1052 = vmul.f32 %v518, %v960
  %v1053 = vmul.f32 %v523, %v962
  %v1054 = vmul.f32 %v526, %v964
  %v1055 = vmul.f32 %v531, %v966
  %v1056 = vmul.f32 %v534, %v968
  %v1057 = vmul.f32 %v539, %v970
  %v1058 = vmul.f32 %v542, %v972
  %v1059 = vmul.f32 %v547, %v974
  %v1060 = vmul.f32 %v550, %v976
  %v1061 = vmul.f32 %v555, %v978
  %v1062 = vmul.f32 %v558, %v980
  %v1063 = vmul.f32 %v563, %v982
  %v1064 = vmul.f32 %v566, %v984
  %v1065 = vmul.f32 %v571, %v986
  %v1066 = vmul.f32 %v574, %v988
  %v1067 = vmul.f32 %v579, %v990
  %v1068 = vmul.f32 %v582, %v992
  %v1069 = vmul.f32 %v587, %v994
  %v1070 = vmul.f32 %v590, %v996
  %v1071 = vmul.f32 %v595, %v998
  %v1072 = vmul.f32 %v598, %v1000
  %v1073 = vmul.f32 %v603, %v1002
  %v1074 = vmul.f32 %v606, %v1004
  %v1075 = vmul.f32 %v611, %v1006
  %v1076 = vmul.f32 %v614, %v1008
  %v1077 = vmul.f32 %v619, %v1010
  %v1078 = vmul.f32 %v622, %v1012
  %v1079 = vmul.f32 %v627, %v1014
  %v1080 = vmul.f32 %v630, %v1016
  %v1081 = vpack.c.bf16 %v1018, %v1017
  %v1082 = vpack.c.bf16 %v1020, %v1019
  %v1083 = vpack.c.bf16 %v1022, %v1021
  %v1084 = vpack.c.bf16 %v1024, %v1023
  %v1085 = vpack.c.bf16 %v1026, %v1025
  %v1086 = vpack.c.bf16 %v1028, %v1027
  %v1087 = vpack.c.bf16 %v1030, %v1029
  %v1088 = vpack.c.bf16 %v1032, %v1031
  %v1089 = vpack.c.bf16 %v1034, %v1033
  %v1090 = vpack.c.bf16 %v1036, %v1035
  %v1091 = vpack.c.bf16 %v1038, %v1037
  %v1092 = vpack.c.bf16 %v1040, %v1039
  %v1093 = vpack.c.bf16 %v1042, %v1041
  %v1094 = vpack.c.bf16 %v1044, %v1043
  %v1095 = vpack.c.bf16 %v1046, %v1045
  %v1096 = vpack.c.bf16 %v1048, %v1047
  %v1097 = vpack.c.bf16 %v1050, %v1049
  %v1098 = vpack.c.bf16 %v1052, %v1051
  %v1099 = vpack.c.bf16 %v1054, %v1053
  %v1100 = vpack.c.bf16 %v1056, %v1055
  %v1101 = vpack.c.bf16 %v1058, %v1057
  %v1102 = vpack.c.bf16 %v1060, %v1059
  %v1103 = vpack.c.bf16 %v1062, %v1061
  %v1104 = vpack.c.bf16 %v1064, %v1063
  %v1105 = vpack.c.bf16 %v1066, %v1065
  %v1106 = vpack.c.bf16 %v1068, %v1067
  %v1107 = vpack.c.bf16 %v1070, %v1069
  %v1108 = vpack.c.bf16 %v1072, %v1071
  %v1109 = vpack.c.bf16 %v1074, %v1073
  %v1110 = vpack.c.bf16 %v1076, %v1075
  %v1111 = vpack.c.bf16 %v1078, %v1077
  %v1112 = vpack.c.bf16 %v1080, %v1079
  %v1145 = vunpack.c.l.b16 %v1081
  %v1146 = vunpack.c.h.b16 %v1081
  %v1147 = vunpack.c.l.b16 %v1082
  %v1148 = vunpack.c.h.b16 %v1082
  %v1149 = vunpack.c.l.b16 %v1083
  %v1150 = vunpack.c.h.b16 %v1083
  %v1151 = vunpack.c.l.b16 %v1084
  %v1152 = vunpack.c.h.b16 %v1084
  %v1153 = vunpack.c.l.b16 %v1085
  %v1154 = vunpack.c.h.b16 %v1085
  %v1155 = vunpack.c.l.b16 %v1086
  %v1156 = vunpack.c.h.b16 %v1086
  %v1157 = vunpack.c.l.b16 %v1087
  %v1158 = vunpack.c.h.b16 %v1087
  %v1159 = vunpack.c.l.b16 %v1088
  %v1160 = vunpack.c.h.b16 %v1088
  %v1161 = vunpack.c.l.b16 %v1089
  %v1162 = vunpack.c.h.b16 %v1089
  %v1163 = vunpack.c.l.b16 %v1090
  %v1164 = vunpack.c.h.b16 %v1090
  %v1165 = vunpack.c.l.b16 %v1091
  %v1166 = vunpack.c.h.b16 %v1091
  %v1167 = vunpack.c.l.b16 %v1092
  %v1168 = vunpack.c.h.b16 %v1092
  %v1169 = vunpack.c.l.b16 %v1093
  %v1170 = vunpack.c.h.b16 %v1093
  %v1171 = vunpack.c.l.b16 %v1094
  %v1172 = vunpack.c.h.b16 %v1094
  %v1173 = vunpack.c.l.b16 %v1095
  %v1174 = vunpack.c.h.b16 %v1095
  %v1175 = vunpack.c.l.b16 %v1096
  %v1176 = vunpack.c.h.b16 %v1096
  %v1177 = vunpack.c.l.b16 %v1097
  %v1178 = vunpack.c.h.b16 %v1097
  %v1179 = vunpack.c.l.b16 %v1098
  %v1180 = vunpack.c.h.b16 %v1098
  %v1181 = vunpack.c.l.b16 %v1099
  %v1182 = vunpack.c.h.b16 %v1099
  %v1183 = vunpack.c.l.b16 %v1100
  %v1184 = vunpack.c.h.b16 %v1100
  %v1185 = vunpack.c.l.b16 %v1101
  %v1186 = vunpack.c.h.b16 %v1101
  %v1187 = vunpack.c.l.b16 %v1102
  %v1188 = vunpack.c.h.b16 %v1102
  %v1189 = vunpack.c.l.b16 %v1103
  %v1190 = vunpack.c.h.b16 %v1103
  %v1191 = vunpack.c.l.b16 %v1104
  %v1192 = vunpack.c.h.b16 %v1104
  %v1193 = vunpack.c.l.b16 %v1105
  %v1194 = vunpack.c.h.b16 %v1105
  %v1195 = vunpack.c.l.b16 %v1106
  %v1196 = vunpack.c.h.b16 %v1106
  %v1197 = vunpack.c.l.b16 %v1107
  %v1198 = vunpack.c.h.b16 %v1107
  %v1199 = vunpack.c.l.b16 %v1108
  %v1200 = vunpack.c.h.b16 %v1108
  %v1201 = vunpack.c.l.b16 %v1109
  %v1202 = vunpack.c.h.b16 %v1109
  %v1203 = vunpack.c.l.b16 %v1110
  %v1204 = vunpack.c.h.b16 %v1110
  %v1205 = vunpack.c.l.b16 %v1111
  %v1206 = vunpack.c.h.b16 %v1111
  %v1207 = vunpack.c.l.b16 %v1112
  %v1208 = vunpack.c.h.b16 %v1112
  %v1209 = vpack.c.b16 %v1145, %v1145
  %v1210 = vpack.c.b16 %v1146, %v1146
  %v1211 = vpack.c.b16 %v1147, %v1147
  %v1212 = vpack.c.b16 %v1148, %v1148
  %v1213 = vpack.c.b16 %v1149, %v1149
  %v1214 = vpack.c.b16 %v1150, %v1150
  %v1215 = vpack.c.b16 %v1151, %v1151
  %v1216 = vpack.c.b16 %v1152, %v1152
  %v1217 = vpack.c.b16 %v1153, %v1153
  %v1218 = vpack.c.b16 %v1154, %v1154
  %v1219 = vpack.c.b16 %v1155, %v1155
  %v1220 = vpack.c.b16 %v1156, %v1156
  %v1221 = vpack.c.b16 %v1157, %v1157
  %v1222 = vpack.c.b16 %v1158, %v1158
  %v1223 = vpack.c.b16 %v1159, %v1159
  %v1224 = vpack.c.b16 %v1160, %v1160
  %v1225 = vpack.c.b16 %v1161, %v1161
  %v1226 = vpack.c.b16 %v1162, %v1162
  %v1227 = vpack.c.b16 %v1163, %v1163
  %v1228 = vpack.c.b16 %v1164, %v1164
  %v1229 = vpack.c.b16 %v1165, %v1165
  %v1230 = vpack.c.b16 %v1166, %v1166
  %v1231 = vpack.c.b16 %v1167, %v1167
  %v1232 = vpack.c.b16 %v1168, %v1168
  %v1233 = vpack.c.b16 %v1169, %v1169
  %v1234 = vpack.c.b16 %v1170, %v1170
  %v1235 = vpack.c.b16 %v1171, %v1171
  %v1236 = vpack.c.b16 %v1172, %v1172
  %v1237 = vpack.c.b16 %v1173, %v1173
  %v1238 = vpack.c.b16 %v1174, %v1174
  %v1239 = vpack.c.b16 %v1175, %v1175
  %v1240 = vpack.c.b16 %v1176, %v1176
  %v1241 = vpack.c.b16 %v1177, %v1177
  %v1242 = vpack.c.b16 %v1178, %v1178
  %v1243 = vpack.c.b16 %v1179, %v1179
  %v1244 = vpack.c.b16 %v1180, %v1180
  %v1245 = vpack.c.b16 %v1181, %v1181
  %v1246 = vpack.c.b16 %v1182, %v1182
  %v1247 = vpack.c.b16 %v1183, %v1183
  %v1248 = vpack.c.b16 %v1184, %v1184
  %v1249 = vpack.c.b16 %v1185, %v1185
  %v1250 = vpack.c.b16 %v1186, %v1186
  %v1251 = vpack.c.b16 %v1187, %v1187
  %v1252 = vpack.c.b16 %v1188, %v1188
  %v1253 = vpack.c.b16 %v1189, %v1189
  %v1254 = vpack.c.b16 %v1190, %v1190
  %v1255 = vpack.c.b16 %v1191, %v1191
  %v1256 = vpack.c.b16 %v1192, %v1192
  %v1257 = vpack.c.b16 %v1193, %v1193
  %v1258 = vpack.c.b16 %v1194, %v1194
  %v1259 = vpack.c.b16 %v1195, %v1195
  %v1260 = vpack.c.b16 %v1196, %v1196
  %v1261 = vpack.c.b16 %v1197, %v1197
  %v1262 = vpack.c.b16 %v1198, %v1198
  %v1263 = vpack.c.b16 %v1199, %v1199
  %v1264 = vpack.c.b16 %v1200, %v1200
  %v1265 = vpack.c.b16 %v1201, %v1201
  %v1266 = vpack.c.b16 %v1202, %v1202
  %v1267 = vpack.c.b16 %v1203, %v1203
  %v1268 = vpack.c.b16 %v1204, %v1204
  %v1269 = vpack.c.b16 %v1205, %v1205
  %v1270 = vpack.c.b16 %v1206, %v1206
  %v1271 = vpack.c.b16 %v1207, %v1207
  %v1272 = vpack.c.b16 %v1208, %v1208
  %1337 = vst [vmem:[%s3] sm:$0xf] %v1209
  %1338 = vst [vmem:[%s3 + $0x4] sm:$0xf] %v1210
  %1339 = vst [vmem:[%s3 + $0x8] sm:$0xf] %v1211
  %1340 = vst [vmem:[%s3 + $0xc] sm:$0xf] %v1212
  %1341 = vst [vmem:[%s3 + $0x10] sm:$0xf] %v1213
  %1342 = vst [vmem:[%s3 + $0x14] sm:$0xf] %v1214
  %1343 = vst [vmem:[%s3 + $0x18] sm:$0xf] %v1215
  %1344 = vst [vmem:[%s3 + $0x1c] sm:$0xf] %v1216
  %1345 = vst [vmem:[%s3 + $0x20] sm:$0xf] %v1217
  %1346 = vst [vmem:[%s3 + $0x24] sm:$0xf] %v1218
  %1347 = vst [vmem:[%s3 + $0x28] sm:$0xf] %v1219
  %1348 = vst [vmem:[%s3 + $0x2c] sm:$0xf] %v1220
  %1349 = vst [vmem:[%s3 + $0x30] sm:$0xf] %v1221
  %1350 = vst [vmem:[%s3 + $0x34] sm:$0xf] %v1222
  %1351 = vst [vmem:[%s3 + $0x38] sm:$0xf] %v1223
  %1352 = vst [vmem:[%s3 + $0x3c] sm:$0xf] %v1224
  %1353 = vst [vmem:[%s3 + $0x40] sm:$0xf] %v1225
  %1354 = vst [vmem:[%s3 + $0x44] sm:$0xf] %v1226
  %1355 = vst [vmem:[%s3 + $0x48] sm:$0xf] %v1227
  %1356 = vst [vmem:[%s3 + $0x4c] sm:$0xf] %v1228
  %1357 = vst [vmem:[%s3 + $0x50] sm:$0xf] %v1229
  %1358 = vst [vmem:[%s3 + $0x54] sm:$0xf] %v1230
  %1359 = vst [vmem:[%s3 + $0x58] sm:$0xf] %v1231
  %1360 = vst [vmem:[%s3 + $0x5c] sm:$0xf] %v1232
  %1361 = vst [vmem:[%s3 + $0x60] sm:$0xf] %v1233
  %1362 = vst [vmem:[%s3 + $0x64] sm:$0xf] %v1234
  %1363 = vst [vmem:[%s3 + $0x68] sm:$0xf] %v1235
  %1364 = vst [vmem:[%s3 + $0x6c] sm:$0xf] %v1236
  %1365 = vst [vmem:[%s3 + $0x70] sm:$0xf] %v1237
  %1366 = vst [vmem:[%s3 + $0x74] sm:$0xf] %v1238
  %1367 = vst [vmem:[%s3 + $0x78] sm:$0xf] %v1239
  %1368 = vst [vmem:[%s3 + $0x7c] sm:$0xf] %v1240
  %1369 = vst [vmem:[%s3 + $0x80] sm:$0xf] %v1241
  %1370 = vst [vmem:[%s3 + $0x84] sm:$0xf] %v1242
  %1371 = vst [vmem:[%s3 + $0x88] sm:$0xf] %v1243
  %1372 = vst [vmem:[%s3 + $0x8c] sm:$0xf] %v1244
  %1373 = vst [vmem:[%s3 + $0x90] sm:$0xf] %v1245
  %1374 = vst [vmem:[%s3 + $0x94] sm:$0xf] %v1246
  %1375 = vst [vmem:[%s3 + $0x98] sm:$0xf] %v1247
  %1376 = vst [vmem:[%s3 + $0x9c] sm:$0xf] %v1248
  %1377 = vst [vmem:[%s3 + $0xa0] sm:$0xf] %v1249
  %1378 = vst [vmem:[%s3 + $0xa4] sm:$0xf] %v1250
  %1379 = vst [vmem:[%s3 + $0xa8] sm:$0xf] %v1251
  %1380 = vst [vmem:[%s3 + $0xac] sm:$0xf] %v1252
  %1381 = vst [vmem:[%s3 + $0xb0] sm:$0xf] %v1253
  %1382 = vst [vmem:[%s3 + $0xb4] sm:$0xf] %v1254
  %1383 = vst [vmem:[%s3 + $0xb8] sm:$0xf] %v1255
  %1384 = vst [vmem:[%s3 + $0xbc] sm:$0xf] %v1256
  %1385 = vst [vmem:[%s3 + $0xc0] sm:$0xf] %v1257
  %1386 = vst [vmem:[%s3 + $0xc4] sm:$0xf] %v1258
  %1387 = vst [vmem:[%s3 + $0xc8] sm:$0xf] %v1259
  %1388 = vst [vmem:[%s3 + $0xcc] sm:$0xf] %v1260
  %1389 = vst [vmem:[%s3 + $0xd0] sm:$0xf] %v1261
  %1390 = vst [vmem:[%s3 + $0xd4] sm:$0xf] %v1262
  %1391 = vst [vmem:[%s3 + $0xd8] sm:$0xf] %v1263
  %1392 = vst [vmem:[%s3 + $0xdc] sm:$0xf] %v1264
  %1393 = vst [vmem:[%s3 + $0xe0] sm:$0xf] %v1265
  %1394 = vst [vmem:[%s3 + $0xe4] sm:$0xf] %v1266
  %1395 = vst [vmem:[%s3 + $0xe8] sm:$0xf] %v1267
  %1396 = vst [vmem:[%s3 + $0xec] sm:$0xf] %v1268
  %1397 = vst [vmem:[%s3 + $0xf0] sm:$0xf] %v1269
  %1398 = vst [vmem:[%s3 + $0xf4] sm:$0xf] %v1270
  %1399 = vst [vmem:[%s3 + $0xf8] sm:$0xf] %v1271
  %1400 = vst [vmem:[%s3 + $0xfc] sm:$0xf] %v1272
  %v1401 = vadd.f32 %v1017, %v1018
  %v1402 = vadd.f32 %v1401, %v1019
  %v1403 = vadd.f32 %v1402, %v1020
  %v1404 = vadd.f32 %v1403, %v1021
  %v1405 = vadd.f32 %v1404, %v1022
  %v1406 = vadd.f32 %v1405, %v1023
  %v1407 = vadd.f32 %v1406, %v1024
  %v1408 = vadd.f32 %v1407, %v1025
  %v1409 = vadd.f32 %v1408, %v1026
  %v1410 = vadd.f32 %v1409, %v1027
  %v1411 = vadd.f32 %v1410, %v1028
  %v1412 = vadd.f32 %v1411, %v1029
  %v1413 = vadd.f32 %v1412, %v1030
  %v1414 = vadd.f32 %v1413, %v1031
  %v1415 = vadd.f32 %v1414, %v1032
  %v1416 = vadd.f32 %v1415, %v1033
  %v1417 = vadd.f32 %v1416, %v1034
  %v1418 = vadd.f32 %v1417, %v1035
  %v1419 = vadd.f32 %v1418, %v1036
  %v1420 = vadd.f32 %v1419, %v1037
  %v1421 = vadd.f32 %v1420, %v1038
  %v1422 = vadd.f32 %v1421, %v1039
  %v1423 = vadd.f32 %v1422, %v1040
  %v1424 = vadd.f32 %v1423, %v1041
  %v1425 = vadd.f32 %v1424, %v1042
  %v1426 = vadd.f32 %v1425, %v1043
  %v1427 = vadd.f32 %v1426, %v1044
  %v1428 = vadd.f32 %v1427, %v1045
  %v1429 = vadd.f32 %v1428, %v1046
  %v1430 = vadd.f32 %v1429, %v1047
  %v1431 = vadd.f32 %v1430, %v1048
  %v1432 = vadd.f32 %v1431, %v1049
  %v1433 = vadd.f32 %v1432, %v1050
  %v1434 = vadd.f32 %v1433, %v1051
  %v1435 = vadd.f32 %v1434, %v1052
  %v1436 = vadd.f32 %v1435, %v1053
  %v1437 = vadd.f32 %v1436, %v1054
  %v1438 = vadd.f32 %v1437, %v1055
  %v1439 = vadd.f32 %v1438, %v1056
  %v1440 = vadd.f32 %v1439, %v1057
  %v1441 = vadd.f32 %v1440, %v1058
  %v1442 = vadd.f32 %v1441, %v1059
  %v1443 = vadd.f32 %v1442, %v1060
  %v1444 = vadd.f32 %v1443, %v1061
  %v1445 = vadd.f32 %v1444, %v1062
  %v1446 = vadd.f32 %v1445, %v1063
  %v1447 = vadd.f32 %v1446, %v1064
  %v1448 = vadd.f32 %v1447, %v1065
  %v1449 = vadd.f32 %v1448, %v1066
  %v1450 = vadd.f32 %v1449, %v1067
  %v1451 = vadd.f32 %v1450, %v1068
  %v1452 = vadd.f32 %v1451, %v1069
  %v1453 = vadd.f32 %v1452, %v1070
  %v1454 = vadd.f32 %v1453, %v1071
  %v1455 = vadd.f32 %v1454, %v1072
  %v1456 = vadd.f32 %v1455, %v1073
  %v1457 = vadd.f32 %v1456, %v1074
  %v1458 = vadd.f32 %v1457, %v1075
  %v1459 = vadd.f32 %v1458, %v1076
  %v1460 = vadd.f32 %v1459, %v1077
  %v1461 = vadd.f32 %v1460, %v1078
  %v1462 = vadd.f32 %v1461, %v1079
  %v1463 = vadd.f32 %v1462, %v1080
  %v1464 = vrot.slane %v1463, 4
  %v1465 = vadd.f32 %v1463, %v1464
  %v1466 = vrot.slane %v1465, 2
  %v1467 = vadd.f32 %v1465, %v1466
  %v1468 = vrot.slane %v1467, 1
  %v1469 = vadd.f32 %v1467, %v1468
  %v1470 = vmul.f32 %v1017, %v1017
  %v1471 = vmul.f32 %v1018, %v1018
  %v1472 = vmul.f32 %v1019, %v1019
  %v1473 = vmul.f32 %v1020, %v1020
  %v1474 = vmul.f32 %v1021, %v1021
  %v1475 = vmul.f32 %v1022, %v1022
  %v1476 = vmul.f32 %v1023, %v1023
  %v1477 = vmul.f32 %v1024, %v1024
  %v1478 = vmul.f32 %v1025, %v1025
  %v1479 = vmul.f32 %v1026, %v1026
  %v1480 = vmul.f32 %v1027, %v1027
  %v1481 = vmul.f32 %v1028, %v1028
  %v1482 = vmul.f32 %v1029, %v1029
  %v1483 = vmul.f32 %v1030, %v1030
  %v1484 = vmul.f32 %v1031, %v1031
  %v1485 = vmul.f32 %v1032, %v1032
  %v1486 = vmul.f32 %v1033, %v1033
  %v1487 = vmul.f32 %v1034, %v1034
  %v1488 = vmul.f32 %v1035, %v1035
  %v1489 = vmul.f32 %v1036, %v1036
  %v1490 = vmul.f32 %v1037, %v1037
  %v1491 = vmul.f32 %v1038, %v1038
  %v1492 = vmul.f32 %v1039, %v1039
  %v1493 = vmul.f32 %v1040, %v1040
  %v1494 = vmul.f32 %v1041, %v1041
  %v1495 = vmul.f32 %v1042, %v1042
  %v1496 = vmul.f32 %v1043, %v1043
  %v1497 = vmul.f32 %v1044, %v1044
  %v1498 = vmul.f32 %v1045, %v1045
  %v1499 = vmul.f32 %v1046, %v1046
  %v1500 = vmul.f32 %v1047, %v1047
  %v1501 = vmul.f32 %v1048, %v1048
  %v1502 = vmul.f32 %v1049, %v1049
  %v1503 = vmul.f32 %v1050, %v1050
  %v1504 = vmul.f32 %v1051, %v1051
  %v1505 = vmul.f32 %v1052, %v1052
  %v1506 = vmul.f32 %v1053, %v1053
  %v1507 = vmul.f32 %v1054, %v1054
  %v1508 = vmul.f32 %v1055, %v1055
  %v1509 = vmul.f32 %v1056, %v1056
  %v1510 = vmul.f32 %v1057, %v1057
  %v1511 = vmul.f32 %v1058, %v1058
  %v1512 = vmul.f32 %v1059, %v1059
  %v1513 = vmul.f32 %v1060, %v1060
  %v1514 = vmul.f32 %v1061, %v1061
  %v1515 = vmul.f32 %v1062, %v1062
  %v1516 = vmul.f32 %v1063, %v1063
  %v1517 = vmul.f32 %v1064, %v1064
  %v1518 = vmul.f32 %v1065, %v1065
  %v1519 = vmul.f32 %v1066, %v1066
  %v1520 = vmul.f32 %v1067, %v1067
  %v1521 = vmul.f32 %v1068, %v1068
  %v1522 = vmul.f32 %v1069, %v1069
  %v1523 = vmul.f32 %v1070, %v1070
  %v1524 = vmul.f32 %v1071, %v1071
  %v1525 = vmul.f32 %v1072, %v1072
  %v1526 = vmul.f32 %v1073, %v1073
  %v1527 = vmul.f32 %v1074, %v1074
  %v1528 = vmul.f32 %v1075, %v1075
  %v1529 = vmul.f32 %v1076, %v1076
  %v1530 = vmul.f32 %v1077, %v1077
  %v1531 = vmul.f32 %v1078, %v1078
  %v1532 = vmul.f32 %v1079, %v1079
  %v1533 = vmul.f32 %v1080, %v1080
  %v1534 = vadd.f32 %v1470, %v1471
  %v1535 = vadd.f32 %v1534, %v1472
  %v1536 = vadd.f32 %v1535, %v1473
  %v1537 = vadd.f32 %v1536, %v1474
  %v1538 = vadd.f32 %v1537, %v1475
  %v1539 = vadd.f32 %v1538, %v1476
  %v1540 = vadd.f32 %v1539, %v1477
  %v1541 = vadd.f32 %v1540, %v1478
  %v1542 = vadd.f32 %v1541, %v1479
  %v1543 = vadd.f32 %v1542, %v1480
  %v1544 = vadd.f32 %v1543, %v1481
  %v1545 = vadd.f32 %v1544, %v1482
  %v1546 = vadd.f32 %v1545, %v1483
  %v1547 = vadd.f32 %v1546, %v1484
  %v1548 = vadd.f32 %v1547, %v1485
  %v1549 = vadd.f32 %v1548, %v1486
  %v1550 = vadd.f32 %v1549, %v1487
  %v1551 = vadd.f32 %v1550, %v1488
  %v1552 = vadd.f32 %v1551, %v1489
  %v1553 = vadd.f32 %v1552, %v1490
  %v1554 = vadd.f32 %v1553, %v1491
  %v1555 = vadd.f32 %v1554, %v1492
  %v1556 = vadd.f32 %v1555, %v1493
  %v1557 = vadd.f32 %v1556, %v1494
  %v1558 = vadd.f32 %v1557, %v1495
  %v1559 = vadd.f32 %v1558, %v1496
  %v1560 = vadd.f32 %v1559, %v1497
  %v1561 = vadd.f32 %v1560, %v1498
  %v1562 = vadd.f32 %v1561, %v1499
  %v1563 = vadd.f32 %v1562, %v1500
  %v1564 = vadd.f32 %v1563, %v1501
  %v1565 = vadd.f32 %v1564, %v1502
  %v1566 = vadd.f32 %v1565, %v1503
  %v1567 = vadd.f32 %v1566, %v1504
  %v1568 = vadd.f32 %v1567, %v1505
  %v1569 = vadd.f32 %v1568, %v1506
  %v1570 = vadd.f32 %v1569, %v1507
  %v1571 = vadd.f32 %v1570, %v1508
  %v1572 = vadd.f32 %v1571, %v1509
  %v1573 = vadd.f32 %v1572, %v1510
  %v1574 = vadd.f32 %v1573, %v1511
  %v1575 = vadd.f32 %v1574, %v1512
  %v1576 = vadd.f32 %v1575, %v1513
  %v1577 = vadd.f32 %v1576, %v1514
  %v1578 = vadd.f32 %v1577, %v1515
  %v1579 = vadd.f32 %v1578, %v1516
  %v1580 = vadd.f32 %v1579, %v1517
  %v1581 = vadd.f32 %v1580, %v1518
  %v1582 = vadd.f32 %v1581, %v1519
  %v1583 = vadd.f32 %v1582, %v1520
  %v1584 = vadd.f32 %v1583, %v1521
  %v1585 = vadd.f32 %v1584, %v1522
  %v1586 = vadd.f32 %v1585, %v1523
  %v1587 = vadd.f32 %v1586, %v1524
  %v1588 = vadd.f32 %v1587, %v1525
  %v1589 = vadd.f32 %v1588, %v1526
  %v1590 = vadd.f32 %v1589, %v1527
  %v1591 = vadd.f32 %v1590, %v1528
  %v1592 = vadd.f32 %v1591, %v1529
  %v1593 = vadd.f32 %v1592, %v1530
  %v1594 = vadd.f32 %v1593, %v1531
  %v1595 = vadd.f32 %v1594, %v1532
  %v1596 = vadd.f32 %v1595, %v1533
  %v1597 = vrot.slane %v1596, 4
  %v1598 = vadd.f32 %v1596, %v1597
  %v1599 = vrot.slane %v1598, 2
  %v1600 = vadd.f32 %v1598, %v1599
  %v1601 = vrot.slane %v1600, 1
  %v1602 = vadd.f32 %v1600, %v1601
  %vm1603 = vcmask 1040384
  %v1604 = vsel %vm1603, %v1469, %v1602
  %1605 = vst [vmem:[%s4] sm:$0x3] %v1604
  // Predicated region
  $region14: #{_lambda_.5} parent=0 // pred_check
    _
  $region15: #{_lambda_.5} parent=0 // pred_check_branch
    %1607 = sbr.rel (0) target = $region17
  $region16: #{_lambda_.5} parent=0 // pred_region
    _
  $region17: #{_lambda_.5} parent=0 // pred_fallthru
    _
  // Predicated region
  $region18: #{_lambda_.5} parent=0 // pred_check
    _
  $region19: #{_lambda_.5} parent=0 // pred_check_branch
    %1609 = sbr.rel (0) target = $region21
  $region20: #{_lambda_.5} parent=0 // pred_region
    _
  $region21: #{_lambda_.5} parent=0 // pred_fallthru
    _
  // Predicated region
  $region22: #{_lambda_.5} parent=0 // pred_check
    _
  $region23: #{_lambda_.5} parent=0 // pred_check_branch
    %1611 = sbr.rel (0) target = $region25
  $region24: #{_lambda_.5} parent=0 // pred_region
    _
  $region25: #{_lambda_.5} parent=0 // pred_fallthru
    _
  // Predicated region
  $region26: #{_lambda_.5} parent=0 // pred_check
    _
  $region27: #{_lambda_.5} parent=0 // pred_check_branch
    %1613 = sbr.rel (0) target = $region29
  $region28: #{_lambda_.5} parent=0 // pred_region
    _
  $region29: #{_lambda_.5} parent=0 // pred_fallthru
    _

// kernel: _lambda_.6
$region0: #{_lambda_.6}
  #allocation0 [shape = 'u32[]', space=smem, size = 0x4, offset = 0x4, fixed_abs, tag = 'smem constant byte address 0x4 - core index']
  #allocation1 [shape = 'u32[144,128]{1,0:T(1,128)}', space=vmem, size = 0x12000, scoped, tag = 'internal scratch']
  #allocation2 [shape = 'bf16[18,18,128]{2,1,0:T(8,128)(2,1)}', space=vmem, size = 0x1b000, scoped, tag = 'scratch operand']
  %s0 = inlined_call_operand.vmem [shape: bf16[2,16,16,128], index: 0, kind: input, shape index: {}]
  %s1 = inlined_call_operand.vmem [shape: f32[1,128], index: 1, kind: input, shape index: {}]
  %s2 = inlined_call_operand.vmem [shape: f32[1,128], index: 2, kind: input, shape index: {}]
  %s3 = inlined_call_operand.vmem [shape: bf16[3,384,128], index: 3, kind: input, shape index: {}]
  %s4 = inlined_call_operand.vmem [shape: f32[1,128], index: 4, kind: input, shape index: {}]
  %s5 = inlined_call_operand.vmem [shape: bf16[2,16,16,128], index: 5, kind: output, shape index: {0}]
  %s6 = inlined_call_operand.vmem [shape: f32[2,2,128], index: 6, kind: output, shape index: {1}]
  %7 = xla_tuple %s5, %s6
  %s8 = sld [smem:[#allocation0]]
  $region61: #{_lambda_.6} parent=0
    _
  %s10 = ssub.s32 1, %s8
  %s11 = scalar_select 0, %s10, %s8
  loop: start=0, step=1, limit=4
  $region2: #{_lambda_.6} parent=0 // loop_pre_header
    _
  $region3: #{_lambda_.6} parent=0 // loop_header
    %s13 = sphi 0, %s17
    %p14 = scmp.ge.s32.totalorder %s13, 4
    %s23 = sphi 0, %s25
    %s26 = sphi 0, %s23
    %s27 = sphi 0, %s26
    %s43 = sphi 0, %s27
    %s47 = sphi 0, %s47
    %s49 = sphi 0, %s47
    %s50 = sphi 0, %s49
    %s64 = sphi 0, %s50
    %s68 = sphi 0, %s68
    %s70 = sphi 0, %s68
    %s71 = sphi 0, %s70
    %s85 = sphi 0, %s71
    %s89 = sphi 0, %s89
    %s91 = sphi 0, %s89
    %s92 = sphi 0, %s91
    %s106 = sphi 0, %s92
    %s110 = sphi 0, %s110
    %s112 = sphi 0, %s110
    %s113 = sphi 0, %s112
    %s127 = sphi 0, %s113
    %s133 = sphi 0, %s135
    %s136 = sphi 0, %s133
    %s137 = sphi 0, %s136
    %s153 = sphi 0, %s137
    %s159 = sphi 0, %s161
    %s162 = sphi 0, %s159
    %s163 = sphi 0, %s162
    %s179 = sphi 0, %s163
  $region4: #{_lambda_.6} parent=0 // loop_header_branch
    %16 = sbr.rel (%p14) target = $region8
  $region5: #{_lambda_.6} parent=0 // loop_body
    %s18 = ssub.s32 %s13, 1
    %s19 = ssub.s32 %s13, 2
    %s20 = sadd.s32 %s13, 1
    %s21 = ssub.s32 %s13, %s20
    %p22 = scmp.eq.s32.totalorder %s21, 0
    %s24 = sadd.s32 %s23, 1
    %s25 = scalar_select %p22, %s23, %s24
    %p28 = pneg %p22
    %p29 = scmp.eq.s32.totalorder %s13, 1
    %p30 = por %p28, %p29
    %p31 = scmp.ne.s32.totalorder %s23, %s26
    %p32 = scmp.eq.s32.totalorder %s13, 0
    %p33 = por %p31, %p32
    %p34 = scmp.ne.s32.totalorder %s23, %s26
    %p35 = scmp.eq.s32.totalorder %s18, 1
    %p36 = por %p34, %p35
    %p37 = scmp.ne.s32.totalorder %s26, %s27
    %p38 = scmp.eq.s32.totalorder %s18, 0
    %p39 = por %p37, %p38
    %p40 = scmp.ne.s32.totalorder %s26, %s27
    %p41 = scmp.eq.s32.totalorder %s19, 1
    %p42 = por %p40, %p41
    %p44 = scmp.ne.s32.totalorder %s27, %s43
    %p45 = scmp.eq.s32.totalorder %s19, 0
    %p46 = por %p44, %p45
    %s48 = sadd.s32 %s47, 1
    %p51 = scmp.eq.s32.totalorder %s13, 1
    %p52 = scmp.ne.s32.totalorder %s47, %s49
    %p53 = scmp.eq.s32.totalorder %s13, 0
    %p54 = por %p52, %p53
    %p55 = scmp.ne.s32.totalorder %s47, %s49
    %p56 = scmp.eq.s32.totalorder %s18, 1
    %p57 = por %p55, %p56
    %p58 = scmp.ne.s32.totalorder %s49, %s50
    %p59 = scmp.eq.s32.totalorder %s18, 0
    %p60 = por %p58, %p59
    %p61 = scmp.ne.s32.totalorder %s49, %s50
    %p62 = scmp.eq.s32.totalorder %s19, 1
    %p63 = por %p61, %p62
    %p65 = scmp.ne.s32.totalorder %s50, %s64
    %p66 = scmp.eq.s32.totalorder %s19, 0
    %p67 = por %p65, %p66
    %s69 = sadd.s32 %s68, 1
    %p72 = scmp.eq.s32.totalorder %s13, 1
    %p73 = scmp.ne.s32.totalorder %s68, %s70
    %p74 = scmp.eq.s32.totalorder %s13, 0
    %p75 = por %p73, %p74
    %p76 = scmp.ne.s32.totalorder %s68, %s70
    %p77 = scmp.eq.s32.totalorder %s18, 1
    %p78 = por %p76, %p77
    %p79 = scmp.ne.s32.totalorder %s70, %s71
    %p80 = scmp.eq.s32.totalorder %s18, 0
    %p81 = por %p79, %p80
    %p82 = scmp.ne.s32.totalorder %s70, %s71
    %p83 = scmp.eq.s32.totalorder %s19, 1
    %p84 = por %p82, %p83
    %p86 = scmp.ne.s32.totalorder %s71, %s85
    %p87 = scmp.eq.s32.totalorder %s19, 0
    %p88 = por %p86, %p87
    %s90 = sadd.s32 %s89, 1
    %p93 = scmp.eq.s32.totalorder %s13, 1
    %p94 = scmp.ne.s32.totalorder %s89, %s91
    %p95 = scmp.eq.s32.totalorder %s13, 0
    %p96 = por %p94, %p95
    %p97 = scmp.ne.s32.totalorder %s89, %s91
    %p98 = scmp.eq.s32.totalorder %s18, 1
    %p99 = por %p97, %p98
    %p100 = scmp.ne.s32.totalorder %s91, %s92
    %p101 = scmp.eq.s32.totalorder %s18, 0
    %p102 = por %p100, %p101
    %p103 = scmp.ne.s32.totalorder %s91, %s92
    %p104 = scmp.eq.s32.totalorder %s19, 1
    %p105 = por %p103, %p104
    %p107 = scmp.ne.s32.totalorder %s92, %s106
    %p108 = scmp.eq.s32.totalorder %s19, 0
    %p109 = por %p107, %p108
    %s111 = sadd.s32 %s110, 1
    %p114 = scmp.eq.s32.totalorder %s13, 1
    %p115 = scmp.ne.s32.totalorder %s110, %s112
    %p116 = scmp.eq.s32.totalorder %s13, 0
    %p117 = por %p115, %p116
    %p118 = scmp.ne.s32.totalorder %s110, %s112
    %p119 = scmp.eq.s32.totalorder %s18, 1
    %p120 = por %p118, %p119
    %p121 = scmp.ne.s32.totalorder %s112, %s113
    %p122 = scmp.eq.s32.totalorder %s18, 0
    %p123 = por %p121, %p122
    %p124 = scmp.ne.s32.totalorder %s112, %s113
    %p125 = scmp.eq.s32.totalorder %s19, 1
    %p126 = por %p124, %p125
    %p128 = scmp.ne.s32.totalorder %s113, %s127
    %p129 = scmp.eq.s32.totalorder %s19, 0
    %p130 = por %p128, %p129
    %s131 = ssub.s32 %s13, %s20
    %p132 = scmp.eq.s32.totalorder %s131, 0
    %s134 = sadd.s32 %s133, 1
    %s135 = scalar_select %p132, %s133, %s134
    %p138 = pneg %p132
    %p139 = scmp.eq.s32.totalorder %s13, 1
    %p140 = por %p138, %p139
    %p141 = scmp.ne.s32.totalorder %s133, %s136
    %p142 = scmp.eq.s32.totalorder %s13, 0
    %p143 = por %p141, %p142
    %p144 = scmp.ne.s32.totalorder %s133, %s136
    %p145 = scmp.eq.s32.totalorder %s18, 1
    %p146 = por %p144, %p145
    %p147 = scmp.ne.s32.totalorder %s136, %s137
    %p148 = scmp.eq.s32.totalorder %s18, 0
    %p149 = por %p147, %p148
    %p150 = scmp.ne.s32.totalorder %s136, %s137
    %p151 = scmp.eq.s32.totalorder %s19, 1
    %p152 = por %p150, %p151
    %p154 = scmp.ne.s32.totalorder %s137, %s153
    %p155 = scmp.eq.s32.totalorder %s19, 0
    %p156 = por %p154, %p155
    %s157 = ssub.s32 %s13, %s20
    %p158 = scmp.eq.s32.totalorder %s157, 0
    %s160 = sadd.s32 %s159, 1
    %s161 = scalar_select %p158, %s159, %s160
    %p164 = pneg %p158
    %p165 = scmp.eq.s32.totalorder %s13, 1
    %p166 = por %p164, %p165
    %p167 = scmp.ne.s32.totalorder %s159, %s162
    %p168 = scmp.eq.s32.totalorder %s13, 0
    %p169 = por %p167, %p168
    %p170 = scmp.ne.s32.totalorder %s159, %s162
    %p171 = scmp.eq.s32.totalorder %s18, 1
    %p172 = por %p170, %p171
    %p173 = scmp.ne.s32.totalorder %s162, %s163
    %p174 = scmp.eq.s32.totalorder %s18, 0
    %p175 = por %p173, %p174
    %p176 = scmp.ne.s32.totalorder %s162, %s163
    %p177 = scmp.eq.s32.totalorder %s19, 1
    %p178 = por %p176, %p177
    %p180 = scmp.ne.s32.totalorder %s163, %s179
    %p181 = scmp.eq.s32.totalorder %s19, 0
    %p182 = por %p180, %p181
    %p183 = scmp.le.s32.totalorder 1, %s13
    %p184 = scmp.lt.s32.totalorder %s13, 3
    %p185 = pnand %p183, %p184
    %p186 = pneg %p185
    // Predicated region
    $region9: #{_lambda_.6} parent=5 // pred_check
      _
    $region10: #{_lambda_.6} parent=5 // pred_check_branch
      %188 = sbr.rel (%p185) target = $region12
    $region11: #{_lambda_.6} parent=5 // pred_region
      %s189 = ssub.s32 %s13, 1
      // Predicated region
      $region13: #{_lambda_.6} parent=11 // pred_check
        %p190 = pneg %p60
      $region14: #{_lambda_.6} parent=11 // pred_check_branch
        %192 = sbr.rel (%p190) target = $region16
      $region15: #{_lambda_.6} parent=11 // pred_region
        _
      $region16: #{_lambda_.6} parent=11 // pred_fallthru
        _
      // Predicated region
      $region17: #{_lambda_.6} parent=11 // pred_check
        %p193 = pneg %p81
      $region18: #{_lambda_.6} parent=11 // pred_check_branch
        %195 = sbr.rel (%p193) target = $region20
      $region19: #{_lambda_.6} parent=11 // pred_region
        _
      $region20: #{_lambda_.6} parent=11 // pred_fallthru
        _
      // Predicated region
      $region21: #{_lambda_.6} parent=11 // pred_check
        %p196 = pneg %p102
      $region22: #{_lambda_.6} parent=11 // pred_check_branch
        %198 = sbr.rel (%p196) target = $region24
      $region23: #{_lambda_.6} parent=11 // pred_region
        _
      $region24: #{_lambda_.6} parent=11 // pred_fallthru
        _
      // Predicated region
      $region25: #{_lambda_.6} parent=11 // pred_check
        %p199 = pneg %p123
      $region26: #{_lambda_.6} parent=11 // pred_check_branch
        %201 = sbr.rel (%p199) target = $region28
      $region27: #{_lambda_.6} parent=11 // pred_region
        _
      $region28: #{_lambda_.6} parent=11 // pred_fallthru
        _
    $region12: #{_lambda_.6} parent=5 // pred_fallthru
      _
    %p202 = scmp.lt.s32.totalorder %s13, 2
    // Predicated region
    $region29: #{_lambda_.6} parent=5 // pred_check
      %p203 = pneg %p202
    $region30: #{_lambda_.6} parent=5 // pred_check_branch
      %205 = sbr.rel (%p203) target = $region32
    $region31: #{_lambda_.6} parent=5 // pred_region
      // Predicated region
      $region33: #{_lambda_.6} parent=31 // pred_check
        %p206 = pneg %p33
      $region34: #{_lambda_.6} parent=31 // pred_check_branch
        %208 = sbr.rel (%p206) target = $region36
      $region35: #{_lambda_.6} parent=31 // pred_region
        %p209 = scmp.lt.s32.totalorder %s13, 1
        %s210 = scalar_select %p209, %s13, 1
        %s211 = smul.addr %s210, 32
        %s212 = smul.addr %s211, 4
        %s213 = scalar_lea.vmem %s0, %s212
      $region36: #{_lambda_.6} parent=31 // pred_fallthru
        _
    $region32: #{_lambda_.6} parent=5 // pred_fallthru
      _
    %p214 = scmp.le.s32.totalorder 1, %s13
    %p215 = scmp.lt.s32.totalorder %s13, 3
    %p216 = pnand %p214, %p215
    %p217 = pneg %p216
    // Predicated region
    $region37: #{_lambda_.6} parent=5 // pred_check
      _
    $region38: #{_lambda_.6} parent=5 // pred_check_branch
      %219 = sbr.rel (%p216) target = $region40
    $region39: #{_lambda_.6} parent=5 // pred_region
      %s220 = ssub.s32 %s13, 1
      %p221 = scmp.lt.s32.totalorder %s18, 1
      %s222 = scalar_select %p221, %s18, 1
      %s223 = smul.addr %s222, 32
      %s224 = smul.addr %s223, 4
      %s225 = scalar_lea.vmem %s0, %s224
      %p226 = pneg %p39
      %p227 = pneg %p36
      %p228 = pneg %p60
      %p229 = pneg %p57
      %p230 = pneg %p81
      %p231 = pneg %p78
      %p232 = pneg %p102
      %p233 = pneg %p99
      %p234 = pneg %p123
      %p235 = pneg %p120
      %p236 = pneg %p149
      %p237 = pneg %p146
      %p238 = scmp.lt.s32.totalorder %s18, 1
      %s239 = scalar_select %p238, %s18, 1
      %s240 = smul.addr %s239, 32
      %s241 = smul.addr %s240, 4
      %s242 = scalar_lea.vmem %s5, %s241
      %p243 = pneg %p175
      %p244 = pneg %p172
      %p245 = scmp.lt.s32.totalorder %s18, 1
      %s246 = scalar_select %p245, %s18, 1
      %s247 = smul.addr %s246, 2
      %s248 = scalar_lea.vmem %s6, %s247
      %p249 = scmp.lt.s32.totalorder %s18, 1
      %s250 = scalar_select %p249, %s18, 1
      %s251 = smul.addr %s250, 32
      %s252 = smul.addr %s251, 4
      %s253 = scalar_lea.vmem %s0, %s252
      %p254 = scmp.lt.s32.totalorder %s18, 1
      %s255 = scalar_select %p254, %s18, 1
      %s256 = smul.addr %s255, 32
      %s257 = smul.addr %s256, 4
      %s258 = scalar_lea.vmem %s5, %s257
      %p259 = scmp.lt.s32.totalorder %s18, 1
      %s260 = scalar_select %p259, %s18, 1
      %s261 = smul.addr %s260, 2
      %s262 = scalar_lea.vmem %s6, %s261
      %v264 = vld [vmem:[%s253] sm:$0xf]
      %v265 = vld [vmem:[%s253 + $0x4] sm:$0xf]
      %v266 = vld [vmem:[%s253 + $0x8] sm:$0xf]
      %v267 = vld [vmem:[%s253 + $0xc] sm:$0xf]
      %v268 = vld [vmem:[%s253 + $0x10] sm:$0xf]
      %v269 = vld [vmem:[%s253 + $0x14] sm:$0xf]
      %v270 = vld [vmem:[%s253 + $0x18] sm:$0xf]
      %v271 = vld [vmem:[%s253 + $0x1c] sm:$0xf]
      %v272 = vld [vmem:[%s253 + $0x20] sm:$0xf]
      %v273 = vld [vmem:[%s253 + $0x24] sm:$0xf]
      %v274 = vld [vmem:[%s253 + $0x28] sm:$0xf]
      %v275 = vld [vmem:[%s253 + $0x2c] sm:$0xf]
      %v276 = vld [vmem:[%s253 + $0x30] sm:$0xf]
      %v277 = vld [vmem:[%s253 + $0x34] sm:$0xf]
      %v278 = vld [vmem:[%s253 + $0x38] sm:$0xf]
      %v279 = vld [vmem:[%s253 + $0x3c] sm:$0xf]
      %v280 = vld [vmem:[%s253 + $0x40] sm:$0xf]
      %v281 = vld [vmem:[%s253 + $0x44] sm:$0xf]
      %v282 = vld [vmem:[%s253 + $0x48] sm:$0xf]
      %v283 = vld [vmem:[%s253 + $0x4c] sm:$0xf]
      %v284 = vld [vmem:[%s253 + $0x50] sm:$0xf]
      %v285 = vld [vmem:[%s253 + $0x54] sm:$0xf]
      %v286 = vld [vmem:[%s253 + $0x58] sm:$0xf]
      %v287 = vld [vmem:[%s253 + $0x5c] sm:$0xf]
      %v288 = vld [vmem:[%s253 + $0x60] sm:$0xf]
      %v289 = vld [vmem:[%s253 + $0x64] sm:$0xf]
      %v290 = vld [vmem:[%s253 + $0x68] sm:$0xf]
      %v291 = vld [vmem:[%s253 + $0x6c] sm:$0xf]
      %v292 = vld [vmem:[%s253 + $0x70] sm:$0xf]
      %v293 = vld [vmem:[%s253 + $0x74] sm:$0xf]
      %v294 = vld [vmem:[%s253 + $0x78] sm:$0xf]
      %v295 = vld [vmem:[%s253 + $0x7c] sm:$0xf]
      %v296 = vunpack.c.l.bf16 %v264
      %v297 = vunpack.c.l.bf16 %v265
      %v298 = vunpack.c.l.bf16 %v266
      %v299 = vunpack.c.l.bf16 %v267
      %v300 = vunpack.c.l.bf16 %v268
      %v301 = vunpack.c.l.bf16 %v269
      %v302 = vunpack.c.l.bf16 %v270
      %v303 = vunpack.c.l.bf16 %v271
      %v304 = vunpack.c.l.bf16 %v272
      %v305 = vunpack.c.l.bf16 %v273
      %v306 = vunpack.c.l.bf16 %v274
      %v307 = vunpack.c.l.bf16 %v275
      %v308 = vunpack.c.l.bf16 %v276
      %v309 = vunpack.c.l.bf16 %v277
      %v310 = vunpack.c.l.bf16 %v278
      %v311 = vunpack.c.l.bf16 %v279
      %v312 = vunpack.c.l.bf16 %v280
      %v313 = vunpack.c.l.bf16 %v281
      %v314 = vunpack.c.l.bf16 %v282
      %v315 = vunpack.c.l.bf16 %v283
      %v316 = vunpack.c.l.bf16 %v284
      %v317 = vunpack.c.l.bf16 %v285
      %v318 = vunpack.c.l.bf16 %v286
      %v319 = vunpack.c.l.bf16 %v287
      %v320 = vunpack.c.l.bf16 %v288
      %v321 = vunpack.c.l.bf16 %v289
      %v322 = vunpack.c.l.bf16 %v290
      %v323 = vunpack.c.l.bf16 %v291
      %v324 = vunpack.c.l.bf16 %v292
      %v325 = vunpack.c.l.bf16 %v293
      %v326 = vunpack.c.l.bf16 %v294
      %v327 = vunpack.c.l.bf16 %v295
      %v328 = vld [vmem:[%s1] sm:$0x1]
      %v330 = vlaneseq
      %v331 = vshrl.u32 %v330, 7
      %v332 = vsub.s32 0, %v331
      %v333 = vrot.slane %v328, %v332
      %v335 = vmul.f32 %v296, %v333
      %v336 = vmul.f32 %v297, %v333
      %v337 = vmul.f32 %v298, %v333
      %v338 = vmul.f32 %v299, %v333
      %v339 = vmul.f32 %v300, %v333
      %v340 = vmul.f32 %v301, %v333
      %v341 = vmul.f32 %v302, %v333
      %v342 = vmul.f32 %v303, %v333
      %v343 = vmul.f32 %v304, %v333
      %v344 = vmul.f32 %v305, %v333
      %v345 = vmul.f32 %v306, %v333
      %v346 = vmul.f32 %v307, %v333
      %v347 = vmul.f32 %v308, %v333
      %v348 = vmul.f32 %v309, %v333
      %v349 = vmul.f32 %v310, %v333
      %v350 = vmul.f32 %v311, %v333
      %v351 = vmul.f32 %v312, %v333
      %v352 = vmul.f32 %v313, %v333
      %v353 = vmul.f32 %v314, %v333
      %v354 = vmul.f32 %v315, %v333
      %v355 = vmul.f32 %v316, %v333
      %v356 = vmul.f32 %v317, %v333
      %v357 = vmul.f32 %v318, %v333
      %v358 = vmul.f32 %v319, %v333
      %v359 = vmul.f32 %v320, %v333
      %v360 = vmul.f32 %v321, %v333
      %v361 = vmul.f32 %v322, %v333
      %v362 = vmul.f32 %v323, %v333
      %v363 = vmul.f32 %v324, %v333
      %v364 = vmul.f32 %v325, %v333
      %v365 = vmul.f32 %v326, %v333
      %v366 = vmul.f32 %v327, %v333
      %v367 = vld [vmem:[%s2] sm:$0x1]
      %v369 = vlaneseq
      %v370 = vshrl.u32 %v369, 7
      %v371 = vsub.s32 0, %v370
      %v372 = vrot.slane %v367, %v371
      %v374 = vadd.f32 %v335, %v372
      %v375 = vadd.f32 %v336, %v372
      %v376 = vadd.f32 %v337, %v372
      %v377 = vadd.f32 %v338, %v372
      %v378 = vadd.f32 %v339, %v372
      %v379 = vadd.f32 %v340, %v372
      %v380 = vadd.f32 %v341, %v372
      %v381 = vadd.f32 %v342, %v372
      %v382 = vadd.f32 %v343, %v372
      %v383 = vadd.f32 %v344, %v372
      %v384 = vadd.f32 %v345, %v372
      %v385 = vadd.f32 %v346, %v372
      %v386 = vadd.f32 %v347, %v372
      %v387 = vadd.f32 %v348, %v372
      %v388 = vadd.f32 %v349, %v372
      %v389 = vadd.f32 %v350, %v372
      %v390 = vadd.f32 %v351, %v372
      %v391 = vadd.f32 %v352, %v372
      %v392 = vadd.f32 %v353, %v372
      %v393 = vadd.f32 %v354, %v372
      %v394 = vadd.f32 %v355, %v372
      %v395 = vadd.f32 %v356, %v372
      %v396 = vadd.f32 %v357, %v372
      %v397 = vadd.f32 %v358, %v372
      %v398 = vadd.f32 %v359, %v372
      %v399 = vadd.f32 %v360, %v372
      %v400 = vadd.f32 %v361, %v372
      %v401 = vadd.f32 %v362, %v372
      %v402 = vadd.f32 %v363, %v372
      %v403 = vadd.f32 %v364, %v372
      %v404 = vadd.f32 %v365, %v372
      %v405 = vadd.f32 %v366, %v372
      %v406 = vpack.c.bf16 %v375, %v374
      %v407 = vpack.c.bf16 %v377, %v376
      %v408 = vpack.c.bf16 %v379, %v378
      %v409 = vpack.c.bf16 %v381, %v380
      %v410 = vpack.c.bf16 %v383, %v382
      %v411 = vpack.c.bf16 %v385, %v384
      %v412 = vpack.c.bf16 %v387, %v386
      %v413 = vpack.c.bf16 %v389, %v388
      %v414 = vpack.c.bf16 %v391, %v390
      %v415 = vpack.c.bf16 %v393, %v392
      %v416 = vpack.c.bf16 %v395, %v394
      %v417 = vpack.c.bf16 %v397, %v396
      %v418 = vpack.c.bf16 %v399, %v398
      %v419 = vpack.c.bf16 %v401, %v400
      %v420 = vpack.c.bf16 %v403, %v402
      %v421 = vpack.c.bf16 %v405, %v404
      %v423 = vshrl.u32 %v406, 16
      %v425 = vrot.slane %v423, 7
      %v426 = vshll.u32 %v406, 16
      %v428 = vor.u32 %v425, %v426
      %v430 = vshrl.u32 %v407, 16
      %v432 = vrot.slane %v430, 7
      %v433 = vshll.u32 %v407, 16
      %v435 = vor.u32 %v432, %v433
      %v437 = vshrl.u32 %v408, 16
      %v439 = vrot.slane %v437, 7
      %v440 = vshll.u32 %v408, 16
      %v442 = vor.u32 %v439, %v440
      %v444 = vshrl.u32 %v409, 16
      %v446 = vrot.slane %v444, 7
      %v447 = vshll.u32 %v409, 16
      %v449 = vor.u32 %v446, %v447
      %v451 = vshrl.u32 %v410, 16
      %v453 = vrot.slane %v451, 7
      %v454 = vshll.u32 %v410, 16
      %v456 = vor.u32 %v453, %v454
      %v458 = vshrl.u32 %v411, 16
      %v460 = vrot.slane %v458, 7
      %v461 = vshll.u32 %v411, 16
      %v463 = vor.u32 %v460, %v461
      %v465 = vshrl.u32 %v412, 16
      %v467 = vrot.slane %v465, 7
      %v468 = vshll.u32 %v412, 16
      %v470 = vor.u32 %v467, %v468
      %v472 = vshrl.u32 %v413, 16
      %v474 = vrot.slane %v472, 7
      %v475 = vshll.u32 %v413, 16
      %v477 = vor.u32 %v474, %v475
      %v479 = vshrl.u32 %v414, 16
      %v481 = vrot.slane %v479, 7
      %v482 = vshll.u32 %v414, 16
      %v484 = vor.u32 %v481, %v482
      %v486 = vshrl.u32 %v415, 16
      %v488 = vrot.slane %v486, 7
      %v489 = vshll.u32 %v415, 16
      %v491 = vor.u32 %v488, %v489
      %v493 = vshrl.u32 %v416, 16
      %v495 = vrot.slane %v493, 7
      %v496 = vshll.u32 %v416, 16
      %v498 = vor.u32 %v495, %v496
      %v500 = vshrl.u32 %v417, 16
      %v502 = vrot.slane %v500, 7
      %v503 = vshll.u32 %v417, 16
      %v505 = vor.u32 %v502, %v503
      %v507 = vshrl.u32 %v418, 16
      %v509 = vrot.slane %v507, 7
      %v510 = vshll.u32 %v418, 16
      %v512 = vor.u32 %v509, %v510
      %v514 = vshrl.u32 %v419, 16
      %v516 = vrot.slane %v514, 7
      %v517 = vshll.u32 %v419, 16
      %v519 = vor.u32 %v516, %v517
      %v521 = vshrl.u32 %v420, 16
      %v523 = vrot.slane %v521, 7
      %v524 = vshll.u32 %v420, 16
      %v526 = vor.u32 %v523, %v524
      %v528 = vshrl.u32 %v421, 16
      %v530 = vrot.slane %v528, 7
      %v531 = vshll.u32 %v421, 16
      %v533 = vor.u32 %v530, %v531
      %vm566 = vcmask 1040384
      %vm567 = vsmask.f32 256
      %vm568 = vmand %vm566, %vm567
      %v569 = vsel %vm568, 0, %v428
      %v570 = vsel %vm568, 0, %v435
      %v571 = vsel %vm568, 0, %v442
      %v572 = vsel %vm568, 0, %v449
      %v573 = vsel %vm568, 0, %v456
      %v574 = vsel %vm568, 0, %v463
      %v575 = vsel %vm568, 0, %v470
      %v576 = vsel %vm568, 0, %v477
      %v577 = vsel %vm568, 0, %v484
      %v578 = vsel %vm568, 0, %v491
      %v579 = vsel %vm568, 0, %v498
      %v580 = vsel %vm568, 0, %v505
      %v581 = vsel %vm568, 0, %v512
      %v582 = vsel %vm568, 0, %v519
      %v583 = vsel %vm568, 0, %v526
      %v584 = vsel %vm568, 0, %v533
      %v585 = vsel %vm568, %v425, 0
      %v586 = vsel %vm568, %v432, 0
      %v587 = vsel %vm568, %v439, 0
      %v588 = vsel %vm568, %v446, 0
      %v589 = vsel %vm568, %v453, 0
      %v590 = vsel %vm568, %v460, 0
      %v591 = vsel %vm568, %v467, 0
      %v592 = vsel %vm568, %v474, 0
      %v593 = vsel %vm568, %v481, 0
      %v594 = vsel %vm568, %v488, 0
      %v595 = vsel %vm568, %v495, 0
      %v596 = vsel %vm568, %v502, 0
      %v597 = vsel %vm568, %v509, 0
      %v598 = vsel %vm568, %v516, 0
      %v599 = vsel %vm568, %v523, 0
      %v600 = vsel %vm568, %v530, 0
      %v634 = vunpack.c.l.b16 0
      %v635 = vunpack.c.h.b16 0
      %v636 = vunpack.c.l.b16 %v569
      %v637 = vunpack.c.h.b16 %v569
      %v638 = vunpack.c.l.b16 %v585
      %v639 = vunpack.c.l.b16 %v570
      %v640 = vunpack.c.h.b16 %v570
      %v641 = vunpack.c.l.b16 %v586
      %v642 = vunpack.c.l.b16 %v571
      %v643 = vunpack.c.h.b16 %v571
      %v644 = vunpack.c.l.b16 %v587
      %v645 = vunpack.c.l.b16 %v572
      %v646 = vunpack.c.h.b16 %v572
      %v647 = vunpack.c.l.b16 %v588
      %v648 = vunpack.c.l.b16 %v573
      %v649 = vunpack.c.h.b16 %v573
      %v650 = vunpack.c.l.b16 %v589
      %v651 = vunpack.c.l.b16 %v574
      %v652 = vunpack.c.h.b16 %v574
      %v653 = vunpack.c.l.b16 %v590
      %v654 = vunpack.c.l.b16 %v575
      %v655 = vunpack.c.h.b16 %v575
      %v656 = vunpack.c.l.b16 %v591
      %v657 = vunpack.c.l.b16 %v576
      %v658 = vunpack.c.h.b16 %v576
      %v659 = vunpack.c.l.b16 %v592
      %v660 = vunpack.c.l.b16 %v577
      %v661 = vunpack.c.h.b16 %v577
      %v662 = vunpack.c.l.b16 %v593
      %v663 = vunpack.c.l.b16 %v578
      %v664 = vunpack.c.h.b16 %v578
      %v665 = vunpack.c.l.b16 %v594
      %v666 = vunpack.c.l.b16 %v579
      %v667 = vunpack.c.h.b16 %v579
      %v668 = vunpack.c.l.b16 %v595
      %v669 = vunpack.c.l.b16 %v580
      %v670 = vunpack.c.h.b16 %v580
      %v671 = vunpack.c.l.b16 %v596
      %v672 = vunpack.c.l.b16 %v581
      %v673 = vunpack.c.h.b16 %v581
      %v674 = vunpack.c.l.b16 %v597
      %v675 = vunpack.c.l.b16 %v582
      %v676 = vunpack.c.h.b16 %v582
      %v677 = vunpack.c.l.b16 %v598
      %v678 = vunpack.c.l.b16 %v583
      %v679 = vunpack.c.h.b16 %v583
      %v680 = vunpack.c.l.b16 %v599
      %v681 = vunpack.c.l.b16 %v584
      %v682 = vunpack.c.h.b16 %v584
      %v683 = vunpack.c.l.b16 %v600
      %v684 = vpack.c.b16 %v634, %v634
      %v685 = vpack.c.b16 %v635, %v635
      %v686 = vpack.c.b16 %v636, %v636
      %v687 = vpack.c.b16 %v637, %v637
      %v688 = vpack.c.b16 %v638, %v638
      %v689 = vpack.c.b16 %v639, %v639
      %v690 = vpack.c.b16 %v640, %v640
      %v691 = vpack.c.b16 %v641, %v641
      %v692 = vpack.c.b16 %v642, %v642
      %v693 = vpack.c.b16 %v643, %v643
      %v694 = vpack.c.b16 %v644, %v644
      %v695 = vpack.c.b16 %v645, %v645
      %v696 = vpack.c.b16 %v646, %v646
      %v697 = vpack.c.b16 %v647, %v647
      %v698 = vpack.c.b16 %v648, %v648
      %v699 = vpack.c.b16 %v649, %v649
      %v700 = vpack.c.b16 %v650, %v650
      %v701 = vpack.c.b16 %v651, %v651
      %v702 = vpack.c.b16 %v652, %v652
      %v703 = vpack.c.b16 %v653, %v653
      %v704 = vpack.c.b16 %v654, %v654
      %v705 = vpack.c.b16 %v655, %v655
      %v706 = vpack.c.b16 %v656, %v656
      %v707 = vpack.c.b16 %v657, %v657
      %v708 = vpack.c.b16 %v658, %v658
      %v709 = vpack.c.b16 %v659, %v659
      %v710 = vpack.c.b16 %v660, %v660
      %v711 = vpack.c.b16 %v661, %v661
      %v712 = vpack.c.b16 %v662, %v662
      %v713 = vpack.c.b16 %v663, %v663
      %v714 = vpack.c.b16 %v664, %v664
      %v715 = vpack.c.b16 %v665, %v665
      %v716 = vpack.c.b16 %v666, %v666
      %v717 = vpack.c.b16 %v667, %v667
      %v718 = vpack.c.b16 %v668, %v668
      %v719 = vpack.c.b16 %v669, %v669
      %v720 = vpack.c.b16 %v670, %v670
      %v721 = vpack.c.b16 %v671, %v671
      %v722 = vpack.c.b16 %v672, %v672
      %v723 = vpack.c.b16 %v673, %v673
      %v724 = vpack.c.b16 %v674, %v674
      %v725 = vpack.c.b16 %v675, %v675
      %v726 = vpack.c.b16 %v676, %v676
      %v727 = vpack.c.b16 %v677, %v677
      %v728 = vpack.c.b16 %v678, %v678
      %v729 = vpack.c.b16 %v679, %v679
      %v730 = vpack.c.b16 %v680, %v680
      %v731 = vpack.c.b16 %v681, %v681
      %v732 = vpack.c.b16 %v682, %v682
      %v733 = vpack.c.b16 %v683, %v683
      %784 = vst [vmem:[#allocation2] sm:$0xf] %v684
      %785 = vst [vmem:[#allocation2 + $0x4] sm:$0xf] %v685
      %786 = vst [vmem:[#allocation2 + $0x8] sm:$0x1] %v684
      %787 = vst [vmem:[#allocation2 + $0xc] sm:$0xf] %v686
      %788 = vst [vmem:[#allocation2 + $0x10] sm:$0xf] %v687
      %789 = vst [vmem:[#allocation2 + $0x14] sm:$0x1] %v688
      %790 = vst [vmem:[#allocation2 + $0x18] sm:$0xf] %v689
      %791 = vst [vmem:[#allocation2 + $0x1c] sm:$0xf] %v690
      %792 = vst [vmem:[#allocation2 + $0x20] sm:$0x1] %v691
      %793 = vst [vmem:[#allocation2 + $0x24] sm:$0xf] %v692
      %794 = vst [vmem:[#allocation2 + $0x28] sm:$0xf] %v693
      %795 = vst [vmem:[#allocation2 + $0x2c] sm:$0x1] %v694
      %796 = vst [vmem:[#allocation2 + $0x30] sm:$0xf] %v695
      %797 = vst [vmem:[#allocation2 + $0x34] sm:$0xf] %v696
      %798 = vst [vmem:[#allocation2 + $0x38] sm:$0x1] %v697
      %799 = vst [vmem:[#allocation2 + $0x3c] sm:$0xf] %v698
      %800 = vst [vmem:[#allocation2 + $0x40] sm:$0xf] %v699
      %801 = vst [vmem:[#allocation2 + $0x44] sm:$0x1] %v700
      %802 = vst [vmem:[#allocation2 + $0x48] sm:$0xf] %v701
      %803 = vst [vmem:[#allocation2 + $0x4c] sm:$0xf] %v702
      %804 = vst [vmem:[#allocation2 + $0x50] sm:$0x1] %v703
      %805 = vst [vmem:[#allocation2 + $0x54] sm:$0xf] %v704
      %806 = vst [vmem:[#allocation2 + $0x58] sm:$0xf] %v705
      %807 = vst [vmem:[#allocation2 + $0x5c] sm:$0x1] %v706
      %808 = vst [vmem:[#allocation2 + $0x60] sm:$0xf] %v707
      %809 = vst [vmem:[#allocation2 + $0x64] sm:$0xf] %v708
      %810 = vst [vmem:[#allocation2 + $0x68] sm:$0x1] %v709
      %811 = vst [vmem:[#allocation2 + $0x6c] sm:$0xf] %v710
      %812 = vst [vmem:[#allocation2 + $0x70] sm:$0xf] %v711
      %813 = vst [vmem:[#allocation2 + $0x74] sm:$0x1] %v712
      %814 = vst [vmem:[#allocation2 + $0x78] sm:$0xf] %v713
      %815 = vst [vmem:[#allocation2 + $0x7c] sm:$0xf] %v714
      %816 = vst [vmem:[#allocation2 + $0x80] sm:$0x1] %v715
      %817 = vst [vmem:[#allocation2 + $0x84] sm:$0xf] %v716
      %818 = vst [vmem:[#allocation2 + $0x88] sm:$0xf] %v717
      %819 = vst [vmem:[#allocation2 + $0x8c] sm:$0x1] %v718
      %820 = vst [vmem:[#allocation2 + $0x90] sm:$0xf] %v719
      %821 = vst [vmem:[#allocation2 + $0x94] sm:$0xf] %v720
      %822 = vst [vmem:[#allocation2 + $0x98] sm:$0x1] %v721
      %823 = vst [vmem:[#allocation2 + $0x9c] sm:$0xf] %v722
      %824 = vst [vmem:[#allocation2 + $0xa0] sm:$0xf] %v723
      %825 = vst [vmem:[#allocation2 + $0xa4] sm:$0x1] %v724
      %826 = vst [vmem:[#allocation2 + $0xa8] sm:$0xf] %v725
      %827 = vst [vmem:[#allocation2 + $0xac] sm:$0xf] %v726
      %828 = vst [vmem:[#allocation2 + $0xb0] sm:$0x1] %v727
      %829 = vst [vmem:[#allocation2 + $0xb4] sm:$0xf] %v728
      %830 = vst [vmem:[#allocation2 + $0xb8] sm:$0xf] %v729
      %831 = vst [vmem:[#allocation2 + $0xbc] sm:$0x1] %v730
      %832 = vst [vmem:[#allocation2 + $0xc0] sm:$0xf] %v731
      %833 = vst [vmem:[#allocation2 + $0xc4] sm:$0xf] %v732
      %834 = vst [vmem:[#allocation2 + $0xc8] sm:$0x1] %v733
      %835 = vst [vmem:[#allocation2 + $0xcc] sm:$0xf] %v684
      %836 = vst [vmem:[#allocation2 + $0xd0] sm:$0xf] %v685
      %837 = vst [vmem:[#allocation2 + $0xd4] sm:$0x1] %v684
      %v838 = vld [vmem:[#allocation2] sm:$0xf]
      %v839 = vld [vmem:[#allocation2 + $0x4] sm:$0xf]
      %v840 = vld [vmem:[#allocation2 + $0x8] sm:$0x1]
      %v841 = vld [vmem:[#allocation2 + $0xc] sm:$0xf]
      %v842 = vld [vmem:[#allocation2 + $0x10] sm:$0xf]
      %v843 = vld [vmem:[#allocation2 + $0x14] sm:$0x1]
      %v844 = vld [vmem:[#allocation2 + $0x18] sm:$0xf]
      %v845 = vld [vmem:[#allocation2 + $0x1c] sm:$0xf]
      %v846 = vld [vmem:[#allocation2 + $0x20] sm:$0x1]
      %v847 = vld [vmem:[#allocation2 + $0x24] sm:$0xf]
      %v848 = vld [vmem:[#allocation2 + $0x28] sm:$0xf]
      %v849 = vld [vmem:[#allocation2 + $0x2c] sm:$0x1]
      %v850 = vld [vmem:[#allocation2 + $0x30] sm:$0xf]
      %v851 = vld [vmem:[#allocation2 + $0x34] sm:$0xf]
      %v852 = vld [vmem:[#allocation2 + $0x38] sm:$0x1]
      %v853 = vld [vmem:[#allocation2 + $0x3c] sm:$0xf]
      %v854 = vld [vmem:[#allocation2 + $0x40] sm:$0xf]
      %v855 = vld [vmem:[#allocation2 + $0x44] sm:$0x1]
      %v856 = vld [vmem:[#allocation2 + $0x48] sm:$0xf]
      %v857 = vld [vmem:[#allocation2 + $0x4c] sm:$0xf]
      %v858 = vld [vmem:[#allocation2 + $0x50] sm:$0x1]
      %v859 = vld [vmem:[#allocation2 + $0x54] sm:$0xf]
      %v860 = vld [vmem:[#allocation2 + $0x58] sm:$0xf]
      %v861 = vld [vmem:[#allocation2 + $0x5c] sm:$0x1]
      %v862 = vld [vmem:[#allocation2 + $0x60] sm:$0xf]
      %v863 = vld [vmem:[#allocation2 + $0x64] sm:$0xf]
      %v864 = vld [vmem:[#allocation2 + $0x68] sm:$0x1]
      %v865 = vld [vmem:[#allocation2 + $0x6c] sm:$0xf]
      %v866 = vld [vmem:[#allocation2 + $0x70] sm:$0xf]
      %v867 = vld [vmem:[#allocation2 + $0x74] sm:$0x1]
      %v868 = vld [vmem:[#allocation2 + $0x78] sm:$0xf]
      %v869 = vld [vmem:[#allocation2 + $0x7c] sm:$0xf]
      %v870 = vld [vmem:[#allocation2 + $0x80] sm:$0x1]
      %v871 = vld [vmem:[#allocation2 + $0x84] sm:$0xf]
      %v872 = vld [vmem:[#allocation2 + $0x88] sm:$0xf]
      %v873 = vld [vmem:[#allocation2 + $0x8c] sm:$0x1]
      %v874 = vld [vmem:[#allocation2 + $0x90] sm:$0xf]
      %v875 = vld [vmem:[#allocation2 + $0x94] sm:$0xf]
      %v876 = vld [vmem:[#allocation2 + $0x98] sm:$0x1]
      %v877 = vld [vmem:[#allocation2 + $0x9c] sm:$0xf]
      %v878 = vld [vmem:[#allocation2 + $0xa0] sm:$0xf]
      %v879 = vld [vmem:[#allocation2 + $0xa4] sm:$0x1]
      %v880 = vld [vmem:[#allocation2 + $0xa8] sm:$0xf]
      %v881 = vld [vmem:[#allocation2 + $0xac] sm:$0xf]
      %v882 = vld [vmem:[#allocation2 + $0xb0] sm:$0x1]
      %v883 = vld [vmem:[#allocation2 + $0xb4] sm:$0xf]
      %v884 = vld [vmem:[#allocation2 + $0xb8] sm:$0xf]
      %v885 = vld [vmem:[#allocation2 + $0xbc] sm:$0x1]
      %v918 = vunpack.c.l.b16 %v838
      %v919 = vunpack.c.l.b16 %v839
      %v920 = vunpack.c.l.b16 %v841
      %v921 = vunpack.c.l.b16 %v842
      %v922 = vunpack.c.l.b16 %v844
      %v923 = vunpack.c.l.b16 %v845
      %v924 = vunpack.c.l.b16 %v847
      %v925 = vunpack.c.l.b16 %v848
      %v926 = vunpack.c.l.b16 %v850
      %v927 = vunpack.c.l.b16 %v851
      %v928 = vunpack.c.l.b16 %v853
      %v929 = vunpack.c.l.b16 %v854
      %v930 = vunpack.c.l.b16 %v856
      %v931 = vunpack.c.l.b16 %v857
      %v932 = vunpack.c.l.b16 %v859
      %v933 = vunpack.c.l.b16 %v860
      %v934 = vunpack.c.l.b16 %v862
      %v935 = vunpack.c.l.b16 %v863
      %v936 = vunpack.c.l.b16 %v865
      %v937 = vunpack.c.l.b16 %v866
      %v938 = vunpack.c.l.b16 %v868
      %v939 = vunpack.c.l.b16 %v869
      %v940 = vunpack.c.l.b16 %v871
      %v941 = vunpack.c.l.b16 %v872
      %v942 = vunpack.c.l.b16 %v874
      %v943 = vunpack.c.l.b16 %v875
      %v944 = vunpack.c.l.b16 %v877
      %v945 = vunpack.c.l.b16 %v878
      %v946 = vunpack.c.l.b16 %v880
      %v947 = vunpack.c.l.b16 %v881
      %v948 = vunpack.c.l.b16 %v883
      %v949 = vunpack.c.l.b16 %v884
      %v950 = vpack.c.b16 %v919, %v918
      %v951 = vpack.c.b16 %v921, %v920
      %v952 = vpack.c.b16 %v923, %v922
      %v953 = vpack.c.b16 %v925, %v924
      %v954 = vpack.c.b16 %v927, %v926
      %v955 = vpack.c.b16 %v929, %v928
      %v956 = vpack.c.b16 %v931, %v930
      %v957 = vpack.c.b16 %v933, %v932
      %v958 = vpack.c.b16 %v935, %v934
      %v959 = vpack.c.b16 %v937, %v936
      %v960 = vpack.c.b16 %v939, %v938
      %v961 = vpack.c.b16 %v941, %v940
      %v962 = vpack.c.b16 %v943, %v942
      %v963 = vpack.c.b16 %v945, %v944
      %v964 = vpack.c.b16 %v947, %v946
      %v965 = vpack.c.b16 %v949, %v948
      %v998 = vunpack.c.l.b16 %v840
      %v999 = vunpack.c.l.b16 %v843
      %v1000 = vunpack.c.l.b16 %v846
      %v1001 = vunpack.c.l.b16 %v849
      %v1002 = vunpack.c.l.b16 %v852
      %v1003 = vunpack.c.l.b16 %v855
      %v1004 = vunpack.c.l.b16 %v858
      %v1005 = vunpack.c.l.b16 %v861
      %v1006 = vunpack.c.l.b16 %v864
      %v1007 = vunpack.c.l.b16 %v867
      %v1008 = vunpack.c.l.b16 %v870
      %v1009 = vunpack.c.l.b16 %v873
      %v1010 = vunpack.c.l.b16 %v876
      %v1011 = vunpack.c.l.b16 %v879
      %v1012 = vunpack.c.l.b16 %v882
      %v1013 = vunpack.c.l.b16 %v885
      %v1014 = vpack.c.b16 %v998, %v998
      %v1015 = vpack.c.b16 %v999, %v999
      %v1016 = vpack.c.b16 %v1000, %v1000
      %v1017 = vpack.c.b16 %v1001, %v1001
      %v1018 = vpack.c.b16 %v1002, %v1002
      %v1019 = vpack.c.b16 %v1003, %v1003
      %v1020 = vpack.c.b16 %v1004, %v1004
      %v1021 = vpack.c.b16 %v1005, %v1005
      %v1022 = vpack.c.b16 %v1006, %v1006
      %v1023 = vpack.c.b16 %v1007, %v1007
      %v1024 = vpack.c.b16 %v1008, %v1008
      %v1025 = vpack.c.b16 %v1009, %v1009
      %v1026 = vpack.c.b16 %v1010, %v1010
      %v1027 = vpack.c.b16 %v1011, %v1011
      %v1028 = vpack.c.b16 %v1012, %v1012
      %v1029 = vpack.c.b16 %v1013, %v1013
      %vm1030 = vsmask.f32 7424
      %v1032 = vshrl.u32 %v950, 16
      %v1034 = vshll.u32 %v950, 16
      %v1036 = vrot.slane %v1034, 1
      %v1037 = vor.u32 %v1032, %v1036
      %v1039 = vshll.u32 %v1014, 16
      %v1041 = vrot.slane %v1039, 1
      %v1042 = vsel %vm1030, %v1037, %v1041
      %v1044 = vshrl.u32 %v951, 16
      %v1046 = vshll.u32 %v951, 16
      %v1048 = vrot.slane %v1046, 1
      %v1049 = vor.u32 %v1044, %v1048
      %v1051 = vshll.u32 %v1015, 16
      %v1053 = vrot.slane %v1051, 1
      %v1054 = vsel %vm1030, %v1049, %v1053
      %v1056 = vshrl.u32 %v952, 16
      %v1058 = vshll.u32 %v952, 16
      %v1060 = vrot.slane %v1058, 1
      %v1061 = vor.u32 %v1056, %v1060
      %v1063 = vshll.u32 %v1016, 16
      %v1065 = vrot.slane %v1063, 1
      %v1066 = vsel %vm1030, %v1061, %v1065
      %v1068 = vshrl.u32 %v953, 16
      %v1070 = vshll.u32 %v953, 16
      %v1072 = vrot.slane %v1070, 1
      %v1073 = vor.u32 %v1068, %v1072
      %v1075 = vshll.u32 %v1017, 16
      %v1077 = vrot.slane %v1075, 1
      %v1078 = vsel %vm1030, %v1073, %v1077
      %v1080 = vshrl.u32 %v954, 16
      %v1082 = vshll.u32 %v954, 16
      %v1084 = vrot.slane %v1082, 1
      %v1085 = vor.u32 %v1080, %v1084
      %v1087 = vshll.u32 %v1018, 16
      %v1089 = vrot.slane %v1087, 1
      %v1090 = vsel %vm1030, %v1085, %v1089
      %v1092 = vshrl.u32 %v955, 16
      %v1094 = vshll.u32 %v955, 16
      %v1096 = vrot.slane %v1094, 1
      %v1097 = vor.u32 %v1092, %v1096
      %v1099 = vshll.u32 %v1019, 16
      %v1101 = vrot.slane %v1099, 1
      %v1102 = vsel %vm1030, %v1097, %v1101
      %v1104 = vshrl.u32 %v956, 16
      %v1106 = vshll.u32 %v956, 16
      %v1108 = vrot.slane %v1106, 1
      %v1109 = vor.u32 %v1104, %v1108
      %v1111 = vshll.u32 %v1020, 16
      %v1113 = vrot.slane %v1111, 1
      %v1114 = vsel %vm1030, %v1109, %v1113
      %v1116 = vshrl.u32 %v957, 16
      %v1118 = vshll.u32 %v957, 16
      %v1120 = vrot.slane %v1118, 1
      %v1121 = vor.u32 %v1116, %v1120
      %v1123 = vshll.u32 %v1021, 16
      %v1125 = vrot.slane %v1123, 1
      %v1126 = vsel %vm1030, %v1121, %v1125
      %v1128 = vshrl.u32 %v958, 16
      %v1130 = vshll.u32 %v958, 16
      %v1132 = vrot.slane %v1130, 1
      %v1133 = vor.u32 %v1128, %v1132
      %v1135 = vshll.u32 %v1022, 16
      %v1137 = vrot.slane %v1135, 1
      %v1138 = vsel %vm1030, %v1133, %v1137
      %v1140 = vshrl.u32 %v959, 16
      %v1142 = vshll.u32 %v959, 16
      %v1144 = vrot.slane %v1142, 1
      %v1145 = vor.u32 %v1140, %v1144
      %v1147 = vshll.u32 %v1023, 16
      %v1149 = vrot.slane %v1147, 1
      %v1150 = vsel %vm1030, %v1145, %v1149
      %v1152 = vshrl.u32 %v960, 16
      %v1154 = vshll.u32 %v960, 16
      %v1156 = vrot.slane %v1154, 1
      %v1157 = vor.u32 %v1152, %v1156
      %v1159 = vshll.u32 %v1024, 16
      %v1161 = vrot.slane %v1159, 1
      %v1162 = vsel %vm1030, %v1157, %v1161
      %v1164 = vshrl.u32 %v961, 16
      %v1166 = vshll.u32 %v961, 16
      %v1168 = vrot.slane %v1166, 1
      %v1169 = vor.u32 %v1164, %v1168
      %v1171 = vshll.u32 %v1025, 16
      %v1173 = vrot.slane %v1171, 1
      %v1174 = vsel %vm1030, %v1169, %v1173
      %v1176 = vshrl.u32 %v962, 16
      %v1178 = vshll.u32 %v962, 16
      %v1180 = vrot.slane %v1178, 1
      %v1181 = vor.u32 %v1176, %v1180
      %v1183 = vshll.u32 %v1026, 16
      %v1185 = vrot.slane %v1183, 1
      %v1186 = vsel %vm1030, %v1181, %v1185
      %v1188 = vshrl.u32 %v963, 16
      %v1190 = vshll.u32 %v963, 16
      %v1192 = vrot.slane %v1190, 1
      %v1193 = vor.u32 %v1188, %v1192
      %v1195 = vshll.u32 %v1027, 16
      %v1197 = vrot.slane %v1195, 1
      %v1198 = vsel %vm1030, %v1193, %v1197
      %v1200 = vshrl.u32 %v964, 16
      %v1202 = vshll.u32 %v964, 16
      %v1204 = vrot.slane %v1202, 1
      %v1205 = vor.u32 %v1200, %v1204
      %v1207 = vshll.u32 %v1028, 16
      %v1209 = vrot.slane %v1207, 1
      %v1210 = vsel %vm1030, %v1205, %v1209
      %v1212 = vshrl.u32 %v965, 16
      %v1214 = vshll.u32 %v965, 16
      %v1216 = vrot.slane %v1214, 1
      %v1217 = vor.u32 %v1212, %v1216
      %v1219 = vshll.u32 %v1029, 16
      %v1221 = vrot.slane %v1219, 1
      %v1222 = vsel %vm1030, %v1217, %v1221
      %vm1239 = vcmask 1046528
      %v1240 = vrot.slane %v950, 1
      %v1241 = vrot.slane %v1014, 1
      %v1242 = vsel %vm1239, %v1240, %v1241
      %v1243 = vrot.slane %v951, 1
      %v1244 = vrot.slane %v1015, 1
      %v1245 = vsel %vm1239, %v1243, %v1244
      %v1246 = vrot.slane %v952, 1
      %v1247 = vrot.slane %v1016, 1
      %v1248 = vsel %vm1239, %v1246, %v1247
      %v1249 = vrot.slane %v953, 1
      %v1250 = vrot.slane %v1017, 1
      %v1251 = vsel %vm1239, %v1249, %v1250
      %v1252 = vrot.slane %v954, 1
      %v1253 = vrot.slane %v1018, 1
      %v1254 = vsel %vm1239, %v1252, %v1253
      %v1255 = vrot.slane %v955, 1
      %v1256 = vrot.slane %v1019, 1
      %v1257 = vsel %vm1239, %v1255, %v1256
      %v1258 = vrot.slane %v956, 1
      %v1259 = vrot.slane %v1020, 1
      %v1260 = vsel %vm1239, %v1258, %v1259
      %v1261 = vrot.slane %v957, 1
      %v1262 = vrot.slane %v1021, 1
      %v1263 = vsel %vm1239, %v1261, %v1262
      %v1264 = vrot.slane %v958, 1
      %v1265 = vrot.slane %v1022, 1
      %v1266 = vsel %vm1239, %v1264, %v1265
      %v1267 = vrot.slane %v959, 1
      %v1268 = vrot.slane %v1023, 1
      %v1269 = vsel %vm1239, %v1267, %v1268
      %v1270 = vrot.slane %v960, 1
      %v1271 = vrot.slane %v1024, 1
      %v1272 = vsel %vm1239, %v1270, %v1271
      %v1273 = vrot.slane %v961, 1
      %v1274 = vrot.slane %v1025, 1
      %v1275 = vsel %vm1239, %v1273, %v1274
      %v1276 = vrot.slane %v962, 1
      %v1277 = vrot.slane %v1026, 1
      %v1278 = vsel %vm1239, %v1276, %v1277
      %v1279 = vrot.slane %v963, 1
      %v1280 = vrot.slane %v1027, 1
      %v1281 = vsel %vm1239, %v1279, %v1280
      %v1282 = vrot.slane %v964, 1
      %v1283 = vrot.slane %v1028, 1
      %v1284 = vsel %vm1239, %v1282, %v1283
      %v1285 = vrot.slane %v965, 1
      %v1286 = vrot.slane %v1029, 1
      %v1287 = vsel %vm1239, %v1285, %v1286
      %v1304 = vld [vmem:[%s3] sm:$0xf]
      %v1305 = vld [vmem:[%s3 + $0x4] sm:$0xf]
      %v1306 = vld [vmem:[%s3 + $0x8] sm:$0xf]
      %v1307 = vld [vmem:[%s3 + $0xc] sm:$0xf]
      %v1308 = vld [vmem:[%s3 + $0x10] sm:$0xf]
      %v1309 = vld [vmem:[%s3 + $0x14] sm:$0xf]
      %v1310 = vld [vmem:[%s3 + $0x18] sm:$0xf]
      %v1311 = vld [vmem:[%s3 + $0x1c] sm:$0xf]
      %v1312 = vld [vmem:[%s3 + $0x20] sm:$0xf]
      %v1313 = vld [vmem:[%s3 + $0x24] sm:$0xf]
      %v1314 = vld [vmem:[%s3 + $0x28] sm:$0xf]
      %v1315 = vld [vmem:[%s3 + $0x2c] sm:$0xf]
      %v1316 = vld [vmem:[%s3 + $0x30] sm:$0xf]
      %v1317 = vld [vmem:[%s3 + $0x34] sm:$0xf]
      %v1318 = vld [vmem:[%s3 + $0x38] sm:$0xf]
      %v1319 = vld [vmem:[%s3 + $0x3c] sm:$0xf]
      %v1320 = vld [vmem:[%s3 + $0x40] sm:$0xf]
      %v1321 = vld [vmem:[%s3 + $0x44] sm:$0xf]
      %v1322 = vld [vmem:[%s3 + $0x48] sm:$0xf]
      %v1323 = vld [vmem:[%s3 + $0x4c] sm:$0xf]
      %v1324 = vld [vmem:[%s3 + $0x50] sm:$0xf]
      %v1325 = vld [vmem:[%s3 + $0x54] sm:$0xf]
      %v1326 = vld [vmem:[%s3 + $0x58] sm:$0xf]
      %v1327 = vld [vmem:[%s3 + $0x5c] sm:$0xf]
      %v1328 = vld [vmem:[%s3 + $0x60] sm:$0xf]
      %v1329 = vld [vmem:[%s3 + $0x64] sm:$0xf]
      %v1330 = vld [vmem:[%s3 + $0x68] sm:$0xf]
      %v1331 = vld [vmem:[%s3 + $0x6c] sm:$0xf]
      %v1332 = vld [vmem:[%s3 + $0x70] sm:$0xf]
      %v1333 = vld [vmem:[%s3 + $0x74] sm:$0xf]
      %v1334 = vld [vmem:[%s3 + $0x78] sm:$0xf]
      %v1335 = vld [vmem:[%s3 + $0x7c] sm:$0xf]
      %v1336 = vld [vmem:[%s3 + $0x80] sm:$0xf]
      %v1337 = vld [vmem:[%s3 + $0x84] sm:$0xf]
      %v1338 = vld [vmem:[%s3 + $0x88] sm:$0xf]
      %v1339 = vld [vmem:[%s3 + $0x8c] sm:$0xf]
      %v1340 = vld [vmem:[%s3 + $0x90] sm:$0xf]
      %v1341 = vld [vmem:[%s3 + $0x94] sm:$0xf]
      %v1342 = vld [vmem:[%s3 + $0x98] sm:$0xf]
      %v1343 = vld [vmem:[%s3 + $0x9c] sm:$0xf]
      %v1344 = vld [vmem:[%s3 + $0xa0] sm:$0xf]
      %v1345 = vld [vmem:[%s3 + $0xa4] sm:$0xf]
      %v1346 = vld [vmem:[%s3 + $0xa8] sm:$0xf]
      %v1347 = vld [vmem:[%s3 + $0xac] sm:$0xf]
      %v1348 = vld [vmem:[%s3 + $0xb0] sm:$0xf]
      %v1349 = vld [vmem:[%s3 + $0xb4] sm:$0xf]
      %v1350 = vld [vmem:[%s3 + $0xb8] sm:$0xf]
      %v1351 = vld [vmem:[%s3 + $0xbc] sm:$0xf]
      %s1352 = scalar_lea.vmem [#allocation2], 12
      %v1353 = vld [vmem:[%s1352] sm:$0xf]
      %v1354 = vld [vmem:[%s1352 + $0x4] sm:$0xf]
      %v1355 = vld [vmem:[%s1352 + $0x8] sm:$0x1]
      %v1356 = vld [vmem:[%s1352 + $0xc] sm:$0xf]
      %v1357 = vld [vmem:[%s1352 + $0x10] sm:$0xf]
      %v1358 = vld [vmem:[%s1352 + $0x14] sm:$0x1]
      %v1359 = vld [vmem:[%s1352 + $0x18] sm:$0xf]
      %v1360 = vld [vmem:[%s1352 + $0x1c] sm:$0xf]
      %v1361 = vld [vmem:[%s1352 + $0x20] sm:$0x1]
      %v1362 = vld [vmem:[%s1352 + $0x24] sm:$0xf]
      %v1363 = vld [vmem:[%s1352 + $0x28] sm:$0xf]
      %v1364 = vld [vmem:[%s1352 + $0x2c] sm:$0x1]
      %v1365 = vld [vmem:[%s1352 + $0x30] sm:$0xf]
      %v1366 = vld [vmem:[%s1352 + $0x34] sm:$0xf]
      %v1367 = vld [vmem:[%s1352 + $0x38] sm:$0x1]
      %v1368 = vld [vmem:[%s1352 + $0x3c] sm:$0xf]
      %v1369 = vld [vmem:[%s1352 + $0x40] sm:$0xf]
      %v1370 = vld [vmem:[%s1352 + $0x44] sm:$0x1]
      %v1371 = vld [vmem:[%s1352 + $0x48] sm:$0xf]
      %v1372 = vld [vmem:[%s1352 + $0x4c] sm:$0xf]
      %v1373 = vld [vmem:[%s1352 + $0x50] sm:$0x1]
      %v1374 = vld [vmem:[%s1352 + $0x54] sm:$0xf]
      %v1375 = vld [vmem:[%s1352 + $0x58] sm:$0xf]
      %v1376 = vld [vmem:[%s1352 + $0x5c] sm:$0x1]
      %v1377 = vld [vmem:[%s1352 + $0x60] sm:$0xf]
      %v1378 = vld [vmem:[%s1352 + $0x64] sm:$0xf]
      %v1379 = vld [vmem:[%s1352 + $0x68] sm:$0x1]
      %v1380 = vld [vmem:[%s1352 + $0x6c] sm:$0xf]
      %v1381 = vld [vmem:[%s1352 + $0x70] sm:$0xf]
      %v1382 = vld [vmem:[%s1352 + $0x74] sm:$0x1]
      %v1383 = vld [vmem:[%s1352 + $0x78] sm:$0xf]
      %v1384 = vld [vmem:[%s1352 + $0x7c] sm:$0xf]
      %v1385 = vld [vmem:[%s1352 + $0x80] sm:$0x1]
      %v1386 = vld [vmem:[%s1352 + $0x84] sm:$0xf]
      %v1387 = vld [vmem:[%s1352 + $0x88] sm:$0xf]
      %v1388 = vld [vmem:[%s1352 + $0x8c] sm:$0x1]
      %v1389 = vld [vmem:[%s1352 + $0x90] sm:$0xf]
      %v1390 = vld [vmem:[%s1352 + $0x94] sm:$0xf]
      %v1391 = vld [vmem:[%s1352 + $0x98] sm:$0x1]
      %v1392 = vld [vmem:[%s1352 + $0x9c] sm:$0xf]
      %v1393 = vld [vmem:[%s1352 + $0xa0] sm:$0xf]
      %v1394 = vld [vmem:[%s1352 + $0xa4] sm:$0x1]
      %v1395 = vld [vmem:[%s1352 + $0xa8] sm:$0xf]
      %v1396 = vld [vmem:[%s1352 + $0xac] sm:$0xf]
      %v1397 = vld [vmem:[%s1352 + $0xb0] sm:$0x1]
      %v1398 = vld [vmem:[%s1352 + $0xb4] sm:$0xf]
      %v1399 = vld [vmem:[%s1352 + $0xb8] sm:$0xf]
      %v1400 = vld [vmem:[%s1352 + $0xbc] sm:$0x1]
      %v1433 = vunpack.c.l.b16 %v1353
      %v1434 = vunpack.c.l.b16 %v1354
      %v1435 = vunpack.c.l.b16 %v1356
      %v1436 = vunpack.c.l.b16 %v1357
      %v1437 = vunpack.c.l.b16 %v1359
      %v1438 = vunpack.c.l.b16 %v1360
      %v1439 = vunpack.c.l.b16 %v1362
      %v1440 = vunpack.c.l.b16 %v1363
      %v1441 = vunpack.c.l.b16 %v1365
      %v1442 = vunpack.c.l.b16 %v1366
      %v1443 = vunpack.c.l.b16 %v1368
      %v1444 = vunpack.c.l.b16 %v1369
      %v1445 = vunpack.c.l.b16 %v1371
      %v1446 = vunpack.c.l.b16 %v1372
      %v1447 = vunpack.c.l.b16 %v1374
      %v1448 = vunpack.c.l.b16 %v1375
      %v1449 = vunpack.c.l.b16 %v1377
      %v1450 = vunpack.c.l.b16 %v1378
      %v1451 = vunpack.c.l.b16 %v1380
      %v1452 = vunpack.c.l.b16 %v1381
      %v1453 = vunpack.c.l.b16 %v1383
      %v1454 = vunpack.c.l.b16 %v1384
      %v1455 = vunpack.c.l.b16 %v1386
      %v1456 = vunpack.c.l.b16 %v1387
      %v1457 = vunpack.c.l.b16 %v1389
      %v1458 = vunpack.c.l.b16 %v1390
      %v1459 = vunpack.c.l.b16 %v1392
      %v1460 = vunpack.c.l.b16 %v1393
      %v1461 = vunpack.c.l.b16 %v1395
      %v1462 = vunpack.c.l.b16 %v1396
      %v1463 = vunpack.c.l.b16 %v1398
      %v1464 = vunpack.c.l.b16 %v1399
      %v1465 = vpack.c.b16 %v1434, %v1433
      %v1466 = vpack.c.b16 %v1436, %v1435
      %v1467 = vpack.c.b16 %v1438, %v1437
      %v1468 = vpack.c.b16 %v1440, %v1439
      %v1469 = vpack.c.b16 %v1442, %v1441
      %v1470 = vpack.c.b16 %v1444, %v1443
      %v1471 = vpack.c.b16 %v1446, %v1445
      %v1472 = vpack.c.b16 %v1448, %v1447
      %v1473 = vpack.c.b16 %v1450, %v1449
      %v1474 = vpack.c.b16 %v1452, %v1451
      %v1475 = vpack.c.b16 %v1454, %v1453
      %v1476 = vpack.c.b16 %v1456, %v1455
      %v1477 = vpack.c.b16 %v1458, %v1457
      %v1478 = vpack.c.b16 %v1460, %v1459
      %v1479 = vpack.c.b16 %v1462, %v1461
      %v1480 = vpack.c.b16 %v1464, %v1463
      %v1513 = vunpack.c.l.b16 %v1355
      %v1514 = vunpack.c.l.b16 %v1358
      %v1515 = vunpack.c.l.b16 %v1361
      %v1516 = vunpack.c.l.b16 %v1364
      %v1517 = vunpack.c.l.b16 %v1367
      %v1518 = vunpack.c.l.b16 %v1370
      %v1519 = vunpack.c.l.b16 %v1373
      %v1520 = vunpack.c.l.b16 %v1376
      %v1521 = vunpack.c.l.b16 %v1379
      %v1522 = vunpack.c.l.b16 %v1382
      %v1523 = vunpack.c.l.b16 %v1385
      %v1524 = vunpack.c.l.b16 %v1388
      %v1525 = vunpack.c.l.b16 %v1391
      %v1526 = vunpack.c.l.b16 %v1394
      %v1527 = vunpack.c.l.b16 %v1397
      %v1528 = vunpack.c.l.b16 %v1400
      %v1529 = vpack.c.b16 %v1513, %v1513
      %v1530 = vpack.c.b16 %v1514, %v1514
      %v1531 = vpack.c.b16 %v1515, %v1515
      %v1532 = vpack.c.b16 %v1516, %v1516
      %v1533 = vpack.c.b16 %v1517, %v1517
      %v1534 = vpack.c.b16 %v1518, %v1518
      %v1535 = vpack.c.b16 %v1519, %v1519
      %v1536 = vpack.c.b16 %v1520, %v1520
      %v1537 = vpack.c.b16 %v1521, %v1521
      %v1538 = vpack.c.b16 %v1522, %v1522
      %v1539 = vpack.c.b16 %v1523, %v1523
      %v1540 = vpack.c.b16 %v1524, %v1524
      %v1541 = vpack.c.b16 %v1525, %v1525
      %v1542 = vpack.c.b16 %v1526, %v1526
      %v1543 = vpack.c.b16 %v1527, %v1527
      %v1544 = vpack.c.b16 %v1528, %v1528
      %v1546 = vshrl.u32 %v1465, 16
      %v1548 = vshll.u32 %v1465, 16
      %v1550 = vrot.slane %v1548, 1
      %v1551 = vor.u32 %v1546, %v1550
      %v1553 = vshll.u32 %v1529, 16
      %v1555 = vrot.slane %v1553, 1
      %v1556 = vsel %vm1030, %v1551, %v1555
      %v1558 = vshrl.u32 %v1466, 16
      %v1560 = vshll.u32 %v1466, 16
      %v1562 = vrot.slane %v1560, 1
      %v1563 = vor.u32 %v1558, %v1562
      %v1565 = vshll.u32 %v1530, 16
      %v1567 = vrot.slane %v1565, 1
      %v1568 = vsel %vm1030, %v1563, %v1567
      %v1570 = vshrl.u32 %v1467, 16
      %v1572 = vshll.u32 %v1467, 16
      %v1574 = vrot.slane %v1572, 1
      %v1575 = vor.u32 %v1570, %v1574
      %v1577 = vshll.u32 %v1531, 16
      %v1579 = vrot.slane %v1577, 1
      %v1580 = vsel %vm1030, %v1575, %v1579
      %v1582 = vshrl.u32 %v1468, 16
      %v1584 = vshll.u32 %v1468, 16
      %v1586 = vrot.slane %v1584, 1
      %v1587 = vor.u32 %v1582, %v1586
      %v1589 = vshll.u32 %v1532, 16
      %v1591 = vrot.slane %v1589, 1
      %v1592 = vsel %vm1030, %v1587, %v1591
      %v1594 = vshrl.u32 %v1469, 16
      %v1596 = vshll.u32 %v1469, 16
      %v1598 = vrot.slane %v1596, 1
      %v1599 = vor.u32 %v1594, %v1598
      %v1601 = vshll.u32 %v1533, 16
      %v1603 = vrot.slane %v1601, 1
      %v1604 = vsel %vm1030, %v1599, %v1603
      %v1606 = vshrl.u32 %v1470, 16
      %v1608 = vshll.u32 %v1470, 16
      %v1610 = vrot.slane %v1608, 1
      %v1611 = vor.u32 %v1606, %v1610
      %v1613 = vshll.u32 %v1534, 16
      %v1615 = vrot.slane %v1613, 1
      %v1616 = vsel %vm1030, %v1611, %v1615
      %v1618 = vshrl.u32 %v1471, 16
      %v1620 = vshll.u32 %v1471, 16
      %v1622 = vrot.slane %v1620, 1
      %v1623 = vor.u32 %v1618, %v1622
      %v1625 = vshll.u32 %v1535, 16
      %v1627 = vrot.slane %v1625, 1
      %v1628 = vsel %vm1030, %v1623, %v1627
      %v1630 = vshrl.u32 %v1472, 16
      %v1632 = vshll.u32 %v1472, 16
      %v1634 = vrot.slane %v1632, 1
      %v1635 = vor.u32 %v1630, %v1634
      %v1637 = vshll.u32 %v1536, 16
      %v1639 = vrot.slane %v1637, 1
      %v1640 = vsel %vm1030, %v1635, %v1639
      %v1642 = vshrl.u32 %v1473, 16
      %v1644 = vshll.u32 %v1473, 16
      %v1646 = vrot.slane %v1644, 1
      %v1647 = vor.u32 %v1642, %v1646
      %v1649 = vshll.u32 %v1537, 16
      %v1651 = vrot.slane %v1649, 1
      %v1652 = vsel %vm1030, %v1647, %v1651
      %v1654 = vshrl.u32 %v1474, 16
      %v1656 = vshll.u32 %v1474, 16
      %v1658 = vrot.slane %v1656, 1
      %v1659 = vor.u32 %v1654, %v1658
      %v1661 = vshll.u32 %v1538, 16
      %v1663 = vrot.slane %v1661, 1
      %v1664 = vsel %vm1030, %v1659, %v1663
      %v1666 = vshrl.u32 %v1475, 16
      %v1668 = vshll.u32 %v1475, 16
      %v1670 = vrot.slane %v1668, 1
      %v1671 = vor.u32 %v1666, %v1670
      %v1673 = vshll.u32 %v1539, 16
      %v1675 = vrot.slane %v1673, 1
      %v1676 = vsel %vm1030, %v1671, %v1675
      %v1678 = vshrl.u32 %v1476, 16
      %v1680 = vshll.u32 %v1476, 16
      %v1682 = vrot.slane %v1680, 1
      %v1683 = vor.u32 %v1678, %v1682
      %v1685 = vshll.u32 %v1540, 16
      %v1687 = vrot.slane %v1685, 1
      %v1688 = vsel %vm1030, %v1683, %v1687
      %v1690 = vshrl.u32 %v1477, 16
      %v1692 = vshll.u32 %v1477, 16
      %v1694 = vrot.slane %v1692, 1
      %v1695 = vor.u32 %v1690, %v1694
      %v1697 = vshll.u32 %v1541, 16
      %v1699 = vrot.slane %v1697, 1
      %v1700 = vsel %vm1030, %v1695, %v1699
      %v1702 = vshrl.u32 %v1478, 16
      %v1704 = vshll.u32 %v1478, 16
      %v1706 = vrot.slane %v1704, 1
      %v1707 = vor.u32 %v1702, %v1706
      %v1709 = vshll.u32 %v1542, 16
      %v1711 = vrot.slane %v1709, 1
      %v1712 = vsel %vm1030, %v1707, %v1711
      %v1714 = vshrl.u32 %v1479, 16
      %v1716 = vshll.u32 %v1479, 16
      %v1718 = vrot.slane %v1716, 1
      %v1719 = vor.u32 %v1714, %v1718
      %v1721 = vshll.u32 %v1543, 16
      %v1723 = vrot.slane %v1721, 1
      %v1724 = vsel %vm1030, %v1719, %v1723
      %v1726 = vshrl.u32 %v1480, 16
      %v1728 = vshll.u32 %v1480, 16
      %v1730 = vrot.slane %v1728, 1
      %v1731 = vor.u32 %v1726, %v1730
      %v1733 = vshll.u32 %v1544, 16
      %v1735 = vrot.slane %v1733, 1
      %v1736 = vsel %vm1030, %v1731, %v1735
      %v1753 = vrot.slane %v1465, 1
      %v1754 = vrot.slane %v1529, 1
      %v1755 = vsel %vm1239, %v1753, %v1754
      %v1756 = vrot.slane %v1466, 1
      %v1757 = vrot.slane %v1530, 1
      %v1758 = vsel %vm1239, %v1756, %v1757
      %v1759 = vrot.slane %v1467, 1
      %v1760 = vrot.slane %v1531, 1
      %v1761 = vsel %vm1239, %v1759, %v1760
      %v1762 = vrot.slane %v1468, 1
      %v1763 = vrot.slane %v1532, 1
      %v1764 = vsel %vm1239, %v1762, %v1763
      %v1765 = vrot.slane %v1469, 1
      %v1766 = vrot.slane %v1533, 1
      %v1767 = vsel %vm1239, %v1765, %v1766
      %v1768 = vrot.slane %v1470, 1
      %v1769 = vrot.slane %v1534, 1
      %v1770 = vsel %vm1239, %v1768, %v1769
      %v1771 = vrot.slane %v1471, 1
      %v1772 = vrot.slane %v1535, 1
      %v1773 = vsel %vm1239, %v1771, %v1772
      %v1774 = vrot.slane %v1472, 1
      %v1775 = vrot.slane %v1536, 1
      %v1776 = vsel %vm1239, %v1774, %v1775
      %v1777 = vrot.slane %v1473, 1
      %v1778 = vrot.slane %v1537, 1
      %v1779 = vsel %vm1239, %v1777, %v1778
      %v1780 = vrot.slane %v1474, 1
      %v1781 = vrot.slane %v1538, 1
      %v1782 = vsel %vm1239, %v1780, %v1781
      %v1783 = vrot.slane %v1475, 1
      %v1784 = vrot.slane %v1539, 1
      %v1785 = vsel %vm1239, %v1783, %v1784
      %v1786 = vrot.slane %v1476, 1
      %v1787 = vrot.slane %v1540, 1
      %v1788 = vsel %vm1239, %v1786, %v1787
      %v1789 = vrot.slane %v1477, 1
      %v1790 = vrot.slane %v1541, 1
      %v1791 = vsel %vm1239, %v1789, %v1790
      %v1792 = vrot.slane %v1478, 1
      %v1793 = vrot.slane %v1542, 1
      %v1794 = vsel %vm1239, %v1792, %v1793
      %v1795 = vrot.slane %v1479, 1
      %v1796 = vrot.slane %v1543, 1
      %v1797 = vsel %vm1239, %v1795, %v1796
      %v1798 = vrot.slane %v1480, 1
      %v1799 = vrot.slane %v1544, 1
      %v1800 = vsel %vm1239, %v1798, %v1799
      %s1817 = scalar_lea.vmem %s3, 192
      %v1818 = vld [vmem:[%s1817] sm:$0xf]
      %v1819 = vld [vmem:[%s1817 + $0x4] sm:$0xf]
      %v1820 = vld [vmem:[%s1817 + $0x8] sm:$0xf]
      %v1821 = vld [vmem:[%s1817 + $0xc] sm:$0xf]
      %v1822 = vld [vmem:[%s1817 + $0x10] sm:$0xf]
      %v1823 = vld [vmem:[%s1817 + $0x14] sm:$0xf]
      %v1824 = vld [vmem:[%s1817 + $0x18] sm:$0xf]
      %v1825 = vld [vmem:[%s1817 + $0x1c] sm:$0xf]
      %v1826 = vld [vmem:[%s1817 + $0x20] sm:$0xf]
      %v1827 = vld [vmem:[%s1817 + $0x24] sm:$0xf]
      %v1828 = vld [vmem:[%s1817 + $0x28] sm:$0xf]
      %v1829 = vld [vmem:[%s1817 + $0x2c] sm:$0xf]
      %v1830 = vld [vmem:[%s1817 + $0x30] sm:$0xf]
      %v1831 = vld [vmem:[%s1817 + $0x34] sm:$0xf]
      %v1832 = vld [vmem:[%s1817 + $0x38] sm:$0xf]
      %v1833 = vld [vmem:[%s1817 + $0x3c] sm:$0xf]
      %v1834 = vld [vmem:[%s1817 + $0x40] sm:$0xf]
      %v1835 = vld [vmem:[%s1817 + $0x44] sm:$0xf]
      %v1836 = vld [vmem:[%s1817 + $0x48] sm:$0xf]
      %v1837 = vld [vmem:[%s1817 + $0x4c] sm:$0xf]
      %v1838 = vld [vmem:[%s1817 + $0x50] sm:$0xf]
      %v1839 = vld [vmem:[%s1817 + $0x54] sm:$0xf]
      %v1840 = vld [vmem:[%s1817 + $0x58] sm:$0xf]
      %v1841 = vld [vmem:[%s1817 + $0x5c] sm:$0xf]
      %v1842 = vld [vmem:[%s1817 + $0x60] sm:$0xf]
      %v1843 = vld [vmem:[%s1817 + $0x64] sm:$0xf]
      %v1844 = vld [vmem:[%s1817 + $0x68] sm:$0xf]
      %v1845 = vld [vmem:[%s1817 + $0x6c] sm:$0xf]
      %v1846 = vld [vmem:[%s1817 + $0x70] sm:$0xf]
      %v1847 = vld [vmem:[%s1817 + $0x74] sm:$0xf]
      %v1848 = vld [vmem:[%s1817 + $0x78] sm:$0xf]
      %v1849 = vld [vmem:[%s1817 + $0x7c] sm:$0xf]
      %v1850 = vld [vmem:[%s1817 + $0x80] sm:$0xf]
      %v1851 = vld [vmem:[%s1817 + $0x84] sm:$0xf]
      %v1852 = vld [vmem:[%s1817 + $0x88] sm:$0xf]
      %v1853 = vld [vmem:[%s1817 + $0x8c] sm:$0xf]
      %v1854 = vld [vmem:[%s1817 + $0x90] sm:$0xf]
      %v1855 = vld [vmem:[%s1817 + $0x94] sm:$0xf]
      %v1856 = vld [vmem:[%s1817 + $0x98] sm:$0xf]
      %v1857 = vld [vmem:[%s1817 + $0x9c] sm:$0xf]
      %v1858 = vld [vmem:[%s1817 + $0xa0] sm:$0xf]
      %v1859 = vld [vmem:[%s1817 + $0xa4] sm:$0xf]
      %v1860 = vld [vmem:[%s1817 + $0xa8] sm:$0xf]
      %v1861 = vld [vmem:[%s1817 + $0xac] sm:$0xf]
      %v1862 = vld [vmem:[%s1817 + $0xb0] sm:$0xf]
      %v1863 = vld [vmem:[%s1817 + $0xb4] sm:$0xf]
      %v1864 = vld [vmem:[%s1817 + $0xb8] sm:$0xf]
      %v1865 = vld [vmem:[%s1817 + $0xbc] sm:$0xf]
      %v1914 = vunpack.c.l.b16 %v1818
      %v1915 = vunpack.c.l.b16 %v1819
      %v1916 = vunpack.c.l.b16 %v1820
      %v1917 = vunpack.c.l.b16 %v1821
      %v1918 = vunpack.c.l.b16 %v1822
      %v1919 = vunpack.c.l.b16 %v1823
      %v1920 = vunpack.c.l.b16 %v1824
      %v1921 = vunpack.c.l.b16 %v1825
      %v1922 = vunpack.c.l.b16 %v1826
      %v1923 = vunpack.c.l.b16 %v1827
      %v1924 = vunpack.c.l.b16 %v1828
      %v1925 = vunpack.c.l.b16 %v1829
      %v1926 = vunpack.c.l.b16 %v1830
      %v1927 = vunpack.c.l.b16 %v1831
      %v1928 = vunpack.c.l.b16 %v1832
      %v1929 = vunpack.c.l.b16 %v1833
      %v1930 = vunpack.c.l.b16 %v1834
      %v1931 = vunpack.c.l.b16 %v1835
      %v1932 = vunpack.c.l.b16 %v1836
      %v1933 = vunpack.c.l.b16 %v1837
      %v1934 = vunpack.c.l.b16 %v1838
      %v1935 = vunpack.c.l.b16 %v1839
      %v1936 = vunpack.c.l.b16 %v1840
      %v1937 = vunpack.c.l.b16 %v1841
      %v1938 = vunpack.c.l.b16 %v1842
      %v1939 = vunpack.c.l.b16 %v1843
      %v1940 = vunpack.c.l.b16 %v1844
      %v1941 = vunpack.c.l.b16 %v1845
      %v1942 = vunpack.c.l.b16 %v1846
      %v1943 = vunpack.c.l.b16 %v1847
      %v1944 = vunpack.c.l.b16 %v1848
      %v1945 = vunpack.c.l.b16 %v1849
      %v1946 = vunpack.c.l.b16 %v1850
      %v1947 = vunpack.c.l.b16 %v1851
      %v1948 = vunpack.c.l.b16 %v1852
      %v1949 = vunpack.c.l.b16 %v1853
      %v1950 = vunpack.c.l.b16 %v1854
      %v1951 = vunpack.c.l.b16 %v1855
      %v1952 = vunpack.c.l.b16 %v1856
      %v1953 = vunpack.c.l.b16 %v1857
      %v1954 = vunpack.c.l.b16 %v1858
      %v1955 = vunpack.c.l.b16 %v1859
      %v1956 = vunpack.c.l.b16 %v1860
      %v1957 = vunpack.c.l.b16 %v1861
      %v1958 = vunpack.c.l.b16 %v1862
      %v1959 = vunpack.c.l.b16 %v1863
      %v1960 = vunpack.c.l.b16 %v1864
      %v1961 = vunpack.c.l.b16 %v1865
      %v1962 = vpack.c.b16 %v1915, %v1914
      %v1963 = vpack.c.b16 %v1917, %v1916
      %v1964 = vpack.c.b16 %v1919, %v1918
      %v1965 = vpack.c.b16 %v1921, %v1920
      %v1966 = vpack.c.b16 %v1923, %v1922
      %v1967 = vpack.c.b16 %v1925, %v1924
      %v1968 = vpack.c.b16 %v1927, %v1926
      %v1969 = vpack.c.b16 %v1929, %v1928
      %v1970 = vpack.c.b16 %v1931, %v1930
      %v1971 = vpack.c.b16 %v1933, %v1932
      %v1972 = vpack.c.b16 %v1935, %v1934
      %v1973 = vpack.c.b16 %v1937, %v1936
      %v1974 = vpack.c.b16 %v1939, %v1938
      %v1975 = vpack.c.b16 %v1941, %v1940
      %v1976 = vpack.c.b16 %v1943, %v1942
      %v1977 = vpack.c.b16 %v1945, %v1944
      %v1978 = vpack.c.b16 %v1947, %v1946
      %v1979 = vpack.c.b16 %v1949, %v1948
      %v1980 = vpack.c.b16 %v1951, %v1950
      %v1981 = vpack.c.b16 %v1953, %v1952
      %v1982 = vpack.c.b16 %v1955, %v1954
      %v1983 = vpack.c.b16 %v1957, %v1956
      %v1984 = vpack.c.b16 %v1959, %v1958
      %v1985 = vpack.c.b16 %v1961, %v1960
      %2010 = vmatprep.subr.bf16.mxu0 0
      %2011 = vmatpush1.bf16.msra.mxu0 %v1962
      %2012 = vmatprep.subr.bf16.mxu0 0
      %2013 = vmatpush1.bf16.msra.mxu0 %v1963
      %2014 = vmatprep.subr.bf16.mxu0 0
      %2015 = vmatpush1.bf16.msra.mxu0 %v1964
      %2016 = vmatprep.subr.bf16.mxu0 0
      %2017 = vmatpush1.bf16.msra.mxu0 %v1965
      %2018 = vmatprep.subr.bf16.mxu0 0
      %2019 = vmatpush1.bf16.msra.mxu0 %v1966
      %2020 = vmatprep.subr.bf16.mxu0 0
      %2021 = vmatpush1.bf16.msra.mxu0 %v1967
      %2022 = vmatprep.subr.bf16.mxu0 0
      %2023 = vmatpush1.bf16.msra.mxu0 %v1968
      %2024 = vmatprep.subr.bf16.mxu0 0
      %2025 = vmatpush1.bf16.msra.mxu0 %v1969
      %2026 = vmatprep.subr.bf16.mxu0 0
      %2027 = vmatpush1.bf16.msra.mxu0 %v1970
      %2028 = vmatprep.subr.bf16.mxu0 0
      %2029 = vmatpush1.bf16.msra.mxu0 %v1971
      %2030 = vmatprep.subr.bf16.mxu0 0
      %2031 = vmatpush1.bf16.msra.mxu0 %v1972
      %2032 = vmatprep.subr.bf16.mxu0 0
      %2033 = vmatpush1.bf16.msra.mxu0 %v1973
      %2034 = vmatprep.subr.bf16.mxu0 0
      %2035 = vmatpush1.bf16.msra.mxu0 %v1974
      %2036 = vmatprep.subr.bf16.mxu0 0
      %2037 = vmatpush1.bf16.msra.mxu0 %v1975
      %2038 = vmatprep.subr.bf16.mxu0 0
      %2039 = vmatpush1.bf16.msra.mxu0 %v1976
      %2040 = vmatprep.subr.bf16.mxu0 0
      %2041 = vmatpush1.bf16.msra.mxu0 %v1977
      %2042 = vmatprep.mubr.bf16.mxu0 %v1556
      %2043 = vmatmul.mubr.bf16.gmra.mrb[0].mxu0 %v1465
      %v2044 = vpop.f32.mrb[0].mxu0
      %v2045 = vadd.f32 0.0, %v2044
      %v2046 = vpop.f32.mrb[0].mxu0
      %v2047 = vpop.f32.mrb[0].mxu0
      %v2048 = vadd.f32 0.0, %v2047
      %v2049 = vpop.f32.mrb[0].mxu0
      %2050 = vmatprep.mubr.bf16.mxu0 %v1568
      %2051 = vmatmul.mubr.bf16.gmra.mrb[0].mxu0 %v1466
      %v2052 = vpop.f32.mrb[0].mxu0
      %v2053 = vadd.f32 0.0, %v2052
      %v2054 = vpop.f32.mrb[0].mxu0
      %v2055 = vpop.f32.mrb[0].mxu0
      %v2056 = vadd.f32 0.0, %v2055
      %v2057 = vpop.f32.mrb[0].mxu0
      %2058 = vmatprep.mubr.bf16.mxu0 %v1580
      %2059 = vmatmul.mubr.bf16.gmra.mrb[0].mxu0 %v1467
      %v2060 = vpop.f32.mrb[0].mxu0
      %v2061 = vadd.f32 0.0, %v2060
      %v2062 = vpop.f32.mrb[0].mxu0
      %v2063 = vpop.f32.mrb[0].mxu0
      %v2064 = vadd.f32 0.0, %v2063
      %v2065 = vpop.f32.mrb[0].mxu0
      %2066 = vmatprep.mubr.bf16.mxu0 %v1592
      %2067 = vmatmul.mubr.bf16.gmra.mrb[0].mxu0 %v1468
      %v2068 = vpop.f32.mrb[0].mxu0
      %v2069 = vadd.f32 0.0, %v2068
      %v2070 = vpop.f32.mrb[0].mxu0
      %v2071 = vpop.f32.mrb[0].mxu0
      %v2072 = vadd.f32 0.0, %v2071
      %v2073 = vpop.f32.mrb[0].mxu0
      %2074 = vmatprep.mubr.bf16.mxu0 %v1604
      %2075 = vmatmul.mubr.bf16.gmra.mrb[0].mxu0 %v1469
      %v2076 = vpop.f32.mrb[0].mxu0
      %v2077 = vadd.f32 0.0, %v2076
      %v2078 = vpop.f32.mrb[0].mxu0
      %v2079 = vpop.f32.mrb[0].mxu0
      %v2080 = vadd.f32 0.0, %v2079
      %v2081 = vpop.f32.mrb[0].mxu0
      %2082 = vmatprep.mubr.bf16.mxu0 %v1616
      %2083 = vmatmul.mubr.bf16.gmra.mrb[0].mxu0 %v1470
      %v2084 = vpop.f32.mrb[0].mxu0
      %v2085 = vadd.f32 0.0, %v2084
      %v2086 = vpop.f32.mrb[0].mxu0
      %v2087 = vpop.f32.mrb[0].mxu0
      %v2088 = vadd.f32 0.0, %v2087
      %v2089 = vpop.f32.mrb[0].mxu0
      %2090 = vmatprep.mubr.bf16.mxu0 %v1628
      %2091 = vmatmul.mubr.bf16.gmra.mrb[0].mxu0 %v1471
      %v2092 = vpop.f32.mrb[0].mxu0
      %v2093 = vadd.f32 0.0, %v2092
      %v2094 = vpop.f32.mrb[0].mxu0
      %v2095 = vpop.f32.mrb[0].mxu0
      %v2096 = vadd.f32 0.0, %v2095
      %v2097 = vpop.f32.mrb[0].mxu0
      %2098 = vmatprep.mubr.bf16.mxu0 %v1640
      %2099 = vmatmul.mubr.bf16.gmra.mrb[0].mxu0 %v1472
      %v2100 = vpop.f32.mrb[0].mxu0
      %v2101 = vadd.f32 0.0, %v2100
      %v2102 = vpop.f32.mrb[0].mxu0
      %v2103 = vpop.f32.mrb[0].mxu0
      %v2104 = vadd.f32 0.0, %v2103
      %v2105 = vpop.f32.mrb[0].mxu0
      %2106 = vmatprep.mubr.bf16.mxu0 %v1652
      %2107 = vmatmul.mubr.bf16.gmra.mrb[0].mxu0 %v1473
      %v2108 = vpop.f32.mrb[0].mxu0
      %v2109 = vadd.f32 0.0, %v2108
      %v2110 = vpop.f32.mrb[0].mxu0
      %v2111 = vpop.f32.mrb[0].mxu0
      %v2112 = vadd.f32 0.0, %v2111
      %v2113 = vpop.f32.mrb[0].mxu0
      %2114 = vmatprep.mubr.bf16.mxu0 %v1664
      %2115 = vmatmul.mubr.bf16.gmra.mrb[0].mxu0 %v1474
      %v2116 = vpop.f32.mrb[0].mxu0
      %v2117 = vadd.f32 0.0, %v2116
      %v2118 = vpop.f32.mrb[0].mxu0
      %v2119 = vpop.f32.mrb[0].mxu0
      %v2120 = vadd.f32 0.0, %v2119
      %v2121 = vpop.f32.mrb[0].mxu0
      %2122 = vmatprep.mubr.bf16.mxu0 %v1676
      %2123 = vmatmul.mubr.bf16.gmra.mrb[0].mxu0 %v1475
      %v2124 = vpop.f32.mrb[0].mxu0
      %v2125 = vadd.f32 0.0, %v2124
      %v2126 = vpop.f32.mrb[0].mxu0
      %v2127 = vpop.f32.mrb[0].mxu0
      %v2128 = vadd.f32 0.0, %v2127
      %v2129 = vpop.f32.mrb[0].mxu0
      %2130 = vmatprep.mubr.bf16.mxu0 %v1688
      %2131 = vmatmul.mubr.bf16.gmra.mrb[0].mxu0 %v1476
      %v2132 = vpop.f32.mrb[0].mxu0
      %v2133 = vadd.f32 0.0, %v2132
      %v2134 = vpop.f32.mrb[0].mxu0
      %v2135 = vpop.f32.mrb[0].mxu0
      %v2136 = vadd.f32 0.0, %v2135
      %v2137 = vpop.f32.mrb[0].mxu0
      %2138 = vmatprep.mubr.bf16.mxu0 %v1700
      %2139 = vmatmul.mubr.bf16.gmra.mrb[0].mxu0 %v1477
      %v2140 = vpop.f32.mrb[0].mxu0
      %v2141 = vadd.f32 0.0, %v2140
      %v2142 = vpop.f32.mrb[0].mxu0
      %v2143 = vpop.f32.mrb[0].mxu0
      %v2144 = vadd.f32 0.0, %v2143
      %v2145 = vpop.f32.mrb[0].mxu0
      %2146 = vmatprep.mubr.bf16.mxu0 %v1712
      %2147 = vmatmul.mubr.bf16.gmra.mrb[0].mxu0 %v1478
      %v2148 = vpop.f32.mrb[0].mxu0
      %v2149 = vadd.f32 0.0, %v2148
      %v2150 = vpop.f32.mrb[0].mxu0
      %v2151 = vpop.f32.mrb[0].mxu0
      %v2152 = vadd.f32 0.0, %v2151
      %v2153 = vpop.f32.mrb[0].mxu0
      %2154 = vmatprep.mubr.bf16.mxu0 %v1724
      %2155 = vmatmul.mubr.bf16.gmra.mrb[0].mxu0 %v1479
      %v2156 = vpop.f32.mrb[0].mxu0
      %v2157 = vadd.f32 0.0, %v2156
      %v2158 = vpop.f32.mrb[0].mxu0
      %v2159 = vpop.f32.mrb[0].mxu0
      %v2160 = vadd.f32 0.0, %v2159
      %v2161 = vpop.f32.mrb[0].mxu0
      %2162 = vmatprep.mubr.bf16.mxu0 %v1736
      %2163 = vmatmul.mubr.bf16.gmra.mrb[0].mxu0 %v1480
      %v2164 = vpop.f32.mrb[0].mxu0
      %v2165 = vadd.f32 0.0, %v2164
      %v2166 = vpop.f32.mrb[0].mxu0
      %v2167 = vpop.f32.mrb[0].mxu0
      %v2168 = vadd.f32 0.0, %v2167
      %v2169 = vpop.f32.mrb[0].mxu0
      %2170 = vdwg.mxu0
      %2171 = vmatprep.subr.bf16.mxu0 0
      %2172 = vmatpush1.bf16.msra.mxu0 %v1978
      %2173 = vmatprep.subr.bf16.mxu0 0
      %2174 = vmatpush1.bf16.msra.mxu0 %v1979
      %2175 = vmatprep.subr.bf16.mxu0 0
      %2176 = vmatpush1.bf16.msra.mxu0 %v1980
      %2177 = vmatprep.subr.bf16.mxu0 0
      %2178 = vmatpush1.bf16.msra.mxu0 %v1981
      %2179 = vmatprep.subr.bf16.mxu0 0
      %2180 = vmatpush1.bf16.msra.mxu0 %v1982
      %2181 = vmatprep.subr.bf16.mxu0 0
      %2182 = vmatpush1.bf16.msra.mxu0 %v1983
      %2183 = vmatprep.subr.bf16.mxu0 0
      %2184 = vmatpush1.bf16.msra.mxu0 %v1984
      %2185 = vmatprep.subr.bf16.mxu0 0
      %2186 = vmatpush1.bf16.msra.mxu0 %v1985
      %2187 = vmatprep.subr.bf16.mxu0 0
      %2188 = vmatpush1.bf16.msra.mxu0 0
      %2189 = vmatprep.subr.bf16.mxu0 0
      %2190 = vmatpush1.bf16.msra.mxu0 0
      %2191 = vmatprep.subr.bf16.mxu0 0
      %2192 = vmatpush1.bf16.msra.mxu0 0
      %2193 = vmatprep.subr.bf16.mxu0 0
      %2194 = vmatpush1.bf16.msra.mxu0 0
      %2195 = vmatprep.subr.bf16.mxu0 0
      %2196 = vmatpush1.bf16.msra.mxu0 0
      %2197 = vmatprep.subr.bf16.mxu0 0
      %2198 = vmatpush1.bf16.msra.mxu0 0
      %2199 = vmatprep.subr.bf16.mxu0 0
      %2200 = vmatpush1.bf16.msra.mxu0 0
      %2201 = vmatprep.subr.bf16.mxu0 0
      %2202 = vmatpush1.bf16.msra.mxu0 0
      %2203 = vmatprep.mubr.bf16.mxu0 0
      %2204 = vmatmul.mubr.bf16.gmra.mrb[0].mxu0 %v1755
      %v2205 = vpop.f32.mrb[0].mxu0
      %v2206 = vadd.f32 %v2045, %v2205
      %v2207 = vpop.f32.mrb[0].mxu0
      %v2208 = vpop.f32.mrb[0].mxu0
      %v2209 = vadd.f32 %v2048, %v2208
      %v2210 = vpop.f32.mrb[0].mxu0
      %2211 = vmatprep.mubr.bf16.mxu0 0
      %2212 = vmatmul.mubr.bf16.gmra.mrb[0].mxu0 %v1758
      %v2213 = vpop.f32.mrb[0].mxu0
      %v2214 = vadd.f32 %v2053, %v2213
      %v2215 = vpop.f32.mrb[0].mxu0
      %v2216 = vpop.f32.mrb[0].mxu0
      %v2217 = vadd.f32 %v2056, %v2216
      %v2218 = vpop.f32.mrb[0].mxu0
      %2219 = vmatprep.mubr.bf16.mxu0 0
      %2220 = vmatmul.mubr.bf16.gmra.mrb[0].mxu0 %v1761
      %v2221 = vpop.f32.mrb[0].mxu0
      %v2222 = vadd.f32 %v2061, %v2221
      %v2223 = vpop.f32.mrb[0].mxu0
      %v2224 = vpop.f32.mrb[0].mxu0
      %v2225 = vadd.f32 %v2064, %v2224
      %v2226 = vpop.f32.mrb[0].mxu0
      %2227 = vmatprep.mubr.bf16.mxu0 0
      %2228 = vmatmul.mubr.bf16.gmra.mrb[0].mxu0 %v1764
      %v2229 = vpop.f32.mrb[0].mxu0
      %v2230 = vadd.f32 %v2069, %v2229
      %v2231 = vpop.f32.mrb[0].mxu0
      %v2232 = vpop.f32.mrb[0].mxu0
      %v2233 = vadd.f32 %v2072, %v2232
      %v2234 = vpop.f32.mrb[0].mxu0
      %2235 = vmatprep.mubr.bf16.mxu0 0
      %2236 = vmatmul.mubr.bf16.gmra.mrb[0].mxu0 %v1767
      %v2237 = vpop.f32.mrb[0].mxu0
      %v2238 = vadd.f32 %v2077, %v2237
      %v2239 = vpop.f32.mrb[0].mxu0
      %v2240 = vpop.f32.mrb[0].mxu0
      %v2241 = vadd.f32 %v2080, %v2240
      %v2242 = vpop.f32.mrb[0].mxu0
      %2243 = vmatprep.mubr.bf16.mxu0 0
      %2244 = vmatmul.mubr.bf16.gmra.mrb[0].mxu0 %v1770
      %v2245 = vpop.f32.mrb[0].mxu0
      %v2246 = vadd.f32 %v2085, %v2245
      %v2247 = vpop.f32.mrb[0].mxu0
      %v2248 = vpop.f32.mrb[0].mxu0
      %v2249 = vadd.f32 %v2088, %v2248
      %v2250 = vpop.f32.mrb[0].mxu0
      %2251 = vmatprep.mubr.bf16.mxu0 0
      %2252 = vmatmul.mubr.bf16.gmra.mrb[0].mxu0 %v1773
      %v2253 = vpop.f32.mrb[0].mxu0
      %v2254 = vadd.f32 %v2093, %v2253
      %v2255 = vpop.f32.mrb[0].mxu0
      %v2256 = vpop.f32.mrb[0].mxu0
      %v2257 = vadd.f32 %v2096, %v2256
      %v2258 = vpop.f32.mrb[0].mxu0
      %2259 = vmatprep.mubr.bf16.mxu0 0
      %2260 = vmatmul.mubr.bf16.gmra.mrb[0].mxu0 %v1776
      %v2261 = vpop.f32.mrb[0].mxu0
      %v2262 = vadd.f32 %v2101, %v2261
      %v2263 = vpop.f32.mrb[0].mxu0
      %v2264 = vpop.f32.mrb[0].mxu0
      %v2265 = vadd.f32 %v2104, %v2264
      %v2266 = vpop.f32.mrb[0].mxu0
      %2267 = vmatprep.mubr.bf16.mxu0 0
      %2268 = vmatmul.mubr.bf16.gmra.mrb[0].mxu0 %v1779
      %v2269 = vpop.f32.mrb[0].mxu0
      %v2270 = vadd.f32 %v2109, %v2269
      %v2271 = vpop.f32.mrb[0].mxu0
      %v2272 = vpop.f32.mrb[0].mxu0
      %v2273 = vadd.f32 %v2112, %v2272
      %v2274 = vpop.f32.mrb[0].mxu0
      %2275 = vmatprep.mubr.bf16.mxu0 0
      %2276 = vmatmul.mubr.bf16.gmra.mrb[0].mxu0 %v1782
      %v2277 = vpop.f32.mrb[0].mxu0
      %v2278 = vadd.f32 %v2117, %v2277
      %v2279 = vpop.f32.mrb[0].mxu0
      %v2280 = vpop.f32.mrb[0].mxu0
      %v2281 = vadd.f32 %v2120, %v2280
      %v2282 = vpop.f32.mrb[0].mxu0
      %2283 = vmatprep.mubr.bf16.mxu0 0
      %2284 = vmatmul.mubr.bf16.gmra.mrb[0].mxu0 %v1785
      %v2285 = vpop.f32.mrb[0].mxu0
      %v2286 = vadd.f32 %v2125, %v2285
      %v2287 = vpop.f32.mrb[0].mxu0
      %v2288 = vpop.f32.mrb[0].mxu0
      %v2289 = vadd.f32 %v2128, %v2288
      %v2290 = vpop.f32.mrb[0].mxu0
      %2291 = vmatprep.mubr.bf16.mxu0 0
      %2292 = vmatmul.mubr.bf16.gmra.mrb[0].mxu0 %v1788
      %v2293 = vpop.f32.mrb[0].mxu0
      %v2294 = vadd.f32 %v2133, %v2293
      %v2295 = vpop.f32.mrb[0].mxu0
      %v2296 = vpop.f32.mrb[0].mxu0
      %v2297 = vadd.f32 %v2136, %v2296
      %v2298 = vpop.f32.mrb[0].mxu0
      %2299 = vmatprep.mubr.bf16.mxu0 0
      %2300 = vmatmul.mubr.bf16.gmra.mrb[0].mxu0 %v1791
      %v2301 = vpop.f32.mrb[0].mxu0
      %v2302 = vadd.f32 %v2141, %v2301
      %v2303 = vpop.f32.mrb[0].mxu0
      %v2304 = vpop.f32.mrb[0].mxu0
      %v2305 = vadd.f32 %v2144, %v2304
      %v2306 = vpop.f32.mrb[0].mxu0
      %2307 = vmatprep.mubr.bf16.mxu0 0
      %2308 = vmatmul.mubr.bf16.gmra.mrb[0].mxu0 %v1794
      %v2309 = vpop.f32.mrb[0].mxu0
      %v2310 = vadd.f32 %v2149, %v2309
      %v2311 = vpop.f32.mrb[0].mxu0
      %v2312 = vpop.f32.mrb[0].mxu0
      %v2313 = vadd.f32 %v2152, %v2312
      %v2314 = vpop.f32.mrb[0].mxu0
      %2315 = vmatprep.mubr.bf16.mxu0 0
      %2316 = vmatmul.mubr.bf16.gmra.mrb[0].mxu0 %v1797
      %v2317 = vpop.f32.mrb[0].mxu0
      %v2318 = vadd.f32 %v2157, %v2317
      %v2319 = vpop.f32.mrb[0].mxu0
      %v2320 = vpop.f32.mrb[0].mxu0
      %v2321 = vadd.f32 %v2160, %v2320
      %v2322 = vpop.f32.mrb[0].mxu0
      %2323 = vmatprep.mubr.bf16.mxu0 0
      %2324 = vmatmul.mubr.bf16.gmra.mrb[0].mxu0 %v1800
      %v2325 = vpop.f32.mrb[0].mxu0
      %v2326 = vadd.f32 %v2165, %v2325
      %v2327 = vpop.f32.mrb[0].mxu0
      %v2328 = vpop.f32.mrb[0].mxu0
      %v2329 = vadd.f32 %v2168, %v2328
      %v2330 = vpop.f32.mrb[0].mxu0
      %2331 = vdwg.mxu0
      %v2380 = vunpack.c.l.b16 %v1304
      %v2381 = vunpack.c.l.b16 %v1305
      %v2382 = vunpack.c.l.b16 %v1306
      %v2383 = vunpack.c.l.b16 %v1307
      %v2384 = vunpack.c.l.b16 %v1308
      %v2385 = vunpack.c.l.b16 %v1309
      %v2386 = vunpack.c.l.b16 %v1310
      %v2387 = vunpack.c.l.b16 %v1311
      %v2388 = vunpack.c.l.b16 %v1312
      %v2389 = vunpack.c.l.b16 %v1313
      %v2390 = vunpack.c.l.b16 %v1314
      %v2391 = vunpack.c.l.b16 %v1315
      %v2392 = vunpack.c.l.b16 %v1316
      %v2393 = vunpack.c.l.b16 %v1317
      %v2394 = vunpack.c.l.b16 %v1318
      %v2395 = vunpack.c.l.b16 %v1319
      %v2396 = vunpack.c.l.b16 %v1320
      %v2397 = vunpack.c.l.b16 %v1321
      %v2398 = vunpack.c.l.b16 %v1322
      %v2399 = vunpack.c.l.b16 %v1323
      %v2400 = vunpack.c.l.b16 %v1324
      %v2401 = vunpack.c.l.b16 %v1325
      %v2402 = vunpack.c.l.b16 %v1326
      %v2403 = vunpack.c.l.b16 %v1327
      %v2404 = vunpack.c.l.b16 %v1328
      %v2405 = vunpack.c.l.b16 %v1329
      %v2406 = vunpack.c.l.b16 %v1330
      %v2407 = vunpack.c.l.b16 %v1331
      %v2408 = vunpack.c.l.b16 %v1332
      %v2409 = vunpack.c.l.b16 %v1333
      %v2410 = vunpack.c.l.b16 %v1334
      %v2411 = vunpack.c.l.b16 %v1335
      %v2412 = vunpack.c.l.b16 %v1336
      %v2413 = vunpack.c.l.b16 %v1337
      %v2414 = vunpack.c.l.b16 %v1338
      %v2415 = vunpack.c.l.b16 %v1339
      %v2416 = vunpack.c.l.b16 %v1340
      %v2417 = vunpack.c.l.b16 %v1341
      %v2418 = vunpack.c.l.b16 %v1342
      %v2419 = vunpack.c.l.b16 %v1343
      %v2420 = vunpack.c.l.b16 %v1344
      %v2421 = vunpack.c.l.b16 %v1345
      %v2422 = vunpack.c.l.b16 %v1346
      %v2423 = vunpack.c.l.b16 %v1347
      %v2424 = vunpack.c.l.b16 %v1348
      %v2425 = vunpack.c.l.b16 %v1349
      %v2426 = vunpack.c.l.b16 %v1350
      %v2427 = vunpack.c.l.b16 %v1351
      %v2428 = vpack.c.b16 %v2381, %v2380
      %v2429 = vpack.c.b16 %v2383, %v2382
      %v2430 = vpack.c.b16 %v2385, %v2384
      %v2431 = vpack.c.b16 %v2387, %v2386
      %v2432 = vpack.c.b16 %v2389, %v2388
      %v2433 = vpack.c.b16 %v2391, %v2390
      %v2434 = vpack.c.b16 %v2393, %v2392
      %v2435 = vpack.c.b16 %v2395, %v2394
      %v2436 = vpack.c.b16 %v2397, %v2396
      %v2437 = vpack.c.b16 %v2399, %v2398
      %v2438 = vpack.c.b16 %v2401, %v2400
      %v2439 = vpack.c.b16 %v2403, %v2402
      %v2440 = vpack.c.b16 %v2405, %v2404
      %v2441 = vpack.c.b16 %v2407, %v2406
      %v2442 = vpack.c.b16 %v2409, %v2408
      %v2443 = vpack.c.b16 %v2411, %v2410
      %v2444 = vpack.c.b16 %v2413, %v2412
      %v2445 = vpack.c.b16 %v2415, %v2414
      %v2446 = vpack.c.b16 %v2417, %v2416
      %v2447 = vpack.c.b16 %v2419, %v2418
      %v2448 = vpack.c.b16 %v2421, %v2420
      %v2449 = vpack.c.b16 %v2423, %v2422
      %v2450 = vpack.c.b16 %v2425, %v2424
      %v2451 = vpack.c.b16 %v2427, %v2426
      %2476 = vmatprep.subr.bf16.mxu0 0
      %2477 = vmatpush1.bf16.msra.mxu0 %v2428
      %2478 = vmatprep.subr.bf16.mxu0 0
      %2479 = vmatpush1.bf16.msra.mxu0 %v2429
      %2480 = vmatprep.subr.bf16.mxu0 0
      %2481 = vmatpush1.bf16.msra.mxu0 %v2430
      %2482 = vmatprep.subr.bf16.mxu0 0
      %2483 = vmatpush1.bf16.msra.mxu0 %v2431
      %2484 = vmatprep.subr.bf16.mxu0 0
      %2485 = vmatpush1.bf16.msra.mxu0 %v2432
      %2486 = vmatprep.subr.bf16.mxu0 0
      %2487 = vmatpush1.bf16.msra.mxu0 %v2433
      %2488 = vmatprep.subr.bf16.mxu0 0
      %2489 = vmatpush1.bf16.msra.mxu0 %v2434
      %2490 = vmatprep.subr.bf16.mxu0 0
      %2491 = vmatpush1.bf16.msra.mxu0 %v2435
      %2492 = vmatprep.subr.bf16.mxu0 0
      %2493 = vmatpush1.bf16.msra.mxu0 %v2436
      %2494 = vmatprep.subr.bf16.mxu0 0
      %2495 = vmatpush1.bf16.msra.mxu0 %v2437
      %2496 = vmatprep.subr.bf16.mxu0 0
      %2497 = vmatpush1.bf16.msra.mxu0 %v2438
      %2498 = vmatprep.subr.bf16.mxu0 0
      %2499 = vmatpush1.bf16.msra.mxu0 %v2439
      %2500 = vmatprep.subr.bf16.mxu0 0
      %2501 = vmatpush1.bf16.msra.mxu0 %v2440
      %2502 = vmatprep.subr.bf16.mxu0 0
      %2503 = vmatpush1.bf16.msra.mxu0 %v2441
      %2504 = vmatprep.subr.bf16.mxu0 0
      %2505 = vmatpush1.bf16.msra.mxu0 %v2442
      %2506 = vmatprep.subr.bf16.mxu0 0
      %2507 = vmatpush1.bf16.msra.mxu0 %v2443
      %2508 = vmatprep.mubr.bf16.mxu0 %v1042
      %2509 = vmatmul.mubr.bf16.gmra.mrb[0].mxu0 %v950
      %v2510 = vpop.f32.mrb[0].mxu0
      %v2511 = vadd.f32 %v2206, %v2510
      %v2512 = vpop.f32.mrb[0].mxu0
      %v2513 = vpop.f32.mrb[0].mxu0
      %v2514 = vadd.f32 %v2209, %v2513
      %v2515 = vpop.f32.mrb[0].mxu0
      %2516 = vmatprep.mubr.bf16.mxu0 %v1054
      %2517 = vmatmul.mubr.bf16.gmra.mrb[0].mxu0 %v951
      %v2518 = vpop.f32.mrb[0].mxu0
      %v2519 = vadd.f32 %v2214, %v2518
      %v2520 = vpop.f32.mrb[0].mxu0
      %v2521 = vpop.f32.mrb[0].mxu0
      %v2522 = vadd.f32 %v2217, %v2521
      %v2523 = vpop.f32.mrb[0].mxu0
      %2524 = vmatprep.mubr.bf16.mxu0 %v1066
      %2525 = vmatmul.mubr.bf16.gmra.mrb[0].mxu0 %v952
      %v2526 = vpop.f32.mrb[0].mxu0
      %v2527 = vadd.f32 %v2222, %v2526
      %v2528 = vpop.f32.mrb[0].mxu0
      %v2529 = vpop.f32.mrb[0].mxu0
      %v2530 = vadd.f32 %v2225, %v2529
      %v2531 = vpop.f32.mrb[0].mxu0
      %2532 = vmatprep.mubr.bf16.mxu0 %v1078
      %2533 = vmatmul.mubr.bf16.gmra.mrb[0].mxu0 %v953
      %v2534 = vpop.f32.mrb[0].mxu0
      %v2535 = vadd.f32 %v2230, %v2534
      %v2536 = vpop.f32.mrb[0].mxu0
      %v2537 = vpop.f32.mrb[0].mxu0
      %v2538 = vadd.f32 %v2233, %v2537
      %v2539 = vpop.f32.mrb[0].mxu0
      %2540 = vmatprep.mubr.bf16.mxu0 %v1090
      %2541 = vmatmul.mubr.bf16.gmra.mrb[0].mxu0 %v954
      %v2542 = vpop.f32.mrb[0].mxu0
      %v2543 = vadd.f32 %v2238, %v2542
      %v2544 = vpop.f32.mrb[0].mxu0
      %v2545 = vpop.f32.mrb[0].mxu0
      %v2546 = vadd.f32 %v2241, %v2545
      %v2547 = vpop.f32.mrb[0].mxu0
      %2548 = vmatprep.mubr.bf16.mxu0 %v1102
      %2549 = vmatmul.mubr.bf16.gmra.mrb[0].mxu0 %v955
      %v2550 = vpop.f32.mrb[0].mxu0
      %v2551 = vadd.f32 %v2246, %v2550
      %v2552 = vpop.f32.mrb[0].mxu0
      %v2553 = vpop.f32.mrb[0].mxu0
      %v2554 = vadd.f32 %v2249, %v2553
      %v2555 = vpop.f32.mrb[0].mxu0
      %2556 = vmatprep.mubr.bf16.mxu0 %v1114
      %2557 = vmatmul.mubr.bf16.gmra.mrb[0].mxu0 %v956
      %v2558 = vpop.f32.mrb[0].mxu0
      %v2559 = vadd.f32 %v2254, %v2558
      %v2560 = vpop.f32.mrb[0].mxu0
      %v2561 = vpop.f32.mrb[0].mxu0
      %v2562 = vadd.f32 %v2257, %v2561
      %v2563 = vpop.f32.mrb[0].mxu0
      %2564 = vmatprep.mubr.bf16.mxu0 %v1126
      %2565 = vmatmul.mubr.bf16.gmra.mrb[0].mxu0 %v957
      %v2566 = vpop.f32.mrb[0].mxu0
      %v2567 = vadd.f32 %v2262, %v2566
      %v2568 = vpop.f32.mrb[0].mxu0
      %v2569 = vpop.f32.mrb[0].mxu0
      %v2570 = vadd.f32 %v2265, %v2569
      %v2571 = vpop.f32.mrb[0].mxu0
      %2572 = vmatprep.mubr.bf16.mxu0 %v1138
      %2573 = vmatmul.mubr.bf16.gmra.mrb[0].mxu0 %v958
      %v2574 = vpop.f32.mrb[0].mxu0
      %v2575 = vadd.f32 %v2270, %v2574
      %v2576 = vpop.f32.mrb[0].mxu0
      %v2577 = vpop.f32.mrb[0].mxu0
      %v2578 = vadd.f32 %v2273, %v2577
      %v2579 = vpop.f32.mrb[0].mxu0
      %2580 = vmatprep.mubr.bf16.mxu0 %v1150
      %2581 = vmatmul.mubr.bf16.gmra.mrb[0].mxu0 %v959
      %v2582 = vpop.f32.mrb[0].mxu0
      %v2583 = vadd.f32 %v2278, %v2582
      %v2584 = vpop.f32.mrb[0].mxu0
      %v2585 = vpop.f32.mrb[0].mxu0
      %v2586 = vadd.f32 %v2281, %v2585
      %v2587 = vpop.f32.mrb[0].mxu0
      %2588 = vmatprep.mubr.bf16.mxu0 %v1162
      %2589 = vmatmul.mubr.bf16.gmra.mrb[0].mxu0 %v960
      %v2590 = vpop.f32.mrb[0].mxu0
      %v2591 = vadd.f32 %v2286, %v2590
      %v2592 = vpop.f32.mrb[0].mxu0
      %v2593 = vpop.f32.mrb[0].mxu0
      %v2594 = vadd.f32 %v2289, %v2593
      %v2595 = vpop.f32.mrb[0].mxu0
      %2596 = vmatprep.mubr.bf16.mxu0 %v1174
      %2597 = vmatmul.mubr.bf16.gmra.mrb[0].mxu0 %v961
      %v2598 = vpop.f32.mrb[0].mxu0
      %v2599 = vadd.f32 %v2294, %v2598
      %v2600 = vpop.f32.mrb[0].mxu0
      %v2601 = vpop.f32.mrb[0].mxu0
      %v2602 = vadd.f32 %v2297, %v2601
      %v2603 = vpop.f32.mrb[0].mxu0
      %2604 = vmatprep.mubr.bf16.mxu0 %v1186
      %2605 = vmatmul.mubr.bf16.gmra.mrb[0].mxu0 %v962
      %v2606 = vpop.f32.mrb[0].mxu0
      %v2607 = vadd.f32 %v2302, %v2606
      %v2608 = vpop.f32.mrb[0].mxu0
      %v2609 = vpop.f32.mrb[0].mxu0
      %v2610 = vadd.f32 %v2305, %v2609
      %v2611 = vpop.f32.mrb[0].mxu0
      %2612 = vmatprep.mubr.bf16.mxu0 %v1198
      %2613 = vmatmul.mubr.bf16.gmra.mrb[0].mxu0 %v963
      %v2614 = vpop.f32.mrb[0].mxu0
      %v2615 = vadd.f32 %v2310, %v2614
      %v2616 = vpop.f32.mrb[0].mxu0
      %v2617 = vpop.f32.mrb[0].mxu0
      %v2618 = vadd.f32 %v2313, %v2617
      %v2619 = vpop.f32.mrb[0].mxu0
      %2620 = vmatprep.mubr.bf16.mxu0 %v1210
      %2621 = vmatmul.mubr.bf16.gmra.mrb[0].mxu0 %v964
      %v2622 = vpop.f32.mrb[0].mxu0
      %v2623 = vadd.f32 %v2318, %v2622
      %v2624 = vpop.f32.mrb[0].mxu0
      %v2625 = vpop.f32.mrb[0].mxu0
      %v2626 = vadd.f32 %v2321, %v2625
      %v2627 = vpop.f32.mrb[0].mxu0
      %2628 = vmatprep.mubr.bf16.mxu0 %v1222
      %2629 = vmatmul.mubr.bf16.gmra.mrb[0].mxu0 %v965
      %v2630 = vpop.f32.mrb[0].mxu0
      %v2631 = vadd.f32 %v2326, %v2630
      %v2632 = vpop.f32.mrb[0].mxu0
      %v2633 = vpop.f32.mrb[0].mxu0
      %v2634 = vadd.f32 %v2329, %v2633
      %v2635 = vpop.f32.mrb[0].mxu0
      %2636 = vdwg.mxu0
      %2637 = vmatprep.subr.bf16.mxu0 0
      %2638 = vmatpush1.bf16.msra.mxu0 %v2444
      %2639 = vmatprep.subr.bf16.mxu0 0
      %2640 = vmatpush1.bf16.msra.mxu0 %v2445
      %2641 = vmatprep.subr.bf16.mxu0 0
      %2642 = vmatpush1.bf16.msra.mxu0 %v2446
      %2643 = vmatprep.subr.bf16.mxu0 0
      %2644 = vmatpush1.bf16.msra.mxu0 %v2447
      %2645 = vmatprep.subr.bf16.mxu0 0
      %2646 = vmatpush1.bf16.msra.mxu0 %v2448
      %2647 = vmatprep.subr.bf16.mxu0 0
      %2648 = vmatpush1.bf16.msra.mxu0 %v2449
      %2649 = vmatprep.subr.bf16.mxu0 0
      %2650 = vmatpush1.bf16.msra.mxu0 %v2450
      %2651 = vmatprep.subr.bf16.mxu0 0
      %2652 = vmatpush1.bf16.msra.mxu0 %v2451
      %2653 = vmatprep.subr.bf16.mxu0 0
      %2654 = vmatpush1.bf16.msra.mxu0 0
      %2655 = vmatprep.subr.bf16.mxu0 0
      %2656 = vmatpush1.bf16.msra.mxu0 0
      %2657 = vmatprep.subr.bf16.mxu0 0
      %2658 = vmatpush1.bf16.msra.mxu0 0
      %2659 = vmatprep.subr.bf16.mxu0 0
      %2660 = vmatpush1.bf16.msra.mxu0 0
      %2661 = vmatprep.subr.bf16.mxu0 0
      %2662 = vmatpush1.bf16.msra.mxu0 0
      %2663 = vmatprep.subr.bf16.mxu0 0
      %2664 = vmatpush1.bf16.msra.mxu0 0
      %2665 = vmatprep.subr.bf16.mxu0 0
      %2666 = vmatpush1.bf16.msra.mxu0 0
      %2667 = vmatprep.subr.bf16.mxu0 0
      %2668 = vmatpush1.bf16.msra.mxu0 0
      %2669 = vmatprep.mubr.bf16.mxu0 0
      %2670 = vmatmul.mubr.bf16.gmra.mrb[0].mxu0 %v1242
      %v2671 = vpop.f32.mrb[0].mxu0
      %v2672 = vadd.f32 %v2511, %v2671
      %v2673 = vpop.f32.mrb[0].mxu0
      %v2674 = vpop.f32.mrb[0].mxu0
      %v2675 = vadd.f32 %v2514, %v2674
      %v2676 = vpop.f32.mrb[0].mxu0
      %2677 = vmatprep.mubr.bf16.mxu0 0
      %2678 = vmatmul.mubr.bf16.gmra.mrb[0].mxu0 %v1245
      %v2679 = vpop.f32.mrb[0].mxu0
      %v2680 = vadd.f32 %v2519, %v2679
      %v2681 = vpop.f32.mrb[0].mxu0
      %v2682 = vpop.f32.mrb[0].mxu0
      %v2683 = vadd.f32 %v2522, %v2682
      %v2684 = vpop.f32.mrb[0].mxu0
      %2685 = vmatprep.mubr.bf16.mxu0 0
      %2686 = vmatmul.mubr.bf16.gmra.mrb[0].mxu0 %v1248
      %v2687 = vpop.f32.mrb[0].mxu0
      %v2688 = vadd.f32 %v2527, %v2687
      %v2689 = vpop.f32.mrb[0].mxu0
      %v2690 = vpop.f32.mrb[0].mxu0
      %v2691 = vadd.f32 %v2530, %v2690
      %v2692 = vpop.f32.mrb[0].mxu0
      %2693 = vmatprep.mubr.bf16.mxu0 0
      %2694 = vmatmul.mubr.bf16.gmra.mrb[0].mxu0 %v1251
      %v2695 = vpop.f32.mrb[0].mxu0
      %v2696 = vadd.f32 %v2535, %v2695
      %v2697 = vpop.f32.mrb[0].mxu0
      %v2698 = vpop.f32.mrb[0].mxu0
      %v2699 = vadd.f32 %v2538, %v2698
      %v2700 = vpop.f32.mrb[0].mxu0
      %2701 = vmatprep.mubr.bf16.mxu0 0
      %2702 = vmatmul.mubr.bf16.gmra.mrb[0].mxu0 %v1254
      %v2703 = vpop.f32.mrb[0].mxu0
      %v2704 = vadd.f32 %v2543, %v2703
      %v2705 = vpop.f32.mrb[0].mxu0
      %v2706 = vpop.f32.mrb[0].mxu0
      %v2707 = vadd.f32 %v2546, %v2706
      %v2708 = vpop.f32.mrb[0].mxu0
      %2709 = vmatprep.mubr.bf16.mxu0 0
      %2710 = vmatmul.mubr.bf16.gmra.mrb[0].mxu0 %v1257
      %v2711 = vpop.f32.mrb[0].mxu0
      %v2712 = vadd.f32 %v2551, %v2711
      %v2713 = vpop.f32.mrb[0].mxu0
      %v2714 = vpop.f32.mrb[0].mxu0
      %v2715 = vadd.f32 %v2554, %v2714
      %v2716 = vpop.f32.mrb[0].mxu0
      %2717 = vmatprep.mubr.bf16.mxu0 0
      %2718 = vmatmul.mubr.bf16.gmra.mrb[0].mxu0 %v1260
      %v2719 = vpop.f32.mrb[0].mxu0
      %v2720 = vadd.f32 %v2559, %v2719
      %v2721 = vpop.f32.mrb[0].mxu0
      %v2722 = vpop.f32.mrb[0].mxu0
      %v2723 = vadd.f32 %v2562, %v2722
      %v2724 = vpop.f32.mrb[0].mxu0
      %2725 = vmatprep.mubr.bf16.mxu0 0
      %2726 = vmatmul.mubr.bf16.gmra.mrb[0].mxu0 %v1263
      %v2727 = vpop.f32.mrb[0].mxu0
      %v2728 = vadd.f32 %v2567, %v2727
      %v2729 = vpop.f32.mrb[0].mxu0
      %v2730 = vpop.f32.mrb[0].mxu0
      %v2731 = vadd.f32 %v2570, %v2730
      %v2732 = vpop.f32.mrb[0].mxu0
      %2733 = vmatprep.mubr.bf16.mxu0 0
      %2734 = vmatmul.mubr.bf16.gmra.mrb[0].mxu0 %v1266
      %v2735 = vpop.f32.mrb[0].mxu0
      %v2736 = vadd.f32 %v2575, %v2735
      %v2737 = vpop.f32.mrb[0].mxu0
      %v2738 = vpop.f32.mrb[0].mxu0
      %v2739 = vadd.f32 %v2578, %v2738
      %v2740 = vpop.f32.mrb[0].mxu0
      %2741 = vmatprep.mubr.bf16.mxu0 0
      %2742 = vmatmul.mubr.bf16.gmra.mrb[0].mxu0 %v1269
      %v2743 = vpop.f32.mrb[0].mxu0
      %v2744 = vadd.f32 %v2583, %v2743
      %v2745 = vpop.f32.mrb[0].mxu0
      %v2746 = vpop.f32.mrb[0].mxu0
      %v2747 = vadd.f32 %v2586, %v2746
      %v2748 = vpop.f32.mrb[0].mxu0
      %2749 = vmatprep.mubr.bf16.mxu0 0
      %2750 = vmatmul.mubr.bf16.gmra.mrb[0].mxu0 %v1272
      %v2751 = vpop.f32.mrb[0].mxu0
      %v2752 = vadd.f32 %v2591, %v2751
      %v2753 = vpop.f32.mrb[0].mxu0
      %v2754 = vpop.f32.mrb[0].mxu0
      %v2755 = vadd.f32 %v2594, %v2754
      %v2756 = vpop.f32.mrb[0].mxu0
      %2757 = vmatprep.mubr.bf16.mxu0 0
      %2758 = vmatmul.mubr.bf16.gmra.mrb[0].mxu0 %v1275
      %v2759 = vpop.f32.mrb[0].mxu0
      %v2760 = vadd.f32 %v2599, %v2759
      %v2761 = vpop.f32.mrb[0].mxu0
      %v2762 = vpop.f32.mrb[0].mxu0
      %v2763 = vadd.f32 %v2602, %v2762
      %v2764 = vpop.f32.mrb[0].mxu0
      %2765 = vmatprep.mubr.bf16.mxu0 0
      %2766 = vmatmul.mubr.bf16.gmra.mrb[0].mxu0 %v1278
      %v2767 = vpop.f32.mrb[0].mxu0
      %v2768 = vadd.f32 %v2607, %v2767
      %v2769 = vpop.f32.mrb[0].mxu0
      %v2770 = vpop.f32.mrb[0].mxu0
      %v2771 = vadd.f32 %v2610, %v2770
      %v2772 = vpop.f32.mrb[0].mxu0
      %2773 = vmatprep.mubr.bf16.mxu0 0
      %2774 = vmatmul.mubr.bf16.gmra.mrb[0].mxu0 %v1281
      %v2775 = vpop.f32.mrb[0].mxu0
      %v2776 = vadd.f32 %v2615, %v2775
      %v2777 = vpop.f32.mrb[0].mxu0
      %v2778 = vpop.f32.mrb[0].mxu0
      %v2779 = vadd.f32 %v2618, %v2778
      %v2780 = vpop.f32.mrb[0].mxu0
      %2781 = vmatprep.mubr.bf16.mxu0 0
      %2782 = vmatmul.mubr.bf16.gmra.mrb[0].mxu0 %v1284
      %v2783 = vpop.f32.mrb[0].mxu0
      %v2784 = vadd.f32 %v2623, %v2783
      %v2785 = vpop.f32.mrb[0].mxu0
      %v2786 = vpop.f32.mrb[0].mxu0
      %v2787 = vadd.f32 %v2626, %v2786
      %v2788 = vpop.f32.mrb[0].mxu0
      %2789 = vmatprep.mubr.bf16.mxu0 0
      %2790 = vmatmul.mubr.bf16.gmra.mrb[0].mxu0 %v1287
      %v2791 = vpop.f32.mrb[0].mxu0
      %v2792 = vadd.f32 %v2631, %v2791
      %v2793 = vpop.f32.mrb[0].mxu0
      %v2794 = vpop.f32.mrb[0].mxu0
      %v2795 = vadd.f32 %v2634, %v2794
      %v2796 = vpop.f32.mrb[0].mxu0
      %2797 = vdwg.mxu0
      %s2798 = scalar_lea.vmem [#allocation2], 24
      %v2799 = vld [vmem:[%s2798] sm:$0xf]
      %v2800 = vld [vmem:[%s2798 + $0x4] sm:$0xf]
      %v2801 = vld [vmem:[%s2798 + $0x8] sm:$0x1]
      %v2802 = vld [vmem:[%s2798 + $0xc] sm:$0xf]
      %v2803 = vld [vmem:[%s2798 + $0x10] sm:$0xf]
      %v2804 = vld [vmem:[%s2798 + $0x14] sm:$0x1]
      %v2805 = vld [vmem:[%s2798 + $0x18] sm:$0xf]
      %v2806 = vld [vmem:[%s2798 + $0x1c] sm:$0xf]
      %v2807 = vld [vmem:[%s2798 + $0x20] sm:$0x1]
      %v2808 = vld [vmem:[%s2798 + $0x24] sm:$0xf]
      %v2809 = vld [vmem:[%s2798 + $0x28] sm:$0xf]
      %v2810 = vld [vmem:[%s2798 + $0x2c] sm:$0x1]
      %v2811 = vld [vmem:[%s2798 + $0x30] sm:$0xf]
      %v2812 = vld [vmem:[%s2798 + $0x34] sm:$0xf]
      %v2813 = vld [vmem:[%s2798 + $0x38] sm:$0x1]
      %v2814 = vld [vmem:[%s2798 + $0x3c] sm:$0xf]
      %v2815 = vld [vmem:[%s2798 + $0x40] sm:$0xf]
      %v2816 = vld [vmem:[%s2798 + $0x44] sm:$0x1]
      %v2817 = vld [vmem:[%s2798 + $0x48] sm:$0xf]
      %v2818 = vld [vmem:[%s2798 + $0x4c] sm:$0xf]
      %v2819 = vld [vmem:[%s2798 + $0x50] sm:$0x1]
      %v2820 = vld [vmem:[%s2798 + $0x54] sm:$0xf]
      %v2821 = vld [vmem:[%s2798 + $0x58] sm:$0xf]
      %v2822 = vld [vmem:[%s2798 + $0x5c] sm:$0x1]
      %v2823 = vld [vmem:[%s2798 + $0x60] sm:$0xf]
      %v2824 = vld [vmem:[%s2798 + $0x64] sm:$0xf]
      %v2825 = vld [vmem:[%s2798 + $0x68] sm:$0x1]
      %v2826 = vld [vmem:[%s2798 + $0x6c] sm:$0xf]
      %v2827 = vld [vmem:[%s2798 + $0x70] sm:$0xf]
      %v2828 = vld [vmem:[%s2798 + $0x74] sm:$0x1]
      %v2829 = vld [vmem:[%s2798 + $0x78] sm:$0xf]
      %v2830 = vld [vmem:[%s2798 + $0x7c] sm:$0xf]
      %v2831 = vld [vmem:[%s2798 + $0x80] sm:$0x1]
      %v2832 = vld [vmem:[%s2798 + $0x84] sm:$0xf]
      %v2833 = vld [vmem:[%s2798 + $0x88] sm:$0xf]
      %v2834 = vld [vmem:[%s2798 + $0x8c] sm:$0x1]
      %v2835 = vld [vmem:[%s2798 + $0x90] sm:$0xf]
      %v2836 = vld [vmem:[%s2798 + $0x94] sm:$0xf]
      %v2837 = vld [vmem:[%s2798 + $0x98] sm:$0x1]
      %v2838 = vld [vmem:[%s2798 + $0x9c] sm:$0xf]
      %v2839 = vld [vmem:[%s2798 + $0xa0] sm:$0xf]
      %v2840 = vld [vmem:[%s2798 + $0xa4] sm:$0x1]
      %v2841 = vld [vmem:[%s2798 + $0xa8] sm:$0xf]
      %v2842 = vld [vmem:[%s2798 + $0xac] sm:$0xf]
      %v2843 = vld [vmem:[%s2798 + $0xb0] sm:$0x1]
      %v2844 = vld [vmem:[%s2798 + $0xb4] sm:$0xf]
      %v2845 = vld [vmem:[%s2798 + $0xb8] sm:$0xf]
      %v2846 = vld [vmem:[%s2798 + $0xbc] sm:$0x1]
      %v2879 = vunpack.c.l.b16 %v2799
      %v2880 = vunpack.c.l.b16 %v2800
      %v2881 = vunpack.c.l.b16 %v2802
      %v2882 = vunpack.c.l.b16 %v2803
      %v2883 = vunpack.c.l.b16 %v2805
      %v2884 = vunpack.c.l.b16 %v2806
      %v2885 = vunpack.c.l.b16 %v2808
      %v2886 = vunpack.c.l.b16 %v2809
      %v2887 = vunpack.c.l.b16 %v2811
      %v2888 = vunpack.c.l.b16 %v2812
      %v2889 = vunpack.c.l.b16 %v2814
      %v2890 = vunpack.c.l.b16 %v2815
      %v2891 = vunpack.c.l.b16 %v2817
      %v2892 = vunpack.c.l.b16 %v2818
      %v2893 = vunpack.c.l.b16 %v2820
      %v2894 = vunpack.c.l.b16 %v2821
      %v2895 = vunpack.c.l.b16 %v2823
      %v2896 = vunpack.c.l.b16 %v2824
      %v2897 = vunpack.c.l.b16 %v2826
      %v2898 = vunpack.c.l.b16 %v2827
      %v2899 = vunpack.c.l.b16 %v2829
      %v2900 = vunpack.c.l.b16 %v2830
      %v2901 = vunpack.c.l.b16 %v2832
      %v2902 = vunpack.c.l.b16 %v2833
      %v2903 = vunpack.c.l.b16 %v2835
      %v2904 = vunpack.c.l.b16 %v2836
      %v2905 = vunpack.c.l.b16 %v2838
      %v2906 = vunpack.c.l.b16 %v2839
      %v2907 = vunpack.c.l.b16 %v2841
      %v2908 = vunpack.c.l.b16 %v2842
      %v2909 = vunpack.c.l.b16 %v2844
      %v2910 = vunpack.c.l.b16 %v2845
      %v2911 = vpack.c.b16 %v2880, %v2879
      %v2912 = vpack.c.b16 %v2882, %v2881
      %v2913 = vpack.c.b16 %v2884, %v2883
      %v2914 = vpack.c.b16 %v2886, %v2885
      %v2915 = vpack.c.b16 %v2888, %v2887
      %v2916 = vpack.c.b16 %v2890, %v2889
      %v2917 = vpack.c.b16 %v2892, %v2891
      %v2918 = vpack.c.b16 %v2894, %v2893
      %v2919 = vpack.c.b16 %v2896, %v2895
      %v2920 = vpack.c.b16 %v2898, %v2897
      %v2921 = vpack.c.b16 %v2900, %v2899
      %v2922 = vpack.c.b16 %v2902, %v2901
      %v2923 = vpack.c.b16 %v2904, %v2903
      %v2924 = vpack.c.b16 %v2906, %v2905
      %v2925 = vpack.c.b16 %v2908, %v2907
      %v2926 = vpack.c.b16 %v2910, %v2909
      %v2959 = vunpack.c.l.b16 %v2801
      %v2960 = vunpack.c.l.b16 %v2804
      %v2961 = vunpack.c.l.b16 %v2807
      %v2962 = vunpack.c.l.b16 %v2810
      %v2963 = vunpack.c.l.b16 %v2813
      %v2964 = vunpack.c.l.b16 %v2816
      %v2965 = vunpack.c.l.b16 %v2819
      %v2966 = vunpack.c.l.b16 %v2822
      %v2967 = vunpack.c.l.b16 %v2825
      %v2968 = vunpack.c.l.b16 %v2828
      %v2969 = vunpack.c.l.b16 %v2831
      %v2970 = vunpack.c.l.b16 %v2834
      %v2971 = vunpack.c.l.b16 %v2837
      %v2972 = vunpack.c.l.b16 %v2840
      %v2973 = vunpack.c.l.b16 %v2843
      %v2974 = vunpack.c.l.b16 %v2846
      %v2975 = vpack.c.b16 %v2959, %v2959
      %v2976 = vpack.c.b16 %v2960, %v2960
      %v2977 = vpack.c.b16 %v2961, %v2961
      %v2978 = vpack.c.b16 %v2962, %v2962
      %v2979 = vpack.c.b16 %v2963, %v2963
      %v2980 = vpack.c.b16 %v2964, %v2964
      %v2981 = vpack.c.b16 %v2965, %v2965
      %v2982 = vpack.c.b16 %v2966, %v2966
      %v2983 = vpack.c.b16 %v2967, %v2967
      %v2984 = vpack.c.b16 %v2968, %v2968
      %v2985 = vpack.c.b16 %v2969, %v2969
      %v2986 = vpack.c.b16 %v2970, %v2970
      %v2987 = vpack.c.b16 %v2971, %v2971
      %v2988 = vpack.c.b16 %v2972, %v2972
      %v2989 = vpack.c.b16 %v2973, %v2973
      %v2990 = vpack.c.b16 %v2974, %v2974
      %v2992 = vshrl.u32 %v2911, 16
      %v2994 = vshll.u32 %v2911, 16
      %v2996 = vrot.slane %v2994, 1
      %v2997 = vor.u32 %v2992, %v2996
      %v2999 = vshll.u32 %v2975, 16
      %v3001 = vrot.slane %v2999, 1
      %v3002 = vsel %vm1030, %v2997, %v3001
      %v3004 = vshrl.u32 %v2912, 16
      %v3006 = vshll.u32 %v2912, 16
      %v3008 = vrot.slane %v3006, 1
      %v3009 = vor.u32 %v3004, %v3008
      %v3011 = vshll.u32 %v2976, 16
      %v3013 = vrot.slane %v3011, 1
      %v3014 = vsel %vm1030, %v3009, %v3013
      %v3016 = vshrl.u32 %v2913, 16
      %v3018 = vshll.u32 %v2913, 16
      %v3020 = vrot.slane %v3018, 1
      %v3021 = vor.u32 %v3016, %v3020
      %v3023 = vshll.u32 %v2977, 16
      %v3025 = vrot.slane %v3023, 1
      %v3026 = vsel %vm1030, %v3021, %v3025
      %v3028 = vshrl.u32 %v2914, 16
      %v3030 = vshll.u32 %v2914, 16
      %v3032 = vrot.slane %v3030, 1
      %v3033 = vor.u32 %v3028, %v3032
      %v3035 = vshll.u32 %v2978, 16
      %v3037 = vrot.slane %v3035, 1
      %v3038 = vsel %vm1030, %v3033, %v3037
      %v3040 = vshrl.u32 %v2915, 16
      %v3042 = vshll.u32 %v2915, 16
      %v3044 = vrot.slane %v3042, 1
      %v3045 = vor.u32 %v3040, %v3044
      %v3047 = vshll.u32 %v2979, 16
      %v3049 = vrot.slane %v3047, 1
      %v3050 = vsel %vm1030, %v3045, %v3049
      %v3052 = vshrl.u32 %v2916, 16
      %v3054 = vshll.u32 %v2916, 16
      %v3056 = vrot.slane %v3054, 1
      %v3057 = vor.u32 %v3052, %v3056
      %v3059 = vshll.u32 %v2980, 16
      %v3061 = vrot.slane %v3059, 1
      %v3062 = vsel %vm1030, %v3057, %v3061
      %v3064 = vshrl.u32 %v2917, 16
      %v3066 = vshll.u32 %v2917, 16
      %v3068 = vrot.slane %v3066, 1
      %v3069 = vor.u32 %v3064, %v3068
      %v3071 = vshll.u32 %v2981, 16
      %v3073 = vrot.slane %v3071, 1
      %v3074 = vsel %vm1030, %v3069, %v3073
      %v3076 = vshrl.u32 %v2918, 16
      %v3078 = vshll.u32 %v2918, 16
      %v3080 = vrot.slane %v3078, 1
      %v3081 = vor.u32 %v3076, %v3080
      %v3083 = vshll.u32 %v2982, 16
      %v3085 = vrot.slane %v3083, 1
      %v3086 = vsel %vm1030, %v3081, %v3085
      %v3088 = vshrl.u32 %v2919, 16
      %v3090 = vshll.u32 %v2919, 16
      %v3092 = vrot.slane %v3090, 1
      %v3093 = vor.u32 %v3088, %v3092
      %v3095 = vshll.u32 %v2983, 16
      %v3097 = vrot.slane %v3095, 1
      %v3098 = vsel %vm1030, %v3093, %v3097
      %v3100 = vshrl.u32 %v2920, 16
      %v3102 = vshll.u32 %v2920, 16
      %v3104 = vrot.slane %v3102, 1
      %v3105 = vor.u32 %v3100, %v3104
      %v3107 = vshll.u32 %v2984, 16
      %v3109 = vrot.slane %v3107, 1
      %v3110 = vsel %vm1030, %v3105, %v3109
      %v3112 = vshrl.u32 %v2921, 16
      %v3114 = vshll.u32 %v2921, 16
      %v3116 = vrot.slane %v3114, 1
      %v3117 = vor.u32 %v3112, %v3116
      %v3119 = vshll.u32 %v2985, 16
      %v3121 = vrot.slane %v3119, 1
      %v3122 = vsel %vm1030, %v3117, %v3121
      %v3124 = vshrl.u32 %v2922, 16
      %v3126 = vshll.u32 %v2922, 16
      %v3128 = vrot.slane %v3126, 1
      %v3129 = vor.u32 %v3124, %v3128
      %v3131 = vshll.u32 %v2986, 16
      %v3133 = vrot.slane %v3131, 1
      %v3134 = vsel %vm1030, %v3129, %v3133
      %v3136 = vshrl.u32 %v2923, 16
      %v3138 = vshll.u32 %v2923, 16
      %v3140 = vrot.slane %v3138, 1
      %v3141 = vor.u32 %v3136, %v3140
      %v3143 = vshll.u32 %v2987, 16
      %v3145 = vrot.slane %v3143, 1
      %v3146 = vsel %vm1030, %v3141, %v3145
      %v3148 = vshrl.u32 %v2924, 16
      %v3150 = vshll.u32 %v2924, 16
      %v3152 = vrot.slane %v3150, 1
      %v3153 = vor.u32 %v3148, %v3152
      %v3155 = vshll.u32 %v2988, 16
      %v3157 = vrot.slane %v3155, 1
      %v3158 = vsel %vm1030, %v3153, %v3157
      %v3160 = vshrl.u32 %v2925, 16
      %v3162 = vshll.u32 %v2925, 16
      %v3164 = vrot.slane %v3162, 1
      %v3165 = vor.u32 %v3160, %v3164
      %v3167 = vshll.u32 %v2989, 16
      %v3169 = vrot.slane %v3167, 1
      %v3170 = vsel %vm1030, %v3165, %v3169
      %v3172 = vshrl.u32 %v2926, 16
      %v3174 = vshll.u32 %v2926, 16
      %v3176 = vrot.slane %v3174, 1
      %v3177 = vor.u32 %v3172, %v3176
      %v3179 = vshll.u32 %v2990, 16
      %v3181 = vrot.slane %v3179, 1
      %v3182 = vsel %vm1030, %v3177, %v3181
      %v3199 = vrot.slane %v2911, 1
      %v3200 = vrot.slane %v2975, 1
      %v3201 = vsel %vm1239, %v3199, %v3200
      %v3202 = vrot.slane %v2912, 1
      %v3203 = vrot.slane %v2976, 1
      %v3204 = vsel %vm1239, %v3202, %v3203
      %v3205 = vrot.slane %v2913, 1
      %v3206 = vrot.slane %v2977, 1
      %v3207 = vsel %vm1239, %v3205, %v3206
      %v3208 = vrot.slane %v2914, 1
      %v3209 = vrot.slane %v2978, 1
      %v3210 = vsel %vm1239, %v3208, %v3209
      %v3211 = vrot.slane %v2915, 1
      %v3212 = vrot.slane %v2979, 1
      %v3213 = vsel %vm1239, %v3211, %v3212
      %v3214 = vrot.slane %v2916, 1
      %v3215 = vrot.slane %v2980, 1
      %v3216 = vsel %vm1239, %v3214, %v3215
      %v3217 = vrot.slane %v2917, 1
      %v3218 = vrot.slane %v2981, 1
      %v3219 = vsel %vm1239, %v3217, %v3218
      %v3220 = vrot.slane %v2918, 1
      %v3221 = vrot.slane %v2982, 1
      %v3222 = vsel %vm1239, %v3220, %v3221
      %v3223 = vrot.slane %v2919, 1
      %v3224 = vrot.slane %v2983, 1
      %v3225 = vsel %vm1239, %v3223, %v3224
      %v3226 = vrot.slane %v2920, 1
      %v3227 = vrot.slane %v2984, 1
      %v3228 = vsel %vm1239, %v3226, %v3227
      %v3229 = vrot.slane %v2921, 1
      %v3230 = vrot.slane %v2985, 1
      %v3231 = vsel %vm1239, %v3229, %v3230
      %v3232 = vrot.slane %v2922, 1
      %v3233 = vrot.slane %v2986, 1
      %v3234 = vsel %vm1239, %v3232, %v3233
      %v3235 = vrot.slane %v2923, 1
      %v3236 = vrot.slane %v2987, 1
      %v3237 = vsel %vm1239, %v3235, %v3236
      %v3238 = vrot.slane %v2924, 1
      %v3239 = vrot.slane %v2988, 1
      %v3240 = vsel %vm1239, %v3238, %v3239
      %v3241 = vrot.slane %v2925, 1
      %v3242 = vrot.slane %v2989, 1
      %v3243 = vsel %vm1239, %v3241, %v3242
      %v3244 = vrot.slane %v2926, 1
      %v3245 = vrot.slane %v2990, 1
      %v3246 = vsel %vm1239, %v3244, %v3245
      %s3263 = scalar_lea.vmem %s3, 384
      %v3264 = vld [vmem:[%s3263] sm:$0xf]
      %v3265 = vld [vmem:[%s3263 + $0x4] sm:$0xf]
      %v3266 = vld [vmem:[%s3263 + $0x8] sm:$0xf]
      %v3267 = vld [vmem:[%s3263 + $0xc] sm:$0xf]
      %v3268 = vld [vmem:[%s3263 + $0x10] sm:$0xf]
      %v3269 = vld [vmem:[%s3263 + $0x14] sm:$0xf]
      %v3270 = vld [vmem:[%s3263 + $0x18] sm:$0xf]
      %v3271 = vld [vmem:[%s3263 + $0x1c] sm:$0xf]
      %v3272 = vld [vmem:[%s3263 + $0x20] sm:$0xf]
      %v3273 = vld [vmem:[%s3263 + $0x24] sm:$0xf]
      %v3274 = vld [vmem:[%s3263 + $0x28] sm:$0xf]
      %v3275 = vld [vmem:[%s3263 + $0x2c] sm:$0xf]
      %v3276 = vld [vmem:[%s3263 + $0x30] sm:$0xf]
      %v3277 = vld [vmem:[%s3263 + $0x34] sm:$0xf]
      %v3278 = vld [vmem:[%s3263 + $0x38] sm:$0xf]
      %v3279 = vld [vmem:[%s3263 + $0x3c] sm:$0xf]
      %v3280 = vld [vmem:[%s3263 + $0x40] sm:$0xf]
      %v3281 = vld [vmem:[%s3263 + $0x44] sm:$0xf]
      %v3282 = vld [vmem:[%s3263 + $0x48] sm:$0xf]
      %v3283 = vld [vmem:[%s3263 + $0x4c] sm:$0xf]
      %v3284 = vld [vmem:[%s3263 + $0x50] sm:$0xf]
      %v3285 = vld [vmem:[%s3263 + $0x54] sm:$0xf]
      %v3286 = vld [vmem:[%s3263 + $0x58] sm:$0xf]
      %v3287 = vld [vmem:[%s3263 + $0x5c] sm:$0xf]
      %v3288 = vld [vmem:[%s3263 + $0x60] sm:$0xf]
      %v3289 = vld [vmem:[%s3263 + $0x64] sm:$0xf]
      %v3290 = vld [vmem:[%s3263 + $0x68] sm:$0xf]
      %v3291 = vld [vmem:[%s3263 + $0x6c] sm:$0xf]
      %v3292 = vld [vmem:[%s3263 + $0x70] sm:$0xf]
      %v3293 = vld [vmem:[%s3263 + $0x74] sm:$0xf]
      %v3294 = vld [vmem:[%s3263 + $0x78] sm:$0xf]
      %v3295 = vld [vmem:[%s3263 + $0x7c] sm:$0xf]
      %v3296 = vld [vmem:[%s3263 + $0x80] sm:$0xf]
      %v3297 = vld [vmem:[%s3263 + $0x84] sm:$0xf]
      %v3298 = vld [vmem:[%s3263 + $0x88] sm:$0xf]
      %v3299 = vld [vmem:[%s3263 + $0x8c] sm:$0xf]
      %v3300 = vld [vmem:[%s3263 + $0x90] sm:$0xf]
      %v3301 = vld [vmem:[%s3263 + $0x94] sm:$0xf]
      %v3302 = vld [vmem:[%s3263 + $0x98] sm:$0xf]
      %v3303 = vld [vmem:[%s3263 + $0x9c] sm:$0xf]
      %v3304 = vld [vmem:[%s3263 + $0xa0] sm:$0xf]
      %v3305 = vld [vmem:[%s3263 + $0xa4] sm:$0xf]
      %v3306 = vld [vmem:[%s3263 + $0xa8] sm:$0xf]
      %v3307 = vld [vmem:[%s3263 + $0xac] sm:$0xf]
      %v3308 = vld [vmem:[%s3263 + $0xb0] sm:$0xf]
      %v3309 = vld [vmem:[%s3263 + $0xb4] sm:$0xf]
      %v3310 = vld [vmem:[%s3263 + $0xb8] sm:$0xf]
      %v3311 = vld [vmem:[%s3263 + $0xbc] sm:$0xf]
      %v3360 = vunpack.c.l.b16 %v3264
      %v3361 = vunpack.c.l.b16 %v3265
      %v3362 = vunpack.c.l.b16 %v3266
      %v3363 = vunpack.c.l.b16 %v3267
      %v3364 = vunpack.c.l.b16 %v3268
      %v3365 = vunpack.c.l.b16 %v3269
      %v3366 = vunpack.c.l.b16 %v3270
      %v3367 = vunpack.c.l.b16 %v3271
      %v3368 = vunpack.c.l.b16 %v3272
      %v3369 = vunpack.c.l.b16 %v3273
      %v3370 = vunpack.c.l.b16 %v3274
      %v3371 = vunpack.c.l.b16 %v3275
      %v3372 = vunpack.c.l.b16 %v3276
      %v3373 = vunpack.c.l.b16 %v3277
      %v3374 = vunpack.c.l.b16 %v3278
      %v3375 = vunpack.c.l.b16 %v3279
      %v3376 = vunpack.c.l.b16 %v3280
      %v3377 = vunpack.c.l.b16 %v3281
      %v3378 = vunpack.c.l.b16 %v3282
      %v3379 = vunpack.c.l.b16 %v3283
      %v3380 = vunpack.c.l.b16 %v3284
      %v3381 = vunpack.c.l.b16 %v3285
      %v3382 = vunpack.c.l.b16 %v3286
      %v3383 = vunpack.c.l.b16 %v3287
      %v3384 = vunpack.c.l.b16 %v3288
      %v3385 = vunpack.c.l.b16 %v3289
      %v3386 = vunpack.c.l.b16 %v3290
      %v3387 = vunpack.c.l.b16 %v3291
      %v3388 = vunpack.c.l.b16 %v3292
      %v3389 = vunpack.c.l.b16 %v3293
      %v3390 = vunpack.c.l.b16 %v3294
      %v3391 = vunpack.c.l.b16 %v3295
      %v3392 = vunpack.c.l.b16 %v3296
      %v3393 = vunpack.c.l.b16 %v3297
      %v3394 = vunpack.c.l.b16 %v3298
      %v3395 = vunpack.c.l.b16 %v3299
      %v3396 = vunpack.c.l.b16 %v3300
      %v3397 = vunpack.c.l.b16 %v3301
      %v3398 = vunpack.c.l.b16 %v3302
      %v3399 = vunpack.c.l.b16 %v3303
      %v3400 = vunpack.c.l.b16 %v3304
      %v3401 = vunpack.c.l.b16 %v3305
      %v3402 = vunpack.c.l.b16 %v3306
      %v3403 = vunpack.c.l.b16 %v3307
      %v3404 = vunpack.c.l.b16 %v3308
      %v3405 = vunpack.c.l.b16 %v3309
      %v3406 = vunpack.c.l.b16 %v3310
      %v3407 = vunpack.c.l.b16 %v3311
      %v3408 = vpack.c.b16 %v3361, %v3360
      %v3409 = vpack.c.b16 %v3363, %v3362
      %v3410 = vpack.c.b16 %v3365, %v3364
      %v3411 = vpack.c.b16 %v3367, %v3366
      %v3412 = vpack.c.b16 %v3369, %v3368
      %v3413 = vpack.c.b16 %v3371, %v3370
      %v3414 = vpack.c.b16 %v3373, %v3372
      %v3415 = vpack.c.b16 %v3375, %v3374
      %v3416 = vpack.c.b16 %v3377, %v3376
      %v3417 = vpack.c.b16 %v3379, %v3378
      %v3418 = vpack.c.b16 %v3381, %v3380
      %v3419 = vpack.c.b16 %v3383, %v3382
      %v3420 = vpack.c.b16 %v3385, %v3384
      %v3421 = vpack.c.b16 %v3387, %v3386
      %v3422 = vpack.c.b16 %v3389, %v3388
      %v3423 = vpack.c.b16 %v3391, %v3390
      %v3424 = vpack.c.b16 %v3393, %v3392
      %v3425 = vpack.c.b16 %v3395, %v3394
      %v3426 = vpack.c.b16 %v3397, %v3396
      %v3427 = vpack.c.b16 %v3399, %v3398
      %v3428 = vpack.c.b16 %v3401, %v3400
      %v3429 = vpack.c.b16 %v3403, %v3402
      %v3430 = vpack.c.b16 %v3405, %v3404
      %v3431 = vpack.c.b16 %v3407, %v3406
      %3456 = vmatprep.subr.bf16.mxu0 0
      %3457 = vmatpush1.bf16.msra.mxu0 %v3408
      %3458 = vmatprep.subr.bf16.mxu0 0
      %3459 = vmatpush1.bf16.msra.mxu0 %v3409
      %3460 = vmatprep.subr.bf16.mxu0 0
      %3461 = vmatpush1.bf16.msra.mxu0 %v3410
      %3462 = vmatprep.subr.bf16.mxu0 0
      %3463 = vmatpush1.bf16.msra.mxu0 %v3411
      %3464 = vmatprep.subr.bf16.mxu0 0
      %3465 = vmatpush1.bf16.msra.mxu0 %v3412
      %3466 = vmatprep.subr.bf16.mxu0 0
      %3467 = vmatpush1.bf16.msra.mxu0 %v3413
      %3468 = vmatprep.subr.bf16.mxu0 0
      %3469 = vmatpush1.bf16.msra.mxu0 %v3414
      %3470 = vmatprep.subr.bf16.mxu0 0
      %3471 = vmatpush1.bf16.msra.mxu0 %v3415
      %3472 = vmatprep.subr.bf16.mxu0 0
      %3473 = vmatpush1.bf16.msra.mxu0 %v3416
      %3474 = vmatprep.subr.bf16.mxu0 0
      %3475 = vmatpush1.bf16.msra.mxu0 %v3417
      %3476 = vmatprep.subr.bf16.mxu0 0
      %3477 = vmatpush1.bf16.msra.mxu0 %v3418
      %3478 = vmatprep.subr.bf16.mxu0 0
      %3479 = vmatpush1.bf16.msra.mxu0 %v3419
      %3480 = vmatprep.subr.bf16.mxu0 0
      %3481 = vmatpush1.bf16.msra.mxu0 %v3420
      %3482 = vmatprep.subr.bf16.mxu0 0
      %3483 = vmatpush1.bf16.msra.mxu0 %v3421
      %3484 = vmatprep.subr.bf16.mxu0 0
      %3485 = vmatpush1.bf16.msra.mxu0 %v3422
      %3486 = vmatprep.subr.bf16.mxu0 0
      %3487 = vmatpush1.bf16.msra.mxu0 %v3423
      %3488 = vmatprep.mubr.bf16.mxu0 %v3002
      %3489 = vmatmul.mubr.bf16.gmra.mrb[0].mxu0 %v2911
      %v3490 = vpop.f32.mrb[0].mxu0
      %v3491 = vadd.f32 0.0, %v3490
      %v3492 = vpop.f32.mrb[0].mxu0
      %v3493 = vpop.f32.mrb[0].mxu0
      %v3494 = vadd.f32 0.0, %v3493
      %v3495 = vpop.f32.mrb[0].mxu0
      %3496 = vmatprep.mubr.bf16.mxu0 %v3014
      %3497 = vmatmul.mubr.bf16.gmra.mrb[0].mxu0 %v2912
      %v3498 = vpop.f32.mrb[0].mxu0
      %v3499 = vadd.f32 0.0, %v3498
      %v3500 = vpop.f32.mrb[0].mxu0
      %v3501 = vpop.f32.mrb[0].mxu0
      %v3502 = vadd.f32 0.0, %v3501
      %v3503 = vpop.f32.mrb[0].mxu0
      %3504 = vmatprep.mubr.bf16.mxu0 %v3026
      %3505 = vmatmul.mubr.bf16.gmra.mrb[0].mxu0 %v2913
      %v3506 = vpop.f32.mrb[0].mxu0
      %v3507 = vadd.f32 0.0, %v3506
      %v3508 = vpop.f32.mrb[0].mxu0
      %v3509 = vpop.f32.mrb[0].mxu0
      %v3510 = vadd.f32 0.0, %v3509
      %v3511 = vpop.f32.mrb[0].mxu0
      %3512 = vmatprep.mubr.bf16.mxu0 %v3038
      %3513 = vmatmul.mubr.bf16.gmra.mrb[0].mxu0 %v2914
      %v3514 = vpop.f32.mrb[0].mxu0
      %v3515 = vadd.f32 0.0, %v3514
      %v3516 = vpop.f32.mrb[0].mxu0
      %v3517 = vpop.f32.mrb[0].mxu0
      %v3518 = vadd.f32 0.0, %v3517
      %v3519 = vpop.f32.mrb[0].mxu0
      %3520 = vmatprep.mubr.bf16.mxu0 %v3050
      %3521 = vmatmul.mubr.bf16.gmra.mrb[0].mxu0 %v2915
      %v3522 = vpop.f32.mrb[0].mxu0
      %v3523 = vadd.f32 0.0, %v3522
      %v3524 = vpop.f32.mrb[0].mxu0
      %v3525 = vpop.f32.mrb[0].mxu0
      %v3526 = vadd.f32 0.0, %v3525
      %v3527 = vpop.f32.mrb[0].mxu0
      %3528 = vmatprep.mubr.bf16.mxu0 %v3062
      %3529 = vmatmul.mubr.bf16.gmra.mrb[0].mxu0 %v2916
      %v3530 = vpop.f32.mrb[0].mxu0
      %v3531 = vadd.f32 0.0, %v3530
      %v3532 = vpop.f32.mrb[0].mxu0
      %v3533 = vpop.f32.mrb[0].mxu0
      %v3534 = vadd.f32 0.0, %v3533
      %v3535 = vpop.f32.mrb[0].mxu0
      %3536 = vmatprep.mubr.bf16.mxu0 %v3074
      %3537 = vmatmul.mubr.bf16.gmra.mrb[0].mxu0 %v2917
      %v3538 = vpop.f32.mrb[0].mxu0
      %v3539 = vadd.f32 0.0, %v3538
      %v3540 = vpop.f32.mrb[0].mxu0
      %v3541 = vpop.f32.mrb[0].mxu0
      %v3542 = vadd.f32 0.0, %v3541
      %v3543 = vpop.f32.mrb[0].mxu0
      %3544 = vmatprep.mubr.bf16.mxu0 %v3086
      %3545 = vmatmul.mubr.bf16.gmra.mrb[0].mxu0 %v2918
      %v3546 = vpop.f32.mrb[0].mxu0
      %v3547 = vadd.f32 0.0, %v3546
      %v3548 = vpop.f32.mrb[0].mxu0
      %v3549 = vpop.f32.mrb[0].mxu0
      %v3550 = vadd.f32 0.0, %v3549
      %v3551 = vpop.f32.mrb[0].mxu0
      %3552 = vmatprep.mubr.bf16.mxu0 %v3098
      %3553 = vmatmul.mubr.bf16.gmra.mrb[0].mxu0 %v2919
      %v3554 = vpop.f32.mrb[0].mxu0
      %v3555 = vadd.f32 0.0, %v3554
      %v3556 = vpop.f32.mrb[0].mxu0
      %v3557 = vpop.f32.mrb[0].mxu0
      %v3558 = vadd.f32 0.0, %v3557
      %v3559 = vpop.f32.mrb[0].mxu0
      %3560 = vmatprep.mubr.bf16.mxu0 %v3110
      %3561 = vmatmul.mubr.bf16.gmra.mrb[0].mxu0 %v2920
      %v3562 = vpop.f32.mrb[0].mxu0
      %v3563 = vadd.f32 0.0, %v3562
      %v3564 = vpop.f32.mrb[0].mxu0
      %v3565 = vpop.f32.mrb[0].mxu0
      %v3566 = vadd.f32 0.0, %v3565
      %v3567 = vpop.f32.mrb[0].mxu0
      %3568 = vmatprep.mubr.bf16.mxu0 %v3122
      %3569 = vmatmul.mubr.bf16.gmra.mrb[0].mxu0 %v2921
      %v3570 = vpop.f32.mrb[0].mxu0
      %v3571 = vadd.f32 0.0, %v3570
      %v3572 = vpop.f32.mrb[0].mxu0
      %v3573 = vpop.f32.mrb[0].mxu0
      %v3574 = vadd.f32 0.0, %v3573
      %v3575 = vpop.f32.mrb[0].mxu0
      %3576 = vmatprep.mubr.bf16.mxu0 %v3134
      %3577 = vmatmul.mubr.bf16.gmra.mrb[0].mxu0 %v2922
      %v3578 = vpop.f32.mrb[0].mxu0
      %v3579 = vadd.f32 0.0, %v3578
      %v3580 = vpop.f32.mrb[0].mxu0
      %v3581 = vpop.f32.mrb[0].mxu0
      %v3582 = vadd.f32 0.0, %v3581
      %v3583 = vpop.f32.mrb[0].mxu0
      %3584 = vmatprep.mubr.bf16.mxu0 %v3146
      %3585 = vmatmul.mubr.bf16.gmra.mrb[0].mxu0 %v2923
      %v3586 = vpop.f32.mrb[0].mxu0
      %v3587 = vadd.f32 0.0, %v3586
      %v3588 = vpop.f32.mrb[0].mxu0
      %v3589 = vpop.f32.mrb[0].mxu0
      %v3590 = vadd.f32 0.0, %v3589
      %v3591 = vpop.f32.mrb[0].mxu0
      %3592 = vmatprep.mubr.bf16.mxu0 %v3158
      %3593 = vmatmul.mubr.bf16.gmra.mrb[0].mxu0 %v2924
      %v3594 = vpop.f32.mrb[0].mxu0
      %v3595 = vadd.f32 0.0, %v3594
      %v3596 = vpop.f32.mrb[0].mxu0
      %v3597 = vpop.f32.mrb[0].mxu0
      %v3598 = vadd.f32 0.0, %v3597
      %v3599 = vpop.f32.mrb[0].mxu0
      %3600 = vmatprep.mubr.bf16.mxu0 %v3170
      %3601 = vmatmul.mubr.bf16.gmra.mrb[0].mxu0 %v2925
      %v3602 = vpop.f32.mrb[0].mxu0
      %v3603 = vadd.f32 0.0, %v3602
      %v3604 = vpop.f32.mrb[0].mxu0
      %v3605 = vpop.f32.mrb[0].mxu0
      %v3606 = vadd.f32 0.0, %v3605
      %v3607 = vpop.f32.mrb[0].mxu0
      %3608 = vmatprep.mubr.bf16.mxu0 %v3182
      %3609 = vmatmul.mubr.bf16.gmra.mrb[0].mxu0 %v2926
      %v3610 = vpop.f32.mrb[0].mxu0
      %v3611 = vadd.f32 0.0, %v3610
      %v3612 = vpop.f32.mrb[0].mxu0
      %v3613 = vpop.f32.mrb[0].mxu0
      %v3614 = vadd.f32 0.0, %v3613
      %v3615 = vpop.f32.mrb[0].mxu0
      %3616 = vdwg.mxu0
      %3617 = vmatprep.subr.bf16.mxu0 0
      %3618 = vmatpush1.bf16.msra.mxu0 %v3424
      %3619 = vmatprep.subr.bf16.mxu0 0
      %3620 = vmatpush1.bf16.msra.mxu0 %v3425
      %3621 = vmatprep.subr.bf16.mxu0 0
      %3622 = vmatpush1.bf16.msra.mxu0 %v3426
      %3623 = vmatprep.subr.bf16.mxu0 0
      %3624 = vmatpush1.bf16.msra.mxu0 %v3427
      %3625 = vmatprep.subr.bf16.mxu0 0
      %3626 = vmatpush1.bf16.msra.mxu0 %v3428
      %3627 = vmatprep.subr.bf16.mxu0 0
      %3628 = vmatpush1.bf16.msra.mxu0 %v3429
      %3629 = vmatprep.subr.bf16.mxu0 0
      %3630 = vmatpush1.bf16.msra.mxu0 %v3430
      %3631 = vmatprep.subr.bf16.mxu0 0
      %3632 = vmatpush1.bf16.msra.mxu0 %v3431
      %3633 = vmatprep.subr.bf16.mxu0 0
      %3634 = vmatpush1.bf16.msra.mxu0 0
      %3635 = vmatprep.subr.bf16.mxu0 0
      %3636 = vmatpush1.bf16.msra.mxu0 0
      %3637 = vmatprep.subr.bf16.mxu0 0
      %3638 = vmatpush1.bf16.msra.mxu0 0
      %3639 = vmatprep.subr.bf16.mxu0 0
      %3640 = vmatpush1.bf16.msra.mxu0 0
      %3641 = vmatprep.subr.bf16.mxu0 0
      %3642 = vmatpush1.bf16.msra.mxu0 0
      %3643 = vmatprep.subr.bf16.mxu0 0
      %3644 = vmatpush1.bf16.msra.mxu0 0
      %3645 = vmatprep.subr.bf16.mxu0 0
      %3646 = vmatpush1.bf16.msra.mxu0 0
      %3647 = vmatprep.subr.bf16.mxu0 0
      %3648 = vmatpush1.bf16.msra.mxu0 0
      %3649 = vmatprep.mubr.bf16.mxu0 0
      %3650 = vmatmul.mubr.bf16.gmra.mrb[0].mxu0 %v3201
      %v3651 = vpop.f32.mrb[0].mxu0
      %v3652 = vadd.f32 %v3491, %v3651
      %v3653 = vpop.f32.mrb[0].mxu0
      %v3654 = vpop.f32.mrb[0].mxu0
      %v3655 = vadd.f32 %v3494, %v3654
      %v3656 = vpop.f32.mrb[0].mxu0
      %3657 = vmatprep.mubr.bf16.mxu0 0
      %3658 = vmatmul.mubr.bf16.gmra.mrb[0].mxu0 %v3204
      %v3659 = vpop.f32.mrb[0].mxu0
      %v3660 = vadd.f32 %v3499, %v3659
      %v3661 = vpop.f32.mrb[0].mxu0
      %v3662 = vpop.f32.mrb[0].mxu0
      %v3663 = vadd.f32 %v3502, %v3662
      %v3664 = vpop.f32.mrb[0].mxu0
      %3665 = vmatprep.mubr.bf16.mxu0 0
      %3666 = vmatmul.mubr.bf16.gmra.mrb[0].mxu0 %v3207
      %v3667 = vpop.f32.mrb[0].mxu0
      %v3668 = vadd.f32 %v3507, %v3667
      %v3669 = vpop.f32.mrb[0].mxu0
      %v3670 = vpop.f32.mrb[0].mxu0
      %v3671 = vadd.f32 %v3510, %v3670
      %v3672 = vpop.f32.mrb[0].mxu0
      %3673 = vmatprep.mubr.bf16.mxu0 0
      %3674 = vmatmul.mubr.bf16.gmra.mrb[0].mxu0 %v3210
      %v3675 = vpop.f32.mrb[0].mxu0
      %v3676 = vadd.f32 %v3515, %v3675
      %v3677 = vpop.f32.mrb[0].mxu0
      %v3678 = vpop.f32.mrb[0].mxu0
      %v3679 = vadd.f32 %v3518, %v3678
      %v3680 = vpop.f32.mrb[0].mxu0
      %3681 = vmatprep.mubr.bf16.mxu0 0
      %3682 = vmatmul.mubr.bf16.gmra.mrb[0].mxu0 %v3213
      %v3683 = vpop.f32.mrb[0].mxu0
      %v3684 = vadd.f32 %v3523, %v3683
      %v3685 = vpop.f32.mrb[0].mxu0
      %v3686 = vpop.f32.mrb[0].mxu0
      %v3687 = vadd.f32 %v3526, %v3686
      %v3688 = vpop.f32.mrb[0].mxu0
      %3689 = vmatprep.mubr.bf16.mxu0 0
      %3690 = vmatmul.mubr.bf16.gmra.mrb[0].mxu0 %v3216
      %v3691 = vpop.f32.mrb[0].mxu0
      %v3692 = vadd.f32 %v3531, %v3691
      %v3693 = vpop.f32.mrb[0].mxu0
      %v3694 = vpop.f32.mrb[0].mxu0
      %v3695 = vadd.f32 %v3534, %v3694
      %v3696 = vpop.f32.mrb[0].mxu0
      %3697 = vmatprep.mubr.bf16.mxu0 0
      %3698 = vmatmul.mubr.bf16.gmra.mrb[0].mxu0 %v3219
      %v3699 = vpop.f32.mrb[0].mxu0
      %v3700 = vadd.f32 %v3539, %v3699
      %v3701 = vpop.f32.mrb[0].mxu0
      %v3702 = vpop.f32.mrb[0].mxu0
      %v3703 = vadd.f32 %v3542, %v3702
      %v3704 = vpop.f32.mrb[0].mxu0
      %3705 = vmatprep.mubr.bf16.mxu0 0
      %3706 = vmatmul.mubr.bf16.gmra.mrb[0].mxu0 %v3222
      %v3707 = vpop.f32.mrb[0].mxu0
      %v3708 = vadd.f32 %v3547, %v3707
      %v3709 = vpop.f32.mrb[0].mxu0
      %v3710 = vpop.f32.mrb[0].mxu0
      %v3711 = vadd.f32 %v3550, %v3710
      %v3712 = vpop.f32.mrb[0].mxu0
      %3713 = vmatprep.mubr.bf16.mxu0 0
      %3714 = vmatmul.mubr.bf16.gmra.mrb[0].mxu0 %v3225
      %v3715 = vpop.f32.mrb[0].mxu0
      %v3716 = vadd.f32 %v3555, %v3715
      %v3717 = vpop.f32.mrb[0].mxu0
      %v3718 = vpop.f32.mrb[0].mxu0
      %v3719 = vadd.f32 %v3558, %v3718
      %v3720 = vpop.f32.mrb[0].mxu0
      %3721 = vmatprep.mubr.bf16.mxu0 0
      %3722 = vmatmul.mubr.bf16.gmra.mrb[0].mxu0 %v3228
      %v3723 = vpop.f32.mrb[0].mxu0
      %v3724 = vadd.f32 %v3563, %v3723
      %v3725 = vpop.f32.mrb[0].mxu0
      %v3726 = vpop.f32.mrb[0].mxu0
      %v3727 = vadd.f32 %v3566, %v3726
      %v3728 = vpop.f32.mrb[0].mxu0
      %3729 = vmatprep.mubr.bf16.mxu0 0
      %3730 = vmatmul.mubr.bf16.gmra.mrb[0].mxu0 %v3231
      %v3731 = vpop.f32.mrb[0].mxu0
      %v3732 = vadd.f32 %v3571, %v3731
      %v3733 = vpop.f32.mrb[0].mxu0
      %v3734 = vpop.f32.mrb[0].mxu0
      %v3735 = vadd.f32 %v3574, %v3734
      %v3736 = vpop.f32.mrb[0].mxu0
      %3737 = vmatprep.mubr.bf16.mxu0 0
      %3738 = vmatmul.mubr.bf16.gmra.mrb[0].mxu0 %v3234
      %v3739 = vpop.f32.mrb[0].mxu0
      %v3740 = vadd.f32 %v3579, %v3739
      %v3741 = vpop.f32.mrb[0].mxu0
      %v3742 = vpop.f32.mrb[0].mxu0
      %v3743 = vadd.f32 %v3582, %v3742
      %v3744 = vpop.f32.mrb[0].mxu0
      %3745 = vmatprep.mubr.bf16.mxu0 0
      %3746 = vmatmul.mubr.bf16.gmra.mrb[0].mxu0 %v3237
      %v3747 = vpop.f32.mrb[0].mxu0
      %v3748 = vadd.f32 %v3587, %v3747
      %v3749 = vpop.f32.mrb[0].mxu0
      %v3750 = vpop.f32.mrb[0].mxu0
      %v3751 = vadd.f32 %v3590, %v3750
      %v3752 = vpop.f32.mrb[0].mxu0
      %3753 = vmatprep.mubr.bf16.mxu0 0
      %3754 = vmatmul.mubr.bf16.gmra.mrb[0].mxu0 %v3240
      %v3755 = vpop.f32.mrb[0].mxu0
      %v3756 = vadd.f32 %v3595, %v3755
      %v3757 = vpop.f32.mrb[0].mxu0
      %v3758 = vpop.f32.mrb[0].mxu0
      %v3759 = vadd.f32 %v3598, %v3758
      %v3760 = vpop.f32.mrb[0].mxu0
      %3761 = vmatprep.mubr.bf16.mxu0 0
      %3762 = vmatmul.mubr.bf16.gmra.mrb[0].mxu0 %v3243
      %v3763 = vpop.f32.mrb[0].mxu0
      %v3764 = vadd.f32 %v3603, %v3763
      %v3765 = vpop.f32.mrb[0].mxu0
      %v3766 = vpop.f32.mrb[0].mxu0
      %v3767 = vadd.f32 %v3606, %v3766
      %v3768 = vpop.f32.mrb[0].mxu0
      %3769 = vmatprep.mubr.bf16.mxu0 0
      %3770 = vmatmul.mubr.bf16.gmra.mrb[0].mxu0 %v3246
      %v3771 = vpop.f32.mrb[0].mxu0
      %v3772 = vadd.f32 %v3611, %v3771
      %v3773 = vpop.f32.mrb[0].mxu0
      %v3774 = vpop.f32.mrb[0].mxu0
      %v3775 = vadd.f32 %v3614, %v3774
      %v3776 = vpop.f32.mrb[0].mxu0
      %3777 = vdwg.mxu0
      %v3778 = vadd.f32 %v2672, %v3652
      %v3779 = vadd.f32 %v2675, %v3655
      %v3780 = vadd.f32 %v2680, %v3660
      %v3781 = vadd.f32 %v2683, %v3663
      %v3782 = vadd.f32 %v2688, %v3668
      %v3783 = vadd.f32 %v2691, %v3671
      %v3784 = vadd.f32 %v2696, %v3676
      %v3785 = vadd.f32 %v2699, %v3679
      %v3786 = vadd.f32 %v2704, %v3684
      %v3787 = vadd.f32 %v2707, %v3687
      %v3788 = vadd.f32 %v2712, %v3692
      %v3789 = vadd.f32 %v2715, %v3695
      %v3790 = vadd.f32 %v2720, %v3700
      %v3791 = vadd.f32 %v2723, %v3703
      %v3792 = vadd.f32 %v2728, %v3708
      %v3793 = vadd.f32 %v2731, %v3711
      %v3794 = vadd.f32 %v2736, %v3716
      %v3795 = vadd.f32 %v2739, %v3719
      %v3796 = vadd.f32 %v2744, %v3724
      %v3797 = vadd.f32 %v2747, %v3727
      %v3798 = vadd.f32 %v2752, %v3732
      %v3799 = vadd.f32 %v2755, %v3735
      %v3800 = vadd.f32 %v2760, %v3740
      %v3801 = vadd.f32 %v2763, %v3743
      %v3802 = vadd.f32 %v2768, %v3748
      %v3803 = vadd.f32 %v2771, %v3751
      %v3804 = vadd.f32 %v2776, %v3756
      %v3805 = vadd.f32 %v2779, %v3759
      %v3806 = vadd.f32 %v2784, %v3764
      %v3807 = vadd.f32 %v2787, %v3767
      %v3808 = vadd.f32 %v2792, %v3772
      %v3809 = vadd.f32 %v2795, %v3775
      %v3810 = vld [vmem:[%s4] sm:$0x1]
      %v3812 = vlaneseq
      %v3813 = vshrl.u32 %v3812, 7
      %v3814 = vsub.s32 0, %v3813
      %v3815 = vrot.slane %v3810, %v3814
      %v3817 = vadd.f32 %v3778, %v3815
      %v3818 = vadd.f32 %v3779, %v3815
      %v3819 = vadd.f32 %v3780, %v3815
      %v3820 = vadd.f32 %v3781, %v3815
      %v3821 = vadd.f32 %v3782, %v3815
      %v3822 = vadd.f32 %v3783, %v3815
      %v3823 = vadd.f32 %v3784, %v3815
      %v3824 = vadd.f32 %v3785, %v3815
      %v3825 = vadd.f32 %v3786, %v3815
      %v3826 = vadd.f32 %v3787, %v3815
      %v3827 = vadd.f32 %v3788, %v3815
      %v3828 = vadd.f32 %v3789, %v3815
      %v3829 = vadd.f32 %v3790, %v3815
      %v3830 = vadd.f32 %v3791, %v3815
      %v3831 = vadd.f32 %v3792, %v3815
      %v3832 = vadd.f32 %v3793, %v3815
      %v3833 = vadd.f32 %v3794, %v3815
      %v3834 = vadd.f32 %v3795, %v3815
      %v3835 = vadd.f32 %v3796, %v3815
      %v3836 = vadd.f32 %v3797, %v3815
      %v3837 = vadd.f32 %v3798, %v3815
      %v3838 = vadd.f32 %v3799, %v3815
      %v3839 = vadd.f32 %v3800, %v3815
      %v3840 = vadd.f32 %v3801, %v3815
      %v3841 = vadd.f32 %v3802, %v3815
      %v3842 = vadd.f32 %v3803, %v3815
      %v3843 = vadd.f32 %v3804, %v3815
      %v3844 = vadd.f32 %v3805, %v3815
      %v3845 = vadd.f32 %v3806, %v3815
      %v3846 = vadd.f32 %v3807, %v3815
      %v3847 = vadd.f32 %v3808, %v3815
      %v3848 = vadd.f32 %v3809, %v3815
      %v3849 = vxor.u32 %v3817, 2147483648
      %v3850 = vxor.u32 %v3818, 2147483648
      %v3851 = vxor.u32 %v3819, 2147483648
      %v3852 = vxor.u32 %v3820, 2147483648
      %v3853 = vxor.u32 %v3821, 2147483648
      %v3854 = vxor.u32 %v3822, 2147483648
      %v3855 = vxor.u32 %v3823, 2147483648
      %v3856 = vxor.u32 %v3824, 2147483648
      %v3857 = vxor.u32 %v3825, 2147483648
      %v3858 = vxor.u32 %v3826, 2147483648
      %v3859 = vxor.u32 %v3827, 2147483648
      %v3860 = vxor.u32 %v3828, 2147483648
      %v3861 = vxor.u32 %v3829, 2147483648
      %v3862 = vxor.u32 %v3830, 2147483648
      %v3863 = vxor.u32 %v3831, 2147483648
      %v3864 = vxor.u32 %v3832, 2147483648
      %v3865 = vxor.u32 %v3833, 2147483648
      %v3866 = vxor.u32 %v3834, 2147483648
      %v3867 = vxor.u32 %v3835, 2147483648
      %v3868 = vxor.u32 %v3836, 2147483648
      %v3869 = vxor.u32 %v3837, 2147483648
      %v3870 = vxor.u32 %v3838, 2147483648
      %v3871 = vxor.u32 %v3839, 2147483648
      %v3872 = vxor.u32 %v3840, 2147483648
      %v3873 = vxor.u32 %v3841, 2147483648
      %v3874 = vxor.u32 %v3842, 2147483648
      %v3875 = vxor.u32 %v3843, 2147483648
      %v3876 = vxor.u32 %v3844, 2147483648
      %v3877 = vxor.u32 %v3845, 2147483648
      %v3878 = vxor.u32 %v3846, 2147483648
      %v3879 = vxor.u32 %v3847, 2147483648
      %v3880 = vxor.u32 %v3848, 2147483648
      %v3881 = vmul.f32 %v3849, 1.442695
      %v3882 = vpow.pop %v3881
      %v3883 = vmul.f32 %v3850, 1.442695
      %v3884 = vpow.pop %v3883
      %v3885 = vmul.f32 %v3851, 1.442695
      %v3886 = vpow.pop %v3885
      %v3887 = vmul.f32 %v3852, 1.442695
      %v3888 = vpow.pop %v3887
      %v3889 = vmul.f32 %v3853, 1.442695
      %v3890 = vpow.pop %v3889
      %v3891 = vmul.f32 %v3854, 1.442695
      %v3892 = vpow.pop %v3891
      %v3893 = vmul.f32 %v3855, 1.442695
      %v3894 = vpow.pop %v3893
      %v3895 = vmul.f32 %v3856, 1.442695
      %v3896 = vpow.pop %v3895
      %v3897 = vmul.f32 %v3857, 1.442695
      %v3898 = vpow.pop %v3897
      %v3899 = vmul.f32 %v3858, 1.442695
      %v3900 = vpow.pop %v3899
      %v3901 = vmul.f32 %v3859, 1.442695
      %v3902 = vpow.pop %v3901
      %v3903 = vmul.f32 %v3860, 1.442695
      %v3904 = vpow.pop %v3903
      %v3905 = vmul.f32 %v3861, 1.442695
      %v3906 = vpow.pop %v3905
      %v3907 = vmul.f32 %v3862, 1.442695
      %v3908 = vpow.pop %v3907
      %v3909 = vmul.f32 %v3863, 1.442695
      %v3910 = vpow.pop %v3909
      %v3911 = vmul.f32 %v3864, 1.442695
      %v3912 = vpow.pop %v3911
      %v3913 = vmul.f32 %v3865, 1.442695
      %v3914 = vpow.pop %v3913
      %v3915 = vmul.f32 %v3866, 1.442695
      %v3916 = vpow.pop %v3915
      %v3917 = vmul.f32 %v3867, 1.442695
      %v3918 = vpow.pop %v3917
      %v3919 = vmul.f32 %v3868, 1.442695
      %v3920 = vpow.pop %v3919
      %v3921 = vmul.f32 %v3869, 1.442695
      %v3922 = vpow.pop %v3921
      %v3923 = vmul.f32 %v3870, 1.442695
      %v3924 = vpow.pop %v3923
      %v3925 = vmul.f32 %v3871, 1.442695
      %v3926 = vpow.pop %v3925
      %v3927 = vmul.f32 %v3872, 1.442695
      %v3928 = vpow.pop %v3927
      %v3929 = vmul.f32 %v3873, 1.442695
      %v3930 = vpow.pop %v3929
      %v3931 = vmul.f32 %v3874, 1.442695
      %v3932 = vpow.pop %v3931
      %v3933 = vmul.f32 %v3875, 1.442695
      %v3934 = vpow.pop %v3933
      %v3935 = vmul.f32 %v3876, 1.442695
      %v3936 = vpow.pop %v3935
      %v3937 = vmul.f32 %v3877, 1.442695
      %v3938 = vpow.pop %v3937
      %v3939 = vmul.f32 %v3878, 1.442695
      %v3940 = vpow.pop %v3939
      %v3941 = vmul.f32 %v3879, 1.442695
      %v3942 = vpow.pop %v3941
      %v3943 = vmul.f32 %v3880, 1.442695
      %v3944 = vpow.pop %v3943
      %v3945 = vadd.f32 %v3882, 1.0
      %v3946 = vadd.f32 %v3884, 1.0
      %v3947 = vadd.f32 %v3886, 1.0
      %v3948 = vadd.f32 %v3888, 1.0
      %v3949 = vadd.f32 %v3890, 1.0
      %v3950 = vadd.f32 %v3892, 1.0
      %v3951 = vadd.f32 %v3894, 1.0
      %v3952 = vadd.f32 %v3896, 1.0
      %v3953 = vadd.f32 %v3898, 1.0
      %v3954 = vadd.f32 %v3900, 1.0
      %v3955 = vadd.f32 %v3902, 1.0
      %v3956 = vadd.f32 %v3904, 1.0
      %v3957 = vadd.f32 %v3906, 1.0
      %v3958 = vadd.f32 %v3908, 1.0
      %v3959 = vadd.f32 %v3910, 1.0
      %v3960 = vadd.f32 %v3912, 1.0
      %v3961 = vadd.f32 %v3914, 1.0
      %v3962 = vadd.f32 %v3916, 1.0
      %v3963 = vadd.f32 %v3918, 1.0
      %v3964 = vadd.f32 %v3920, 1.0
      %v3965 = vadd.f32 %v3922, 1.0
      %v3966 = vadd.f32 %v3924, 1.0
      %v3967 = vadd.f32 %v3926, 1.0
      %v3968 = vadd.f32 %v3928, 1.0
      %v3969 = vadd.f32 %v3930, 1.0
      %v3970 = vadd.f32 %v3932, 1.0
      %v3971 = vadd.f32 %v3934, 1.0
      %v3972 = vadd.f32 %v3936, 1.0
      %v3973 = vadd.f32 %v3938, 1.0
      %v3974 = vadd.f32 %v3940, 1.0
      %v3975 = vadd.f32 %v3942, 1.0
      %v3976 = vadd.f32 %v3944, 1.0
      %v3977 = vrcp.pop %v3945
      %v3978 = vmul.f32 1.0, %v3977
      %v3979 = vrcp.pop %v3946
      %v3980 = vmul.f32 1.0, %v3979
      %v3981 = vrcp.pop %v3947
      %v3982 = vmul.f32 1.0, %v3981
      %v3983 = vrcp.pop %v3948
      %v3984 = vmul.f32 1.0, %v3983
      %v3985 = vrcp.pop %v3949
      %v3986 = vmul.f32 1.0, %v3985
      %v3987 = vrcp.pop %v3950
      %v3988 = vmul.f32 1.0, %v3987
      %v3989 = vrcp.pop %v3951
      %v3990 = vmul.f32 1.0, %v3989
      %v3991 = vrcp.pop %v3952
      %v3992 = vmul.f32 1.0, %v3991
      %v3993 = vrcp.pop %v3953
      %v3994 = vmul.f32 1.0, %v3993
      %v3995 = vrcp.pop %v3954
      %v3996 = vmul.f32 1.0, %v3995
      %v3997 = vrcp.pop %v3955
      %v3998 = vmul.f32 1.0, %v3997
      %v3999 = vrcp.pop %v3956
      %v4000 = vmul.f32 1.0, %v3999
      %v4001 = vrcp.pop %v3957
      %v4002 = vmul.f32 1.0, %v4001
      %v4003 = vrcp.pop %v3958
      %v4004 = vmul.f32 1.0, %v4003
      %v4005 = vrcp.pop %v3959
      %v4006 = vmul.f32 1.0, %v4005
      %v4007 = vrcp.pop %v3960
      %v4008 = vmul.f32 1.0, %v4007
      %v4009 = vrcp.pop %v3961
      %v4010 = vmul.f32 1.0, %v4009
      %v4011 = vrcp.pop %v3962
      %v4012 = vmul.f32 1.0, %v4011
      %v4013 = vrcp.pop %v3963
      %v4014 = vmul.f32 1.0, %v4013
      %v4015 = vrcp.pop %v3964
      %v4016 = vmul.f32 1.0, %v4015
      %v4017 = vrcp.pop %v3965
      %v4018 = vmul.f32 1.0, %v4017
      %v4019 = vrcp.pop %v3966
      %v4020 = vmul.f32 1.0, %v4019
      %v4021 = vrcp.pop %v3967
      %v4022 = vmul.f32 1.0, %v4021
      %v4023 = vrcp.pop %v3968
      %v4024 = vmul.f32 1.0, %v4023
      %v4025 = vrcp.pop %v3969
      %v4026 = vmul.f32 1.0, %v4025
      %v4027 = vrcp.pop %v3970
      %v4028 = vmul.f32 1.0, %v4027
      %v4029 = vrcp.pop %v3971
      %v4030 = vmul.f32 1.0, %v4029
      %v4031 = vrcp.pop %v3972
      %v4032 = vmul.f32 1.0, %v4031
      %v4033 = vrcp.pop %v3973
      %v4034 = vmul.f32 1.0, %v4033
      %v4035 = vrcp.pop %v3974
      %v4036 = vmul.f32 1.0, %v4035
      %v4037 = vrcp.pop %v3975
      %v4038 = vmul.f32 1.0, %v4037
      %v4039 = vrcp.pop %v3976
      %v4040 = vmul.f32 1.0, %v4039
      %v4041 = vmul.f32 %v3817, %v3978
      %v4042 = vmul.f32 %v3818, %v3980
      %v4043 = vmul.f32 %v3819, %v3982
      %v4044 = vmul.f32 %v3820, %v3984
      %v4045 = vmul.f32 %v3821, %v3986
      %v4046 = vmul.f32 %v3822, %v3988
      %v4047 = vmul.f32 %v3823, %v3990
      %v4048 = vmul.f32 %v3824, %v3992
      %v4049 = vmul.f32 %v3825, %v3994
      %v4050 = vmul.f32 %v3826, %v3996
      %v4051 = vmul.f32 %v3827, %v3998
      %v4052 = vmul.f32 %v3828, %v4000
      %v4053 = vmul.f32 %v3829, %v4002
      %v4054 = vmul.f32 %v3830, %v4004
      %v4055 = vmul.f32 %v3831, %v4006
      %v4056 = vmul.f32 %v3832, %v4008
      %v4057 = vmul.f32 %v3833, %v4010
      %v4058 = vmul.f32 %v3834, %v4012
      %v4059 = vmul.f32 %v3835, %v4014
      %v4060 = vmul.f32 %v3836, %v4016
      %v4061 = vmul.f32 %v3837, %v4018
      %v4062 = vmul.f32 %v3838, %v4020
      %v4063 = vmul.f32 %v3839, %v4022
      %v4064 = vmul.f32 %v3840, %v4024
      %v4065 = vmul.f32 %v3841, %v4026
      %v4066 = vmul.f32 %v3842, %v4028
      %v4067 = vmul.f32 %v3843, %v4030
      %v4068 = vmul.f32 %v3844, %v4032
      %v4069 = vmul.f32 %v3845, %v4034
      %v4070 = vmul.f32 %v3846, %v4036
      %v4071 = vmul.f32 %v3847, %v4038
      %v4072 = vmul.f32 %v3848, %v4040
      %v4073 = vpack.c.bf16 %v4042, %v4041
      %v4074 = vpack.c.bf16 %v4044, %v4043
      %v4075 = vpack.c.bf16 %v4046, %v4045
      %v4076 = vpack.c.bf16 %v4048, %v4047
      %v4077 = vpack.c.bf16 %v4050, %v4049
      %v4078 = vpack.c.bf16 %v4052, %v4051
      %v4079 = vpack.c.bf16 %v4054, %v4053
      %v4080 = vpack.c.bf16 %v4056, %v4055
      %v4081 = vpack.c.bf16 %v4058, %v4057
      %v4082 = vpack.c.bf16 %v4060, %v4059
      %v4083 = vpack.c.bf16 %v4062, %v4061
      %v4084 = vpack.c.bf16 %v4064, %v4063
      %v4085 = vpack.c.bf16 %v4066, %v4065
      %v4086 = vpack.c.bf16 %v4068, %v4067
      %v4087 = vpack.c.bf16 %v4070, %v4069
      %v4088 = vpack.c.bf16 %v4072, %v4071
      %v4105 = vunpack.c.l.b16 %v4073
      %v4106 = vunpack.c.h.b16 %v4073
      %v4107 = vunpack.c.l.b16 %v4074
      %v4108 = vunpack.c.h.b16 %v4074
      %v4109 = vunpack.c.l.b16 %v4075
      %v4110 = vunpack.c.h.b16 %v4075
      %v4111 = vunpack.c.l.b16 %v4076
      %v4112 = vunpack.c.h.b16 %v4076
      %v4113 = vunpack.c.l.b16 %v4077
      %v4114 = vunpack.c.h.b16 %v4077
      %v4115 = vunpack.c.l.b16 %v4078
      %v4116 = vunpack.c.h.b16 %v4078
      %v4117 = vunpack.c.l.b16 %v4079
      %v4118 = vunpack.c.h.b16 %v4079
      %v4119 = vunpack.c.l.b16 %v4080
      %v4120 = vunpack.c.h.b16 %v4080
      %v4121 = vunpack.c.l.b16 %v4081
      %v4122 = vunpack.c.h.b16 %v4081
      %v4123 = vunpack.c.l.b16 %v4082
      %v4124 = vunpack.c.h.b16 %v4082
      %v4125 = vunpack.c.l.b16 %v4083
      %v4126 = vunpack.c.h.b16 %v4083
      %v4127 = vunpack.c.l.b16 %v4084
      %v4128 = vunpack.c.h.b16 %v4084
      %v4129 = vunpack.c.l.b16 %v4085
      %v4130 = vunpack.c.h.b16 %v4085
      %v4131 = vunpack.c.l.b16 %v4086
      %v4132 = vunpack.c.h.b16 %v4086
      %v4133 = vunpack.c.l.b16 %v4087
      %v4134 = vunpack.c.h.b16 %v4087
      %v4135 = vunpack.c.l.b16 %v4088
      %v4136 = vunpack.c.h.b16 %v4088
      %v4137 = vpack.c.b16 %v4105, %v4105
      %v4138 = vpack.c.b16 %v4106, %v4106
      %v4139 = vpack.c.b16 %v4107, %v4107
      %v4140 = vpack.c.b16 %v4108, %v4108
      %v4141 = vpack.c.b16 %v4109, %v4109
      %v4142 = vpack.c.b16 %v4110, %v4110
      %v4143 = vpack.c.b16 %v4111, %v4111
      %v4144 = vpack.c.b16 %v4112, %v4112
      %v4145 = vpack.c.b16 %v4113, %v4113
      %v4146 = vpack.c.b16 %v4114, %v4114
      %v4147 = vpack.c.b16 %v4115, %v4115
      %v4148 = vpack.c.b16 %v4116, %v4116
      %v4149 = vpack.c.b16 %v4117, %v4117
      %v4150 = vpack.c.b16 %v4118, %v4118
      %v4151 = vpack.c.b16 %v4119, %v4119
      %v4152 = vpack.c.b16 %v4120, %v4120
      %v4153 = vpack.c.b16 %v4121, %v4121
      %v4154 = vpack.c.b16 %v4122, %v4122
      %v4155 = vpack.c.b16 %v4123, %v4123
      %v4156 = vpack.c.b16 %v4124, %v4124
      %v4157 = vpack.c.b16 %v4125, %v4125
      %v4158 = vpack.c.b16 %v4126, %v4126
      %v4159 = vpack.c.b16 %v4127, %v4127
      %v4160 = vpack.c.b16 %v4128, %v4128
      %v4161 = vpack.c.b16 %v4129, %v4129
      %v4162 = vpack.c.b16 %v4130, %v4130
      %v4163 = vpack.c.b16 %v4131, %v4131
      %v4164 = vpack.c.b16 %v4132, %v4132
      %v4165 = vpack.c.b16 %v4133, %v4133
      %v4166 = vpack.c.b16 %v4134, %v4134
      %v4167 = vpack.c.b16 %v4135, %v4135
      %v4168 = vpack.c.b16 %v4136, %v4136
      %4201 = vst [vmem:[%s258] sm:$0xf] %v4137
      %4202 = vst [vmem:[%s258 + $0x4] sm:$0xf] %v4138
      %4203 = vst [vmem:[%s258 + $0x8] sm:$0xf] %v4139
      %4204 = vst [vmem:[%s258 + $0xc] sm:$0xf] %v4140
      %4205 = vst [vmem:[%s258 + $0x10] sm:$0xf] %v4141
      %4206 = vst [vmem:[%s258 + $0x14] sm:$0xf] %v4142
      %4207 = vst [vmem:[%s258 + $0x18] sm:$0xf] %v4143
      %4208 = vst [vmem:[%s258 + $0x1c] sm:$0xf] %v4144
      %4209 = vst [vmem:[%s258 + $0x20] sm:$0xf] %v4145
      %4210 = vst [vmem:[%s258 + $0x24] sm:$0xf] %v4146
      %4211 = vst [vmem:[%s258 + $0x28] sm:$0xf] %v4147
      %4212 = vst [vmem:[%s258 + $0x2c] sm:$0xf] %v4148
      %4213 = vst [vmem:[%s258 + $0x30] sm:$0xf] %v4149
      %4214 = vst [vmem:[%s258 + $0x34] sm:$0xf] %v4150
      %4215 = vst [vmem:[%s258 + $0x38] sm:$0xf] %v4151
      %4216 = vst [vmem:[%s258 + $0x3c] sm:$0xf] %v4152
      %4217 = vst [vmem:[%s258 + $0x40] sm:$0xf] %v4153
      %4218 = vst [vmem:[%s258 + $0x44] sm:$0xf] %v4154
      %4219 = vst [vmem:[%s258 + $0x48] sm:$0xf] %v4155
      %4220 = vst [vmem:[%s258 + $0x4c] sm:$0xf] %v4156
      %4221 = vst [vmem:[%s258 + $0x50] sm:$0xf] %v4157
      %4222 = vst [vmem:[%s258 + $0x54] sm:$0xf] %v4158
      %4223 = vst [vmem:[%s258 + $0x58] sm:$0xf] %v4159
      %4224 = vst [vmem:[%s258 + $0x5c] sm:$0xf] %v4160
      %4225 = vst [vmem:[%s258 + $0x60] sm:$0xf] %v4161
      %4226 = vst [vmem:[%s258 + $0x64] sm:$0xf] %v4162
      %4227 = vst [vmem:[%s258 + $0x68] sm:$0xf] %v4163
      %4228 = vst [vmem:[%s258 + $0x6c] sm:$0xf] %v4164
      %4229 = vst [vmem:[%s258 + $0x70] sm:$0xf] %v4165
      %4230 = vst [vmem:[%s258 + $0x74] sm:$0xf] %v4166
      %4231 = vst [vmem:[%s258 + $0x78] sm:$0xf] %v4167
      %4232 = vst [vmem:[%s258 + $0x7c] sm:$0xf] %v4168
      %v4233 = vadd.f32 %v4041, %v4042
      %v4234 = vadd.f32 %v4233, %v4043
      %v4235 = vadd.f32 %v4234, %v4044
      %v4236 = vadd.f32 %v4235, %v4045
      %v4237 = vadd.f32 %v4236, %v4046
      %v4238 = vadd.f32 %v4237, %v4047
      %v4239 = vadd.f32 %v4238, %v4048
      %v4240 = vadd.f32 %v4239, %v4049
      %v4241 = vadd.f32 %v4240, %v4050
      %v4242 = vadd.f32 %v4241, %v4051
      %v4243 = vadd.f32 %v4242, %v4052
      %v4244 = vadd.f32 %v4243, %v4053
      %v4245 = vadd.f32 %v4244, %v4054
      %v4246 = vadd.f32 %v4245, %v4055
      %v4247 = vadd.f32 %v4246, %v4056
      %v4248 = vadd.f32 %v4247, %v4057
      %v4249 = vadd.f32 %v4248, %v4058
      %v4250 = vadd.f32 %v4249, %v4059
      %v4251 = vadd.f32 %v4250, %v4060
      %v4252 = vadd.f32 %v4251, %v4061
      %v4253 = vadd.f32 %v4252, %v4062
      %v4254 = vadd.f32 %v4253, %v4063
      %v4255 = vadd.f32 %v4254, %v4064
      %v4256 = vadd.f32 %v4255, %v4065
      %v4257 = vadd.f32 %v4256, %v4066
      %v4258 = vadd.f32 %v4257, %v4067
      %v4259 = vadd.f32 %v4258, %v4068
      %v4260 = vadd.f32 %v4259, %v4069
      %v4261 = vadd.f32 %v4260, %v4070
      %v4262 = vadd.f32 %v4261, %v4071
      %v4263 = vadd.f32 %v4262, %v4072
      %v4264 = vrot.slane %v4263, 4
      %v4265 = vadd.f32 %v4263, %v4264
      %v4266 = vrot.slane %v4265, 2
      %v4267 = vadd.f32 %v4265, %v4266
      %v4268 = vrot.slane %v4267, 1
      %v4269 = vadd.f32 %v4267, %v4268
      %v4270 = vmul.f32 %v4041, %v4041
      %v4271 = vmul.f32 %v4042, %v4042
      %v4272 = vmul.f32 %v4043, %v4043
      %v4273 = vmul.f32 %v4044, %v4044
      %v4274 = vmul.f32 %v4045, %v4045
      %v4275 = vmul.f32 %v4046, %v4046
      %v4276 = vmul.f32 %v4047, %v4047
      %v4277 = vmul.f32 %v4048, %v4048
      %v4278 = vmul.f32 %v4049, %v4049
      %v4279 = vmul.f32 %v4050, %v4050
      %v4280 = vmul.f32 %v4051, %v4051
      %v4281 = vmul.f32 %v4052, %v4052
      %v4282 = vmul.f32 %v4053, %v4053
      %v4283 = vmul.f32 %v4054, %v4054
      %v4284 = vmul.f32 %v4055, %v4055
      %v4285 = vmul.f32 %v4056, %v4056
      %v4286 = vmul.f32 %v4057, %v4057
      %v4287 = vmul.f32 %v4058, %v4058
      %v4288 = vmul.f32 %v4059, %v4059
      %v4289 = vmul.f32 %v4060, %v4060
      %v4290 = vmul.f32 %v4061, %v4061
      %v4291 = vmul.f32 %v4062, %v4062
      %v4292 = vmul.f32 %v4063, %v4063
      %v4293 = vmul.f32 %v4064, %v4064
      %v4294 = vmul.f32 %v4065, %v4065
      %v4295 = vmul.f32 %v4066, %v4066
      %v4296 = vmul.f32 %v4067, %v4067
      %v4297 = vmul.f32 %v4068, %v4068
      %v4298 = vmul.f32 %v4069, %v4069
      %v4299 = vmul.f32 %v4070, %v4070
      %v4300 = vmul.f32 %v4071, %v4071
      %v4301 = vmul.f32 %v4072, %v4072
      %v4302 = vadd.f32 %v4270, %v4271
      %v4303 = vadd.f32 %v4302, %v4272
      %v4304 = vadd.f32 %v4303, %v4273
      %v4305 = vadd.f32 %v4304, %v4274
      %v4306 = vadd.f32 %v4305, %v4275
      %v4307 = vadd.f32 %v4306, %v4276
      %v4308 = vadd.f32 %v4307, %v4277
      %v4309 = vadd.f32 %v4308, %v4278
      %v4310 = vadd.f32 %v4309, %v4279
      %v4311 = vadd.f32 %v4310, %v4280
      %v4312 = vadd.f32 %v4311, %v4281
      %v4313 = vadd.f32 %v4312, %v4282
      %v4314 = vadd.f32 %v4313, %v4283
      %v4315 = vadd.f32 %v4314, %v4284
      %v4316 = vadd.f32 %v4315, %v4285
      %v4317 = vadd.f32 %v4316, %v4286
      %v4318 = vadd.f32 %v4317, %v4287
      %v4319 = vadd.f32 %v4318, %v4288
      %v4320 = vadd.f32 %v4319, %v4289
      %v4321 = vadd.f32 %v4320, %v4290
      %v4322 = vadd.f32 %v4321, %v4291
      %v4323 = vadd.f32 %v4322, %v4292
      %v4324 = vadd.f32 %v4323, %v4293
      %v4325 = vadd.f32 %v4324, %v4294
      %v4326 = vadd.f32 %v4325, %v4295
      %v4327 = vadd.f32 %v4326, %v4296
      %v4328 = vadd.f32 %v4327, %v4297
      %v4329 = vadd.f32 %v4328, %v4298
      %v4330 = vadd.f32 %v4329, %v4299
      %v4331 = vadd.f32 %v4330, %v4300
      %v4332 = vadd.f32 %v4331, %v4301
      %v4333 = vrot.slane %v4332, 4
      %v4334 = vadd.f32 %v4332, %v4333
      %v4335 = vrot.slane %v4334, 2
      %v4336 = vadd.f32 %v4334, %v4335
      %v4337 = vrot.slane %v4336, 1
      %v4338 = vadd.f32 %v4336, %v4337
      %vm4339 = vcmask 1040384
      %v4340 = vsel %vm4339, %v4269, %v4338
      %4341 = vst [vmem:[%s262] sm:$0x3] %v4340
      %p4342 = scmp.lt.s32.totalorder %s18, 1
      %s4343 = scalar_select %p4342, %s18, 1
      %s4344 = smul.addr %s4343, 32
      %s4345 = smul.addr %s4344, 4
      %s4346 = scalar_lea.vmem %s5, %s4345
      %p4347 = scmp.lt.s32.totalorder %s18, 1
      %s4348 = scalar_select %p4347, %s18, 1
      %s4349 = smul.addr %s4348, 2
      %s4350 = scalar_lea.vmem %s6, %s4349
      // Predicated region
      $region41: #{_lambda_.6} parent=39 // pred_check
        %p4351 = pneg %p146
      $region42: #{_lambda_.6} parent=39 // pred_check_branch
        %4353 = sbr.rel (%p4351) target = $region44
      $region43: #{_lambda_.6} parent=39 // pred_region
        _
      $region44: #{_lambda_.6} parent=39 // pred_fallthru
        _
      // Predicated region
      $region45: #{_lambda_.6} parent=39 // pred_check
        %p4354 = pneg %p172
      $region46: #{_lambda_.6} parent=39 // pred_check_branch
        %4356 = sbr.rel (%p4354) target = $region48
      $region47: #{_lambda_.6} parent=39 // pred_region
        _
      $region48: #{_lambda_.6} parent=39 // pred_fallthru
        _
    $region40: #{_lambda_.6} parent=5 // pred_fallthru
      _
    %p4357 = scmp.le.s32.totalorder 2, %s13
    // Predicated region
    $region49: #{_lambda_.6} parent=5 // pred_check
      %p4358 = pneg %p4357
    $region50: #{_lambda_.6} parent=5 // pred_check_branch
      %4360 = sbr.rel (%p4358) target = $region52
    $region51: #{_lambda_.6} parent=5 // pred_region
      %s4361 = ssub.s32 %s13, 2
      // Predicated region
      $region53: #{_lambda_.6} parent=51 // pred_check
        %p4362 = pneg %p152
      $region54: #{_lambda_.6} parent=51 // pred_check_branch
        %4364 = sbr.rel (%p4362) target = $region56
      $region55: #{_lambda_.6} parent=51 // pred_region
        %p4365 = scmp.lt.s32.totalorder %s19, 1
        %s4366 = scalar_select %p4365, %s19, 1
        %s4367 = smul.addr %s4366, 32
        %s4368 = smul.addr %s4367, 4
        %s4369 = scalar_lea.vmem %s5, %s4368
      $region56: #{_lambda_.6} parent=51 // pred_fallthru
        _
      // Predicated region
      $region57: #{_lambda_.6} parent=51 // pred_check
        %p4370 = pneg %p178
      $region58: #{_lambda_.6} parent=51 // pred_check_branch
        %4372 = sbr.rel (%p4370) target = $region60
      $region59: #{_lambda_.6} parent=51 // pred_region
        %p4373 = scmp.lt.s32.totalorder %s19, 1
        %s4374 = scalar_select %p4373, %s19, 1
        %s4375 = smul.addr %s4374, 2
        %s4376 = scalar_lea.vmem %s6, %s4375
      $region60: #{_lambda_.6} parent=51 // pred_fallthru
        _
    $region52: #{_lambda_.6} parent=5 // pred_fallthru
      _
  $region6: #{_lambda_.6} parent=0 // loop_footer
    %s17 = sadd.s32 1, %s13
  $region7: #{_lambda_.6} parent=0 // loop_footer_branch
    %12 = sbr.rel target = $region3
  $region8: #{_lambda_.6} parent=0 // loop_exit
    _

</llo_original>
